<compile_context>
chip_gen: v7x
topology: tpu7x:2x2x1
jax: 0.10.0
libtpu: 0.0.40
codegen_flags: <defaults>
</compile_context>

<pallas_src>
import functools
import math

import jax
import jax.numpy as jnp
from jax import lax
from jax.experimental import pallas as pl
from jax.experimental.pallas import tpu as pltpu

LEAKY_SLOPE = 0.01
BN_EPS = 1e-5
BN_SCALE = 1.0 / math.sqrt(1.0 + BN_EPS)  # eval-mode BatchNorm2d, default running stats


# ----------------------------------------------------------------------------
# In-kernel building blocks (lane-dense (C, H*W) f32 slabs in VMEM)
# ----------------------------------------------------------------------------
def _roll_lanes(a, delta):
    """out[..., i] = a[..., (i + delta) mod n]  (circular lane shift, XLU vrot).

    pltpu.roll follows jnp.roll semantics (out[i] = a[i - shift]); a non-negative
    shift is passed to avoid any negative-amount handling.
    """
    n = a.shape[-1]
    shift = (-int(delta)) % n
    if shift == 0:
        return a
    return pltpu.roll(a, shift, axis=1)


def _reflect_masks(h, w):
    """Boundary masks for reflect-pad-1, shape (1, h*w); broadcast over channels."""
    lane = lax.broadcasted_iota(jnp.int32, (1, h * w), 1)
    col = lane % w
    return (lane < w, lane >= (h - 1) * w, col == 0, col == w - 1)


def _conv3x3_reflect(x, w_all, b, w, masks, neg_slope=None):
    """3x3 / stride-1 / reflect-pad-1 conv on a (Cin, h*w) slab -> (Cout, h*w).

    w_all: (Cout, 9*Cin) bf16, taps ordered (kh, kw) row-major with Cin fastest
           (eval-BatchNorm scale already folded in where applicable).
    b:     (Cout, 1) f32.  Optional fused LeakyReLU.
    """
    row_first, row_last, col_first, col_last = masks
    # vertical neighbours with reflection at the top / bottom image rows
    up = jnp.where(row_first, _roll_lanes(x, w), _roll_lanes(x, -w))
    down = jnp.where(row_last, _roll_lanes(x, -w), _roll_lanes(x, w))
    taps = []
    for r in (up, x, down):                                    # kh = 0, 1, 2
        left = jnp.where(col_first, _roll_lanes(r, 1), _roll_lanes(r, -1))
        right = jnp.where(col_last, _roll_lanes(r, -1), _roll_lanes(r, 1))
        taps += [left, r, right]                               # kw = 0, 1, 2
    t_all = jnp.concatenate(taps, axis=0).astype(jnp.bfloat16)  # (9*Cin, h*w)
    out = jnp.dot(w_all, t_all, preferred_element_type=jnp.float32) + b
    if neg_slope is not None:
        out = jnp.where(out >= 0.0, out, out * neg_slope)
    return out


def _convtranspose_k2s2(x, w_stack, s_mat, b, cout, h, w, up_ref):
    """ConvTranspose2d(k=2, s=2) on a (Cin, h*w) slab -> (Cout, 4*h*w).

    w_stack: (4*Cout, Cin) bf16; row block t = 2*ry + rx holds
             W_t[co, ci] = torch_weight[ci, co, ry, rx].
    s_mat:   (2*h*w, 2*h*w) bf16 one-hot column-stretch matrix: rows [0, hw) put
             the rx=0 parity at even columns of each 2w-wide output-row chunk,
             rows [hw, 2hw) put the rx=1 parity at odd columns.
    b:       (Cout, 1) f32.
    up_ref:  (Cout, 4*h*w) f32 VMEM scratch used for the row interleave
             (every lane is overwritten each call before the read-back).
    """
    a = jnp.dot(w_stack, x.astype(jnp.bfloat16),
                preferred_element_type=jnp.float32)              # (4*Cout, h*w)
    for ry in (0, 1):
        pair = jnp.concatenate(
            [a[(2 * ry) * cout:(2 * ry + 1) * cout],
             a[(2 * ry + 1) * cout:(2 * ry + 2) * cout]], axis=1)  # (Cout, 2*h*w)
        half = jnp.dot(pair.astype(jnp.bfloat16), s_mat,
                       preferred_element_type=jnp.float32)       # rows 2r+ry, chunks of 2w
        for r in range(h):
            up_ref[:, (2 * r + ry) * 2 * w:(2 * r + ry + 1) * 2 * w] = (
                half[:, r * 2 * w:(r + 1) * 2 * w])
    return up_ref[...] + b


# ----------------------------------------------------------------------------
# Host-side parameter packing (layout prep only -- no activation traffic)
# ----------------------------------------------------------------------------
def _conv_w_flat(w, scale=1.0):
    """Conv2d weight (Cout, Cin, 3, 3) -> bf16 (Cout, 9*Cin), optional BN-scale fold."""
    cout, cin = int(w.shape[0]), int(w.shape[1])
    return (jnp.transpose(w, (0, 2, 3, 1)).reshape(cout, 9 * cin)
            * scale).astype(jnp.bfloat16)


def _convT_w_stack(w):
    """ConvTranspose2d weight (Cin, Cout, 2, 2) -> bf16 (4*Cout, Cin), tap t = 2*ry+rx."""
    return jnp.concatenate([w[:, :, ry, rx].T for ry in (0, 1) for rx in (0, 1)],
                           axis=0).astype(jnp.bfloat16)


def _stretch_matrix(h, w):
    """(2*h*w, 2*h*w) bf16 one-hot column-interleave matrix.

    Row k < h*w  (pixel (r, c), rx=0 parity) -> column r*2w + 2c.
    Row k >= h*w (pixel (r, c), rx=1 parity) -> column r*2w + 2c + 1.
    """
    hw = h * w
    k = jnp.arange(hw)
    j_even = (k // w) * (2 * w) + 2 * (k % w)
    cols = jnp.concatenate([j_even, j_even + 1])
    return (jnp.arange(2 * hw)[None, :] == cols[:, None]).astype(jnp.bfloat16)


def _pack_bias_columns(vecs):
    """Pack 1-D vectors as zero-padded columns of one f32 (C_max, n_cols) array."""
    vecs = [jnp.asarray(v, jnp.float32).reshape(-1) for v in vecs]
    c_max = max(int(v.shape[0]) for v in vecs)
    return jnp.stack([jnp.pad(v, (0, c_max - int(v.shape[0]))) for v in vecs], axis=1)


# ----------------------------------------------------------------------------
# Fused forward (one pallas_call for the whole BNLinDeepCCA forward)
# ----------------------------------------------------------------------------
def bn_lin_deep_cca_forward(bn_nchw, K, params, *, depth):
    B, c_bn, H0, W0 = bn_nchw.shape
    n_kin = K.shape[1]
    hw0 = H0 * W0

    c_top = int(params["emb_w"].shape[1])
    cn = int(params["p0_w"].shape[0])
    unit_dims = [(int(u["w1"].shape[1]), int(u["w1"].shape[0])) for u in params["units"]]
    assert len(params["units"]) == depth - 1

    # ---- single packed bias/column-vector input (read order == kernel order) ----
    bias_cols = [params["emb_b"]]
    for u in params["units"]:
        bias_cols += [u["b1"] * BN_SCALE, u["b2"] * BN_SCALE, u["up_b"]]
    bias_cols += [params["p0_b"], params["p1_b"], params["p2_w"].reshape(-1),
                  params["p2_b"].reshape(-1), params["lin_b"].reshape(-1)]
    bias_pack = _pack_bias_columns(bias_cols)

    # ---- pack inputs ----
    inputs = [
        bn_nchw.reshape(B, c_bn, hw0).astype(jnp.float32),     # (B, Cbn, H0*W0)
        K.reshape(B, 1, n_kin).astype(jnp.float32),            # (B, 1, N)
        bias_pack,                                             # (Cmax, n_cols) f32
        params["lin_w"].reshape(1, n_kin).astype(jnp.float32),
        _convT_w_stack(params["emb_w"]),                       # (4*c_top, Cbn) bf16
        _stretch_matrix(H0, W0),                               # (2*hw0, 2*hw0) bf16
    ]
    h, w = 2 * H0, 2 * W0
    for u in params["units"]:
        inputs += [
            _conv_w_flat(u["w1"], BN_SCALE),
            _conv_w_flat(u["w2"], BN_SCALE),
            _convT_w_stack(u["up_w"]),
            _stretch_matrix(h, w),
        ]
        h, w = 2 * h, 2 * w
    inputs += [_conv_w_flat(params["p0_w"]), _conv_w_flat(params["p1_w"])]
    n_in = len(inputs)

    # ---- per-level upsample scratch slabs (row-interleave targets) ----
    scratch_shapes = []
    h, w = H0, W0
    scratch_shapes.append(pltpu.VMEM((c_top, 4 * h * w), jnp.float32))
    h, w = 2 * h, 2 * w
    for (_, cout_j) in unit_dims:
        scratch_shapes.append(pltpu.VMEM((cout_j, 4 * h * w), jnp.float32))
        h, w = 2 * h, 2 * w

    # ---- kernel: full forward for one sample per grid step ----
    def kernel(*refs):
        in_refs = refs[:n_in]
        o_bn_ref, o_k_ref = refs[n_in], refs[n_in + 1]
        up_scr = refs[n_in + 2:]

        it = iter(in_refs)
        x_ref, k_ref, bias_ref, linw_ref = next(it), next(it), next(it), next(it)
        emb_w, s_emb = next(it), next(it)

        cursor = [0]

        def next_bias(c):
            j = cursor[0]
            cursor[0] += 1
            return bias_ref[0:c, j:j + 1]                      # (c, 1) f32

        h, w = H0, W0
        a = _convtranspose_k2s2(x_ref[0], emb_w[...], s_emb[...], next_bias(c_top),
                                c_top, h, w, up_scr[0])
        h, w = 2 * h, 2 * w

        for j, (_, cout_j) in enumerate(unit_dims):
            w1, w2, upw, s_up = next(it), next(it), next(it), next(it)
            b1, b2, bu = next_bias(cout_j), next_bias(cout_j), next_bias(cout_j)
            masks = _reflect_masks(h, w)
            a = _conv3x3_reflect(a, w1[...], b1, w, masks, neg_slope=LEAKY_SLOPE)
            a = _conv3x3_reflect(a, w2[...], b2, w, masks, neg_slope=LEAKY_SLOPE)
            a = _convtranspose_k2s2(a, upw[...], s_up[...], bu, cout_j, h, w,
                                    up_scr[1 + j])
            h, w = 2 * h, 2 * w

        p0w, p1w = next(it), next(it)
        bp0, bp1 = next_bias(cn), next_bias(cn)
        p2w_col, p2b, linb = next_bias(cn), next_bias(1), next_bias(1)
        masks = _reflect_masks(h, w)
        a = _conv3x3_reflect(a, p0w[...], bp0, w, masks)
        a = _conv3x3_reflect(a, p1w[...], bp1, w, masks)

        # predict 1x1 conv + torch.mean(fx, (2, 3)) fused (both linear -> commute)
        am = jnp.mean(a, axis=1, keepdims=True)                # (Cnet, 1)
        o_bn_ref[0] = jnp.sum(am * p2w_col, axis=0, keepdims=True) + p2b

        # LinierKinship: Linear(N, 1)
        o_k_ref[0] = jnp.sum(k_ref[0] * linw_ref[...], axis=1, keepdims=True) + linb

    # ---- specs ----
    def _const_spec(arr):
        nd = arr.ndim
        return pl.BlockSpec(arr.shape, lambda b, _nd=nd: (0,) * _nd)

    in_specs = [
        pl.BlockSpec((1, c_bn, hw0), lambda b: (b, 0, 0)),
        pl.BlockSpec((1, 1, n_kin), lambda b: (b, 0, 0)),
    ] + [_const_spec(a) for a in inputs[2:]]

    out_shape = (jax.ShapeDtypeStruct((B, 1, 1), jnp.float32),
                 jax.ShapeDtypeStruct((B, 1, 1), jnp.float32))
    out_specs = (pl.BlockSpec((1, 1, 1), lambda b: (b, 0, 0)),
                 pl.BlockSpec((1, 1, 1), lambda b: (b, 0, 0)))

    o_bn, o_k = pl.pallas_call(
        kernel,
        out_shape=out_shape,
        grid=(B,),
        in_specs=in_specs,
        out_specs=out_specs,
        scratch_shapes=scratch_shapes,
        compiler_params=pltpu.CompilerParams(
            dimension_semantics=("parallel",),   # one sample per step; shards on v7x
        ),
    )(*inputs)
    return o_bn.reshape(B, 1), o_k.reshape(B, 1)


# ----------------------------------------------------------------------------
# Parameter initialization (synthetic, deterministic)
# ----------------------------------------------------------------------------
def _xavier_normal(key, shape):
    receptive = shape[2] * shape[3]
    fan_in, fan_out = shape[1] * receptive, shape[0] * receptive
    std = math.sqrt(2.0 / (fan_in + fan_out))
    return std * jax.random.normal(key, shape, dtype=jnp.float32)


def init_params(key, *, depth, channels_bn, channels_net, n_kinship,
                channels_expansion=1):
    """Parameters mirroring BNNet + LinierKinship (Conv2d: xavier_normal + zero bias).

    TODO(synk): ConvTranspose2d / Linear use a simple synthetic init rather than
    PyTorch's exact kaiming-uniform defaults (forward semantics unaffected).
    """
    keys = iter(jax.random.split(key, 16 + 8 * depth))
    cn, ex = channels_net, channels_expansion
    c_top = cn * ex ** (depth - 1)
    p = {
        "emb_w": 0.1 * jax.random.normal(next(keys), (channels_bn, c_top, 2, 2), jnp.float32),
        "emb_b": 0.01 * jax.random.normal(next(keys), (c_top,), jnp.float32),
        "units": [],
    }
    for i in reversed(range(depth - 1)):
        cin, cout = cn * ex ** (i + 1), cn * ex ** i
        p["units"].append({
            "w1": _xavier_normal(next(keys), (cout, cin, 3, 3)),
            "b1": jnp.zeros((cout,), jnp.float32),
            "w2": _xavier_normal(next(keys), (cout, cout, 3, 3)),
            "b2": jnp.zeros((cout,), jnp.float32),
            "up_w": 0.1 * jax.random.normal(next(keys), (cout, cout, 2, 2), jnp.float32),
            "up_b": 0.01 * jax.random.normal(next(keys), (cout,), jnp.float32),
        })
    p["p0_w"] = _xavier_normal(next(keys), (cn, cn, 3, 3))
    p["p0_b"] = jnp.zeros((cn,), jnp.float32)
    p["p1_w"] = _xavier_normal(next(keys), (cn, cn, 3, 3))
    p["p1_b"] = jnp.zeros((cn,), jnp.float32)
    p["p2_w"] = _xavier_normal(next(keys), (1, cn, 1, 1))
    p["p2_b"] = jnp.zeros((1,), jnp.float32)
    p["lin_w"] = 0.1 * jax.random.normal(next(keys), (1, n_kinship), jnp.float32)
    p["lin_b"] = 0.01 * jax.random.normal(next(keys), (1,), jnp.float32)
    return p


# ----------------------------------------------------------------------------
# Pure-JAX reference (NCHW, f32) for the numerical self-check
# ----------------------------------------------------------------------------
def _ref_conv3x3(x, w, b):
    xp = jnp.pad(x, ((0, 0), (0, 0), (1, 1), (1, 1)), mode="reflect")
    y = lax.conv_general_dilated(xp, w, (1, 1), "VALID",
                                 dimension_numbers=("NCHW", "OIHW", "NCHW"))
    return y + b[None, :, None, None]


def _ref_convT_k2s2(x, w, b):
    y = jnp.einsum("bcyx,cdij->bdyixj", x, w)
    bb, co, hh, _, ww, _ = y.shape
    return y.reshape(bb, co, 2 * hh, 2 * ww) + b[None, :, None, None]


def _ref_bn_lrelu(x):
    x = x * BN_SCALE
    return jnp.where(x >= 0.0, x, LEAKY_SLOPE * x)


def reference_forward(bn, K, params):
    x = bn.astype(jnp.float32)
    x = _ref_convT_k2s2(x, params["emb_w"], params["emb_b"])
    for u in params["units"]:
        x = _ref_bn_lrelu(_ref_conv3x3(x, u["w1"], u["b1"]))
        x = _ref_bn_lrelu(_ref_conv3x3(x, u["w2"], u["b2"]))
        x = _ref_convT_k2s2(x, u["up_w"], u["up_b"])
    x = _ref_conv3x3(x, params["p0_w"], params["p0_b"])
    x = _ref_conv3x3(x, params["p1_w"], params["p1_b"])
    x = lax.conv_general_dilated(x, params["p2_w"], (1, 1), "VALID",
                                 dimension_numbers=("NCHW", "OIHW", "NCHW"))
    x = x + params["p2_b"][None, :, None, None]
    o_bn = jnp.mean(x, axis=(2, 3))
    o_k = K.astype(jnp.float32) @ params["lin_w"].T + params["lin_b"][None, :]
    return o_bn, o_k


# ----------------------------------------------------------------------------
if __name__ == "__main__":
    DEPTH = 2
    CHANNELS_BN = 4          # channels of the bottleneck input `bn`
    CHANNELS_NET = 8
    N_KIN = 32
    B, H0, W0 = 2, 8, 8      # final prediction resolution = H0 * 2**DEPTH = 32

    root = jax.random.PRNGKey(0)
    k_p, k_x, k_k = jax.random.split(root, 3)
    params = init_params(k_p, depth=DEPTH, channels_bn=CHANNELS_BN,
                         channels_net=CHANNELS_NET, n_kinship=N_KIN)
    bn = jax.random.normal(k_x, (B, CHANNELS_BN, H0, W0), dtype=jnp.float32)
    K = jax.random.normal(k_k, (B, N_KIN), dtype=jnp.float32)

    fwd = jax.jit(functools.partial(bn_lin_deep_cca_forward, depth=DEPTH))
    o_bn, o_k = fwd(bn, K, params)
    o_bn = jax.block_until_ready(o_bn)
    o_k = jax.block_until_ready(o_k)

    assert o_bn.shape == (B, 1), o_bn.shape
    assert o_k.shape == (B, 1), o_k.shape
    assert bool(jnp.all(jnp.isfinite(o_bn))) and bool(jnp.all(jnp.isfinite(o_k)))

    r_bn, r_k = reference_forward(bn, K, params)
    # bf16 matmul inputs (f32 accumulation) -> slightly looser tolerance vs f32 reference.
    assert jnp.allclose(o_bn, r_bn, rtol=1e-2, atol=1e-2), (o_bn, r_bn)
    assert jnp.allclose(o_k, r_k, rtol=1e-2, atol=1e-2), (o_k, r_k)
    print("KERNEL_OK")
</pallas_src>

<mosaic_0001>
module attributes {stable_mosaic.version = 11 : i64} {
  func.func @kernel(%arg0: i32, %arg1: memref<1x4x64xf32, #tpu.memory_space<vmem>>, %arg2: memref<1x1x32xf32, #tpu.memory_space<vmem>>, %arg3: memref<8x9xf32, #tpu.memory_space<vmem>>, %arg4: memref<1x32xf32, #tpu.memory_space<vmem>>, %arg5: memref<32x4xbf16, #tpu.memory_space<vmem>>, %arg6: memref<128x128xbf16, #tpu.memory_space<vmem>>, %arg7: memref<8x72xbf16, #tpu.memory_space<vmem>>, %arg8: memref<8x72xbf16, #tpu.memory_space<vmem>>, %arg9: memref<32x8xbf16, #tpu.memory_space<vmem>>, %arg10: memref<512x512xbf16, #tpu.memory_space<vmem>>, %arg11: memref<8x72xbf16, #tpu.memory_space<vmem>>, %arg12: memref<8x72xbf16, #tpu.memory_space<vmem>>, %arg13: memref<1x1x1xf32, #tpu.memory_space<vmem>>, %arg14: memref<1x1x1xf32, #tpu.memory_space<vmem>>, %arg15: memref<8x256xf32, #tpu.memory_space<vmem>>, %arg16: memref<8x1024xf32, #tpu.memory_space<vmem>>) attributes {dimension_semantics = [#tpu.dimension_semantics<parallel>], iteration_bounds = array<i64: 2>, scalar_prefetch = 0 : i64, scratch_operands = 2 : i64, tpu.core_type = #tpu.core_type<tc>, window_params = [{transform_indices = @transform_0, window_bounds = array<i64: 1, 4, 64>}, {transform_indices = @transform_1, window_bounds = array<i64: 1, 1, 32>}, {pipeline_mode = #tpu.pipeline_mode<synchronous>, transform_indices = @transform_2, window_bounds = array<i64: 8, 9>}, {pipeline_mode = #tpu.pipeline_mode<synchronous>, transform_indices = @transform_3, window_bounds = array<i64: 1, 32>}, {pipeline_mode = #tpu.pipeline_mode<synchronous>, transform_indices = @transform_4, window_bounds = array<i64: 32, 4>}, {pipeline_mode = #tpu.pipeline_mode<synchronous>, transform_indices = @transform_5, window_bounds = array<i64: 128, 128>}, {pipeline_mode = #tpu.pipeline_mode<synchronous>, transform_indices = @transform_6, window_bounds = array<i64: 8, 72>}, {pipeline_mode = #tpu.pipeline_mode<synchronous>, transform_indices = @transform_7, window_bounds = array<i64: 8, 72>}, {pipeline_mode = #tpu.pipeline_mode<synchronous>, transform_indices = @transform_8, window_bounds = array<i64: 32, 8>}, {pipeline_mode = #tpu.pipeline_mode<synchronous>, transform_indices = @transform_9, window_bounds = array<i64: 512, 512>}, {pipeline_mode = #tpu.pipeline_mode<synchronous>, transform_indices = @transform_10, window_bounds = array<i64: 8, 72>}, {pipeline_mode = #tpu.pipeline_mode<synchronous>, transform_indices = @transform_11, window_bounds = array<i64: 8, 72>}, {transform_indices = @transform_12, window_bounds = array<i64: 1, 1, 1>}, {transform_indices = @transform_13, window_bounds = array<i64: 1, 1, 1>}]} {
    %c0 = arith.constant 0 : index
    %c0_0 = arith.constant 0 : index
    %c0_1 = arith.constant 0 : index
    %0 = vector.load %arg1[%c0, %c0_0, %c0_1] : memref<1x4x64xf32, #tpu.memory_space<vmem>>, vector<1x4x64xf32>
    %1 = vector.shape_cast %0 : vector<1x4x64xf32> to vector<4x64xf32>
    %c0_2 = arith.constant 0 : index
    %c0_3 = arith.constant 0 : index
    %2 = vector.load %arg5[%c0_2, %c0_3] : memref<32x4xbf16, #tpu.memory_space<vmem>>, vector<32x4xbf16>
    %c0_4 = arith.constant 0 : index
    %c0_5 = arith.constant 0 : index
    %3 = vector.load %arg6[%c0_4, %c0_5] : memref<128x128xbf16, #tpu.memory_space<vmem>>, vector<128x128xbf16>
    %c0_6 = arith.constant 0 : index
    %c0_7 = arith.constant 0 : index
    %4 = vector.load %arg3[%c0_6, %c0_7] : memref<8x9xf32, #tpu.memory_space<vmem>>, vector<8x1xf32>
    %5 = arith.truncf %1 : vector<4x64xf32> to vector<4x64xbf16>
    %cst = arith.constant dense<0.000000e+00> : vector<32x64xf32>
    %6 = tpu.matmul %2, %5, %cst {dimension_numbers = #tpu.dot_dimension_numbers<[1], [0], [0], [1], [0, 0, 1, 1], [], []>} : vector<32x4xbf16>, vector<4x64xbf16>, vector<32x64xf32> -> vector<32x64xf32>
    %7 = vector.extract_strided_slice %6 {offsets = [0, 0], sizes = [8, 64], strides = [1, 1]} : vector<32x64xf32> to vector<8x64xf32>
    %8 = vector.extract_strided_slice %6 {offsets = [8, 0], sizes = [8, 64], strides = [1, 1]} : vector<32x64xf32> to vector<8x64xf32>
    %9 = tpu.concatenate %7, %8 in 1 : vector<8x64xf32>, vector<8x64xf32> -> vector<8x128xf32>
    %10 = arith.truncf %9 : vector<8x128xf32> to vector<8x128xbf16>
    %cst_8 = arith.constant dense<0.000000e+00> : vector<8x128xf32>
    %11 = tpu.matmul %10, %3, %cst_8 {dimension_numbers = #tpu.dot_dimension_numbers<[1], [0], [0], [1], [0, 0, 1, 1], [], []>} : vector<8x128xbf16>, vector<128x128xbf16>, vector<8x128xf32> -> vector<8x128xf32>
    %12 = vector.extract_strided_slice %11 {offsets = [0, 0], sizes = [8, 16], strides = [1, 1]} : vector<8x128xf32> to vector<8x16xf32>
    %c0_9 = arith.constant 0 : index
    %c0_10 = arith.constant 0 : index
    %13 = vector.load %arg15[%c0_9, %c0_10] : memref<8x256xf32, #tpu.memory_space<vmem>>, vector<8x16xf32>
    tpu.vector_store %arg15[%c0_9, %c0_10], %12 {strides = array<i32>} : memref<8x256xf32, #tpu.memory_space<vmem>>, vector<8x16xf32>,
    %14 = vector.extract_strided_slice %11 {offsets = [0, 16], sizes = [8, 16], strides = [1, 1]} : vector<8x128xf32> to vector<8x16xf32>
    %c0_11 = arith.constant 0 : index
    %c32 = arith.constant 32 : index
    %15 = vector.load %arg15[%c0_11, %c32] : memref<8x256xf32, #tpu.memory_space<vmem>>, vector<8x16xf32>
    tpu.vector_store %arg15[%c0_11, %c32], %14 {strides = array<i32>} : memref<8x256xf32, #tpu.memory_space<vmem>>, vector<8x16xf32>,
    %16 = vector.extract_strided_slice %11 {offsets = [0, 32], sizes = [8, 16], strides = [1, 1]} : vector<8x128xf32> to vector<8x16xf32>
    %c0_12 = arith.constant 0 : index
    %c64 = arith.constant 64 : index
    %17 = vector.load %arg15[%c0_12, %c64] : memref<8x256xf32, #tpu.memory_space<vmem>>, vector<8x16xf32>
    tpu.vector_store %arg15[%c0_12, %c64], %16 {strides = array<i32>} : memref<8x256xf32, #tpu.memory_space<vmem>>, vector<8x16xf32>,
    %18 = vector.extract_strided_slice %11 {offsets = [0, 48], sizes = [8, 16], strides = [1, 1]} : vector<8x128xf32> to vector<8x16xf32>
    %c0_13 = arith.constant 0 : index
    %c96 = arith.constant 96 : index
    %19 = vector.load %arg15[%c0_13, %c96] : memref<8x256xf32, #tpu.memory_space<vmem>>, vector<8x16xf32>
    tpu.vector_store %arg15[%c0_13, %c96], %18 {strides = array<i32>} : memref<8x256xf32, #tpu.memory_space<vmem>>, vector<8x16xf32>,
    %20 = vector.extract_strided_slice %11 {offsets = [0, 64], sizes = [8, 16], strides = [1, 1]} : vector<8x128xf32> to vector<8x16xf32>
    %c0_14 = arith.constant 0 : index
    %c128 = arith.constant 128 : index
    %21 = vector.load %arg15[%c0_14, %c128] : memref<8x256xf32, #tpu.memory_space<vmem>>, vector<8x16xf32>
    tpu.vector_store %arg15[%c0_14, %c128], %20 {strides = array<i32>} : memref<8x256xf32, #tpu.memory_space<vmem>>, vector<8x16xf32>,
    %22 = vector.extract_strided_slice %11 {offsets = [0, 80], sizes = [8, 16], strides = [1, 1]} : vector<8x128xf32> to vector<8x16xf32>
    %c0_15 = arith.constant 0 : index
    %c160 = arith.constant 160 : index
    %23 = vector.load %arg15[%c0_15, %c160] : memref<8x256xf32, #tpu.memory_space<vmem>>, vector<8x16xf32>
    tpu.vector_store %arg15[%c0_15, %c160], %22 {strides = array<i32>} : memref<8x256xf32, #tpu.memory_space<vmem>>, vector<8x16xf32>,
    %24 = vector.extract_strided_slice %11 {offsets = [0, 96], sizes = [8, 16], strides = [1, 1]} : vector<8x128xf32> to vector<8x16xf32>
    %c0_16 = arith.constant 0 : index
    %c192 = arith.constant 192 : index
    %25 = vector.load %arg15[%c0_16, %c192] : memref<8x256xf32, #tpu.memory_space<vmem>>, vector<8x16xf32>
    tpu.vector_store %arg15[%c0_16, %c192], %24 {strides = array<i32>} : memref<8x256xf32, #tpu.memory_space<vmem>>, vector<8x16xf32>,
    %26 = vector.extract_strided_slice %11 {offsets = [0, 112], sizes = [8, 16], strides = [1, 1]} : vector<8x128xf32> to vector<8x16xf32>
    %c0_17 = arith.constant 0 : index
    %c224 = arith.constant 224 : index
    %27 = vector.load %arg15[%c0_17, %c224] : memref<8x256xf32, #tpu.memory_space<vmem>>, vector<8x16xf32>
    tpu.vector_store %arg15[%c0_17, %c224], %26 {strides = array<i32>} : memref<8x256xf32, #tpu.memory_space<vmem>>, vector<8x16xf32>,
    %28 = vector.extract_strided_slice %6 {offsets = [16, 0], sizes = [8, 64], strides = [1, 1]} : vector<32x64xf32> to vector<8x64xf32>
    %29 = vector.extract_strided_slice %6 {offsets = [24, 0], sizes = [8, 64], strides = [1, 1]} : vector<32x64xf32> to vector<8x64xf32>
    %30 = tpu.concatenate %28, %29 in 1 : vector<8x64xf32>, vector<8x64xf32> -> vector<8x128xf32>
    %31 = arith.truncf %30 : vector<8x128xf32> to vector<8x128xbf16>
    %cst_18 = arith.constant dense<0.000000e+00> : vector<8x128xf32>
    %32 = tpu.matmul %31, %3, %cst_18 {dimension_numbers = #tpu.dot_dimension_numbers<[1], [0], [0], [1], [0, 0, 1, 1], [], []>} : vector<8x128xbf16>, vector<128x128xbf16>, vector<8x128xf32> -> vector<8x128xf32>
    %33 = vector.extract_strided_slice %32 {offsets = [0, 0], sizes = [8, 16], strides = [1, 1]} : vector<8x128xf32> to vector<8x16xf32>
    %c0_19 = arith.constant 0 : index
    %c16 = arith.constant 16 : index
    %34 = vector.load %arg15[%c0_19, %c16] : memref<8x256xf32, #tpu.memory_space<vmem>>, vector<8x16xf32>
    tpu.vector_store %arg15[%c0_19, %c16], %33 {strides = array<i32>} : memref<8x256xf32, #tpu.memory_space<vmem>>, vector<8x16xf32>,
    %35 = vector.extract_strided_slice %32 {offsets = [0, 16], sizes = [8, 16], strides = [1, 1]} : vector<8x128xf32> to vector<8x16xf32>
    %c0_20 = arith.constant 0 : index
    %c48 = arith.constant 48 : index
    %36 = vector.load %arg15[%c0_20, %c48] : memref<8x256xf32, #tpu.memory_space<vmem>>, vector<8x16xf32>
    tpu.vector_store %arg15[%c0_20, %c48], %35 {strides = array<i32>} : memref<8x256xf32, #tpu.memory_space<vmem>>, vector<8x16xf32>,
    %37 = vector.extract_strided_slice %32 {offsets = [0, 32], sizes = [8, 16], strides = [1, 1]} : vector<8x128xf32> to vector<8x16xf32>
    %c0_21 = arith.constant 0 : index
    %c80 = arith.constant 80 : index
    %38 = vector.load %arg15[%c0_21, %c80] : memref<8x256xf32, #tpu.memory_space<vmem>>, vector<8x16xf32>
    tpu.vector_store %arg15[%c0_21, %c80], %37 {strides = array<i32>} : memref<8x256xf32, #tpu.memory_space<vmem>>, vector<8x16xf32>,
    %39 = vector.extract_strided_slice %32 {offsets = [0, 48], sizes = [8, 16], strides = [1, 1]} : vector<8x128xf32> to vector<8x16xf32>
    %c0_22 = arith.constant 0 : index
    %c112 = arith.constant 112 : index
    %40 = vector.load %arg15[%c0_22, %c112] : memref<8x256xf32, #tpu.memory_space<vmem>>, vector<8x16xf32>
    tpu.vector_store %arg15[%c0_22, %c112], %39 {strides = array<i32>} : memref<8x256xf32, #tpu.memory_space<vmem>>, vector<8x16xf32>,
    %41 = vector.extract_strided_slice %32 {offsets = [0, 64], sizes = [8, 16], strides = [1, 1]} : vector<8x128xf32> to vector<8x16xf32>
    %c0_23 = arith.constant 0 : index
    %c144 = arith.constant 144 : index
    %42 = vector.load %arg15[%c0_23, %c144] : memref<8x256xf32, #tpu.memory_space<vmem>>, vector<8x16xf32>
    tpu.vector_store %arg15[%c0_23, %c144], %41 {strides = array<i32>} : memref<8x256xf32, #tpu.memory_space<vmem>>, vector<8x16xf32>,
    %43 = vector.extract_strided_slice %32 {offsets = [0, 80], sizes = [8, 16], strides = [1, 1]} : vector<8x128xf32> to vector<8x16xf32>
    %c0_24 = arith.constant 0 : index
    %c176 = arith.constant 176 : index
    %44 = vector.load %arg15[%c0_24, %c176] : memref<8x256xf32, #tpu.memory_space<vmem>>, vector<8x16xf32>
    tpu.vector_store %arg15[%c0_24, %c176], %43 {strides = array<i32>} : memref<8x256xf32, #tpu.memory_space<vmem>>, vector<8x16xf32>,
    %45 = vector.extract_strided_slice %32 {offsets = [0, 96], sizes = [8, 16], strides = [1, 1]} : vector<8x128xf32> to vector<8x16xf32>
    %c0_25 = arith.constant 0 : index
    %c208 = arith.constant 208 : index
    %46 = vector.load %arg15[%c0_25, %c208] : memref<8x256xf32, #tpu.memory_space<vmem>>, vector<8x16xf32>
    tpu.vector_store %arg15[%c0_25, %c208], %45 {strides = array<i32>} : memref<8x256xf32, #tpu.memory_space<vmem>>, vector<8x16xf32>,
    %47 = vector.extract_strided_slice %32 {offsets = [0, 112], sizes = [8, 16], strides = [1, 1]} : vector<8x128xf32> to vector<8x16xf32>
    %c0_26 = arith.constant 0 : index
    %c240 = arith.constant 240 : index
    %48 = vector.load %arg15[%c0_26, %c240] : memref<8x256xf32, #tpu.memory_space<vmem>>, vector<8x16xf32>
    tpu.vector_store %arg15[%c0_26, %c240], %47 {strides = array<i32>} : memref<8x256xf32, #tpu.memory_space<vmem>>, vector<8x16xf32>,
    %c0_27 = arith.constant 0 : index
    %c0_28 = arith.constant 0 : index
    %49 = vector.load %arg15[%c0_27, %c0_28] : memref<8x256xf32, #tpu.memory_space<vmem>>, vector<8x256xf32>
    %50 = vector.broadcast %4 : vector<8x1xf32> to vector<8x256xf32>
    %51 = arith.addf %49, %50 : vector<8x256xf32>
    %c0_29 = arith.constant 0 : index
    %c1 = arith.constant 1 : index
    %52 = vector.load %arg3[%c0_29, %c1] : memref<8x9xf32, #tpu.memory_space<vmem>>, vector<8x1xf32>
    %c0_30 = arith.constant 0 : index
    %c2 = arith.constant 2 : index
    %53 = vector.load %arg3[%c0_30, %c2] : memref<8x9xf32, #tpu.memory_space<vmem>>, vector<8x1xf32>
    %c0_31 = arith.constant 0 : index
    %c3 = arith.constant 3 : index
    %54 = vector.load %arg3[%c0_31, %c3] : memref<8x9xf32, #tpu.memory_space<vmem>>, vector<8x1xf32>
    %55 = tpu.iota {dimensions = array<i32: 1>} : vector<1x256xi32>
    %c16_i32 = arith.constant 16 : i32
    %c0_i32 = arith.constant 0 : i32
    %56 = arith.cmpi eq, %c16_i32, %c0_i32 : i32
    %c1_i32 = arith.constant 1 : i32
    %57 = arith.select %56, %c1_i32, %c16_i32 : i32
    %58 = vector.broadcast %57 : i32 to vector<1x256xi32>
    %59 = arith.remsi %55, %58 : vector<1x256xi32>
    %c0_i32_32 = arith.constant 0 : i32
    %60 = vector.broadcast %c0_i32_32 : i32 to vector<1x256xi32>
    %61 = arith.cmpi ne, %59, %60 : vector<1x256xi32>
    %c0_i32_33 = arith.constant 0 : i32
    %62 = vector.broadcast %c0_i32_33 : i32 to vector<1x256xi32>
    %63 = arith.cmpi slt, %59, %62 : vector<1x256xi32>
    %c0_i32_34 = arith.constant 0 : i32
    %64 = arith.cmpi slt, %57, %c0_i32_34 : i32
    %65 = vector.broadcast %64 : i1 to vector<1x256xi1>
    %66 = vector.broadcast %65 : vector<1x256xi1> to vector<1x256xi1>
    %67 = arith.xori %63, %66 : vector<1x256xi1>
    %68 = arith.andi %67, %61 : vector<1x256xi1>
    %69 = vector.broadcast %57 : i32 to vector<1x256xi32>
    %70 = arith.addi %59, %69 : vector<1x256xi32>
    %71 = arith.select %68, %70, %59 : vector<1x256xi1>, vector<1x256xi32>
    %c16_i32_35 = arith.constant 16 : i32
    %72 = vector.broadcast %c16_i32_35 : i32 to vector<1x256xi32>
    %73 = arith.cmpi slt, %55, %72 : vector<1x256xi32>
    %c240_i32 = arith.constant 240 : i32
    %74 = vector.broadcast %c240_i32 : i32 to vector<1x256xi32>
    %75 = arith.cmpi sge, %55, %74 : vector<1x256xi32>
    %c0_i32_36 = arith.constant 0 : i32
    %76 = vector.broadcast %c0_i32_36 : i32 to vector<1x256xi32>
    %77 = arith.cmpi eq, %71, %76 : vector<1x256xi32>
    %c15_i32 = arith.constant 15 : i32
    %78 = vector.broadcast %c15_i32 : i32 to vector<1x256xi32>
    %79 = arith.cmpi eq, %71, %78 : vector<1x256xi32>
    %c0_37 = arith.constant 0 : index
    %c0_38 = arith.constant 0 : index
    %80 = vector.load %arg7[%c0_37, %c0_38] : memref<8x72xbf16, #tpu.memory_space<vmem>>, vector<8x72xbf16>
    %c240_i32_39 = arith.constant 240 : i32
    %81 = tpu.dynamic_rotate %51 by %c240_i32_39 dim 1 : vector<8x256xf32>, i32 -> vector<8x256xf32>
    %c16_i32_40 = arith.constant 16 : i32
    %82 = tpu.dynamic_rotate %51 by %c16_i32_40 dim 1 : vector<8x256xf32>, i32 -> vector<8x256xf32>
    %83 = vector.shape_cast %73 : vector<1x256xi1> to vector<1x256xi1>
    %84 = vector.broadcast %83 : vector<1x256xi1> to vector<8x256xi1>
    %85 = arith.select %84, %81, %82 : vector<8x256xi1>, vector<8x256xf32>
    %c16_i32_41 = arith.constant 16 : i32
    %86 = tpu.dynamic_rotate %51 by %c16_i32_41 dim 1 : vector<8x256xf32>, i32 -> vector<8x256xf32>
    %c240_i32_42 = arith.constant 240 : i32
    %87 = tpu.dynamic_rotate %51 by %c240_i32_42 dim 1 : vector<8x256xf32>, i32 -> vector<8x256xf32>
    %88 = vector.shape_cast %75 : vector<1x256xi1> to vector<1x256xi1>
    %89 = vector.broadcast %88 : vector<1x256xi1> to vector<8x256xi1>
    %90 = arith.select %89, %86, %87 : vector<8x256xi1>, vector<8x256xf32>
    %c255_i32 = arith.constant 255 : i32
    %91 = tpu.dynamic_rotate %85 by %c255_i32 dim 1 : vector<8x256xf32>, i32 -> vector<8x256xf32>
    %c1_i32_43 = arith.constant 1 : i32
    %92 = tpu.dynamic_rotate %85 by %c1_i32_43 dim 1 : vector<8x256xf32>, i32 -> vector<8x256xf32>
    %93 = vector.shape_cast %77 : vector<1x256xi1> to vector<1x256xi1>
    %94 = vector.broadcast %93 : vector<1x256xi1> to vector<8x256xi1>
    %95 = arith.select %94, %91, %92 : vector<8x256xi1>, vector<8x256xf32>
    %c1_i32_44 = arith.constant 1 : i32
    %96 = tpu.dynamic_rotate %85 by %c1_i32_44 dim 1 : vector<8x256xf32>, i32 -> vector<8x256xf32>
    %c255_i32_45 = arith.constant 255 : i32
    %97 = tpu.dynamic_rotate %85 by %c255_i32_45 dim 1 : vector<8x256xf32>, i32 -> vector<8x256xf32>
    %98 = vector.shape_cast %79 : vector<1x256xi1> to vector<1x256xi1>
    %99 = vector.broadcast %98 : vector<1x256xi1> to vector<8x256xi1>
    %100 = arith.select %99, %96, %97 : vector<8x256xi1>, vector<8x256xf32>
    %c255_i32_46 = arith.constant 255 : i32
    %101 = tpu.dynamic_rotate %51 by %c255_i32_46 dim 1 : vector<8x256xf32>, i32 -> vector<8x256xf32>
    %c1_i32_47 = arith.constant 1 : i32
    %102 = tpu.dynamic_rotate %51 by %c1_i32_47 dim 1 : vector<8x256xf32>, i32 -> vector<8x256xf32>
    %103 = vector.shape_cast %77 : vector<1x256xi1> to vector<1x256xi1>
    %104 = vector.broadcast %103 : vector<1x256xi1> to vector<8x256xi1>
    %105 = arith.select %104, %101, %102 : vector<8x256xi1>, vector<8x256xf32>
    %c1_i32_48 = arith.constant 1 : i32
    %106 = tpu.dynamic_rotate %51 by %c1_i32_48 dim 1 : vector<8x256xf32>, i32 -> vector<8x256xf32>
    %c255_i32_49 = arith.constant 255 : i32
    %107 = tpu.dynamic_rotate %51 by %c255_i32_49 dim 1 : vector<8x256xf32>, i32 -> vector<8x256xf32>
    %108 = vector.shape_cast %79 : vector<1x256xi1> to vector<1x256xi1>
    %109 = vector.broadcast %108 : vector<1x256xi1> to vector<8x256xi1>
    %110 = arith.select %109, %106, %107 : vector<8x256xi1>, vector<8x256xf32>
    %c255_i32_50 = arith.constant 255 : i32
    %111 = tpu.dynamic_rotate %90 by %c255_i32_50 dim 1 : vector<8x256xf32>, i32 -> vector<8x256xf32>
    %c1_i32_51 = arith.constant 1 : i32
    %112 = tpu.dynamic_rotate %90 by %c1_i32_51 dim 1 : vector<8x256xf32>, i32 -> vector<8x256xf32>
    %113 = vector.shape_cast %77 : vector<1x256xi1> to vector<1x256xi1>
    %114 = vector.broadcast %113 : vector<1x256xi1> to vector<8x256xi1>
    %115 = arith.select %114, %111, %112 : vector<8x256xi1>, vector<8x256xf32>
    %c1_i32_52 = arith.constant 1 : i32
    %116 = tpu.dynamic_rotate %90 by %c1_i32_52 dim 1 : vector<8x256xf32>, i32 -> vector<8x256xf32>
    %c255_i32_53 = arith.constant 255 : i32
    %117 = tpu.dynamic_rotate %90 by %c255_i32_53 dim 1 : vector<8x256xf32>, i32 -> vector<8x256xf32>
    %118 = vector.shape_cast %79 : vector<1x256xi1> to vector<1x256xi1>
    %119 = vector.broadcast %118 : vector<1x256xi1> to vector<8x256xi1>
    %120 = arith.select %119, %116, %117 : vector<8x256xi1>, vector<8x256xf32>
    %121 = tpu.concatenate %95, %85, %100, %105, %51, %110, %115, %90, %120 in 0 : vector<8x256xf32>, vector<8x256xf32>, vector<8x256xf32>, vector<8x256xf32>, vector<8x256xf32>, vector<8x256xf32>, vector<8x256xf32>, vector<8x256xf32>, vector<8x256xf32> -> vector<72x256xf32>
    %122 = arith.truncf %121 : vector<72x256xf32> to vector<72x256xbf16>
    %cst_54 = arith.constant dense<0.000000e+00> : vector<8x256xf32>
    %123 = tpu.matmul %80, %122, %cst_54 {dimension_numbers = #tpu.dot_dimension_numbers<[1], [0], [0], [1], [0, 0, 1, 1], [], []>} : vector<8x72xbf16>, vector<72x256xbf16>, vector<8x256xf32> -> vector<8x256xf32>
    %124 = vector.broadcast %52 : vector<8x1xf32> to vector<8x256xf32>
    %125 = arith.addf %123, %124 : vector<8x256xf32>
    %cst_55 = arith.constant 0.000000e+00 : f32
    %126 = vector.broadcast %cst_55 : f32 to vector<8x256xf32>
    %127 = arith.cmpf oge, %125, %126 : vector<8x256xf32>
    %cst_56 = arith.constant 0.00999999977 : f32
    %128 = vector.broadcast %cst_56 : f32 to vector<8x256xf32>
    %129 = arith.mulf %125, %128 : vector<8x256xf32>
    %130 = arith.select %127, %125, %129 : vector<8x256xi1>, vector<8x256xf32>
    %c0_57 = arith.constant 0 : index
    %c0_58 = arith.constant 0 : index
    %131 = vector.load %arg8[%c0_57, %c0_58] : memref<8x72xbf16, #tpu.memory_space<vmem>>, vector<8x72xbf16>
    %c240_i32_59 = arith.constant 240 : i32
    %132 = tpu.dynamic_rotate %130 by %c240_i32_59 dim 1 : vector<8x256xf32>, i32 -> vector<8x256xf32>
    %c16_i32_60 = arith.constant 16 : i32
    %133 = tpu.dynamic_rotate %130 by %c16_i32_60 dim 1 : vector<8x256xf32>, i32 -> vector<8x256xf32>
    %134 = vector.shape_cast %73 : vector<1x256xi1> to vector<1x256xi1>
    %135 = vector.broadcast %134 : vector<1x256xi1> to vector<8x256xi1>
    %136 = arith.select %135, %132, %133 : vector<8x256xi1>, vector<8x256xf32>
    %c16_i32_61 = arith.constant 16 : i32
    %137 = tpu.dynamic_rotate %130 by %c16_i32_61 dim 1 : vector<8x256xf32>, i32 -> vector<8x256xf32>
    %c240_i32_62 = arith.constant 240 : i32
    %138 = tpu.dynamic_rotate %130 by %c240_i32_62 dim 1 : vector<8x256xf32>, i32 -> vector<8x256xf32>
    %139 = vector.shape_cast %75 : vector<1x256xi1> to vector<1x256xi1>
    %140 = vector.broadcast %139 : vector<1x256xi1> to vector<8x256xi1>
    %141 = arith.select %140, %137, %138 : vector<8x256xi1>, vector<8x256xf32>
    %c255_i32_63 = arith.constant 255 : i32
    %142 = tpu.dynamic_rotate %136 by %c255_i32_63 dim 1 : vector<8x256xf32>, i32 -> vector<8x256xf32>
    %c1_i32_64 = arith.constant 1 : i32
    %143 = tpu.dynamic_rotate %136 by %c1_i32_64 dim 1 : vector<8x256xf32>, i32 -> vector<8x256xf32>
    %144 = vector.shape_cast %77 : vector<1x256xi1> to vector<1x256xi1>
    %145 = vector.broadcast %144 : vector<1x256xi1> to vector<8x256xi1>
    %146 = arith.select %145, %142, %143 : vector<8x256xi1>, vector<8x256xf32>
    %c1_i32_65 = arith.constant 1 : i32
    %147 = tpu.dynamic_rotate %136 by %c1_i32_65 dim 1 : vector<8x256xf32>, i32 -> vector<8x256xf32>
    %c255_i32_66 = arith.constant 255 : i32
    %148 = tpu.dynamic_rotate %136 by %c255_i32_66 dim 1 : vector<8x256xf32>, i32 -> vector<8x256xf32>
    %149 = vector.shape_cast %79 : vector<1x256xi1> to vector<1x256xi1>
    %150 = vector.broadcast %149 : vector<1x256xi1> to vector<8x256xi1>
    %151 = arith.select %150, %147, %148 : vector<8x256xi1>, vector<8x256xf32>
    %c255_i32_67 = arith.constant 255 : i32
    %152 = tpu.dynamic_rotate %130 by %c255_i32_67 dim 1 : vector<8x256xf32>, i32 -> vector<8x256xf32>
    %c1_i32_68 = arith.constant 1 : i32
    %153 = tpu.dynamic_rotate %130 by %c1_i32_68 dim 1 : vector<8x256xf32>, i32 -> vector<8x256xf32>
    %154 = vector.shape_cast %77 : vector<1x256xi1> to vector<1x256xi1>
    %155 = vector.broadcast %154 : vector<1x256xi1> to vector<8x256xi1>
    %156 = arith.select %155, %152, %153 : vector<8x256xi1>, vector<8x256xf32>
    %c1_i32_69 = arith.constant 1 : i32
    %157 = tpu.dynamic_rotate %130 by %c1_i32_69 dim 1 : vector<8x256xf32>, i32 -> vector<8x256xf32>
    %c255_i32_70 = arith.constant 255 : i32
    %158 = tpu.dynamic_rotate %130 by %c255_i32_70 dim 1 : vector<8x256xf32>, i32 -> vector<8x256xf32>
    %159 = vector.shape_cast %79 : vector<1x256xi1> to vector<1x256xi1>
    %160 = vector.broadcast %159 : vector<1x256xi1> to vector<8x256xi1>
    %161 = arith.select %160, %157, %158 : vector<8x256xi1>, vector<8x256xf32>
    %c255_i32_71 = arith.constant 255 : i32
    %162 = tpu.dynamic_rotate %141 by %c255_i32_71 dim 1 : vector<8x256xf32>, i32 -> vector<8x256xf32>
    %c1_i32_72 = arith.constant 1 : i32
    %163 = tpu.dynamic_rotate %141 by %c1_i32_72 dim 1 : vector<8x256xf32>, i32 -> vector<8x256xf32>
    %164 = vector.shape_cast %77 : vector<1x256xi1> to vector<1x256xi1>
    %165 = vector.broadcast %164 : vector<1x256xi1> to vector<8x256xi1>
    %166 = arith.select %165, %162, %163 : vector<8x256xi1>, vector<8x256xf32>
    %c1_i32_73 = arith.constant 1 : i32
    %167 = tpu.dynamic_rotate %141 by %c1_i32_73 dim 1 : vector<8x256xf32>, i32 -> vector<8x256xf32>
    %c255_i32_74 = arith.constant 255 : i32
    %168 = tpu.dynamic_rotate %141 by %c255_i32_74 dim 1 : vector<8x256xf32>, i32 -> vector<8x256xf32>
    %169 = vector.shape_cast %79 : vector<1x256xi1> to vector<1x256xi1>
    %170 = vector.broadcast %169 : vector<1x256xi1> to vector<8x256xi1>
    %171 = arith.select %170, %167, %168 : vector<8x256xi1>, vector<8x256xf32>
    %172 = tpu.concatenate %146, %136, %151, %156, %130, %161, %166, %141, %171 in 0 : vector<8x256xf32>, vector<8x256xf32>, vector<8x256xf32>, vector<8x256xf32>, vector<8x256xf32>, vector<8x256xf32>, vector<8x256xf32>, vector<8x256xf32>, vector<8x256xf32> -> vector<72x256xf32>
    %173 = arith.truncf %172 : vector<72x256xf32> to vector<72x256xbf16>
    %cst_75 = arith.constant dense<0.000000e+00> : vector<8x256xf32>
    %174 = tpu.matmul %131, %173, %cst_75 {dimension_numbers = #tpu.dot_dimension_numbers<[1], [0], [0], [1], [0, 0, 1, 1], [], []>} : vector<8x72xbf16>, vector<72x256xbf16>, vector<8x256xf32> -> vector<8x256xf32>
    %175 = vector.broadcast %53 : vector<8x1xf32> to vector<8x256xf32>
    %176 = arith.addf %174, %175 : vector<8x256xf32>
    %cst_76 = arith.constant 0.000000e+00 : f32
    %177 = vector.broadcast %cst_76 : f32 to vector<8x256xf32>
    %178 = arith.cmpf oge, %176, %177 : vector<8x256xf32>
    %cst_77 = arith.constant 0.00999999977 : f32
    %179 = vector.broadcast %cst_77 : f32 to vector<8x256xf32>
    %180 = arith.mulf %176, %179 : vector<8x256xf32>
    %181 = arith.select %178, %176, %180 : vector<8x256xi1>, vector<8x256xf32>
    %c0_78 = arith.constant 0 : index
    %c0_79 = arith.constant 0 : index
    %182 = vector.load %arg9[%c0_78, %c0_79] : memref<32x8xbf16, #tpu.memory_space<vmem>>, vector<32x8xbf16>
    %c0_80 = arith.constant 0 : index
    %c0_81 = arith.constant 0 : index
    %183 = vector.load %arg10[%c0_80, %c0_81] : memref<512x512xbf16, #tpu.memory_space<vmem>>, vector<512x512xbf16>
    %184 = arith.truncf %181 : vector<8x256xf32> to vector<8x256xbf16>
    %cst_82 = arith.constant dense<0.000000e+00> : vector<32x256xf32>
    %185 = tpu.matmul %182, %184, %cst_82 {dimension_numbers = #tpu.dot_dimension_numbers<[1], [0], [0], [1], [0, 0, 1, 1], [], []>} : vector<32x8xbf16>, vector<8x256xbf16>, vector<32x256xf32> -> vector<32x256xf32>
    %186 = vector.extract_strided_slice %185 {offsets = [0, 0], sizes = [8, 256], strides = [1, 1]} : vector<32x256xf32> to vector<8x256xf32>
    %187 = vector.extract_strided_slice %185 {offsets = [8, 0], sizes = [8, 256], strides = [1, 1]} : vector<32x256xf32> to vector<8x256xf32>
    %188 = tpu.concatenate %186, %187 in 1 : vector<8x256xf32>, vector<8x256xf32> -> vector<8x512xf32>
    %189 = arith.truncf %188 : vector<8x512xf32> to vector<8x512xbf16>
    %cst_83 = arith.constant dense<0.000000e+00> : vector<8x512xf32>
    %190 = tpu.matmul %189, %183, %cst_83 {dimension_numbers = #tpu.dot_dimension_numbers<[1], [0], [0], [1], [0, 0, 1, 1], [], []>} : vector<8x512xbf16>, vector<512x512xbf16>, vector<8x512xf32> -> vector<8x512xf32>
    %191 = vector.extract_strided_slice %190 {offsets = [0, 0], sizes = [8, 32], strides = [1, 1]} : vector<8x512xf32> to vector<8x32xf32>
    %c0_84 = arith.constant 0 : index
    %c0_85 = arith.constant 0 : index
    %192 = vector.load %arg16[%c0_84, %c0_85] : memref<8x1024xf32, #tpu.memory_space<vmem>>, vector<8x32xf32>
    tpu.vector_store %arg16[%c0_84, %c0_85], %191 {strides = array<i32>} : memref<8x1024xf32, #tpu.memory_space<vmem>>, vector<8x32xf32>,
    %193 = vector.extract_strided_slice %190 {offsets = [0, 32], sizes = [8, 32], strides = [1, 1]} : vector<8x512xf32> to vector<8x32xf32>
    %c0_86 = arith.constant 0 : index
    %c64_87 = arith.constant 64 : index
    %194 = vector.load %arg16[%c0_86, %c64_87] : memref<8x1024xf32, #tpu.memory_space<vmem>>, vector<8x32xf32>
    tpu.vector_store %arg16[%c0_86, %c64_87], %193 {strides = array<i32>} : memref<8x1024xf32, #tpu.memory_space<vmem>>, vector<8x32xf32>,
    %195 = vector.extract_strided_slice %190 {offsets = [0, 64], sizes = [8, 32], strides = [1, 1]} : vector<8x512xf32> to vector<8x32xf32>
    %c0_88 = arith.constant 0 : index
    %c128_89 = arith.constant 128 : index
    %196 = vector.load %arg16[%c0_88, %c128_89] : memref<8x1024xf32, #tpu.memory_space<vmem>>, vector<8x32xf32>
    tpu.vector_store %arg16[%c0_88, %c128_89], %195 {strides = array<i32>} : memref<8x1024xf32, #tpu.memory_space<vmem>>, vector<8x32xf32>,
    %197 = vector.extract_strided_slice %190 {offsets = [0, 96], sizes = [8, 32], strides = [1, 1]} : vector<8x512xf32> to vector<8x32xf32>
    %c0_90 = arith.constant 0 : index
    %c192_91 = arith.constant 192 : index
    %198 = vector.load %arg16[%c0_90, %c192_91] : memref<8x1024xf32, #tpu.memory_space<vmem>>, vector<8x32xf32>
    tpu.vector_store %arg16[%c0_90, %c192_91], %197 {strides = array<i32>} : memref<8x1024xf32, #tpu.memory_space<vmem>>, vector<8x32xf32>,
    %199 = vector.extract_strided_slice %190 {offsets = [0, 128], sizes = [8, 32], strides = [1, 1]} : vector<8x512xf32> to vector<8x32xf32>
    %c0_92 = arith.constant 0 : index
    %c256 = arith.constant 256 : index
    %200 = vector.load %arg16[%c0_92, %c256] : memref<8x1024xf32, #tpu.memory_space<vmem>>, vector<8x32xf32>
    tpu.vector_store %arg16[%c0_92, %c256], %199 {strides = array<i32>} : memref<8x1024xf32, #tpu.memory_space<vmem>>, vector<8x32xf32>,
    %201 = vector.extract_strided_slice %190 {offsets = [0, 160], sizes = [8, 32], strides = [1, 1]} : vector<8x512xf32> to vector<8x32xf32>
    %c0_93 = arith.constant 0 : index
    %c320 = arith.constant 320 : index
    %202 = vector.load %arg16[%c0_93, %c320] : memref<8x1024xf32, #tpu.memory_space<vmem>>, vector<8x32xf32>
    tpu.vector_store %arg16[%c0_93, %c320], %201 {strides = array<i32>} : memref<8x1024xf32, #tpu.memory_space<vmem>>, vector<8x32xf32>,
    %203 = vector.extract_strided_slice %190 {offsets = [0, 192], sizes = [8, 32], strides = [1, 1]} : vector<8x512xf32> to vector<8x32xf32>
    %c0_94 = arith.constant 0 : index
    %c384 = arith.constant 384 : index
    %204 = vector.load %arg16[%c0_94, %c384] : memref<8x1024xf32, #tpu.memory_space<vmem>>, vector<8x32xf32>
    tpu.vector_store %arg16[%c0_94, %c384], %203 {strides = array<i32>} : memref<8x1024xf32, #tpu.memory_space<vmem>>, vector<8x32xf32>,
    %205 = vector.extract_strided_slice %190 {offsets = [0, 224], sizes = [8, 32], strides = [1, 1]} : vector<8x512xf32> to vector<8x32xf32>
    %c0_95 = arith.constant 0 : index
    %c448 = arith.constant 448 : index
    %206 = vector.load %arg16[%c0_95, %c448] : memref<8x1024xf32, #tpu.memory_space<vmem>>, vector<8x32xf32>
    tpu.vector_store %arg16[%c0_95, %c448], %205 {strides = array<i32>} : memref<8x1024xf32, #tpu.memory_space<vmem>>, vector<8x32xf32>,
    %207 = vector.extract_strided_slice %190 {offsets = [0, 256], sizes = [8, 32], strides = [1, 1]} : vector<8x512xf32> to vector<8x32xf32>
    %c0_96 = arith.constant 0 : index
    %c512 = arith.constant 512 : index
    %208 = vector.load %arg16[%c0_96, %c512] : memref<8x1024xf32, #tpu.memory_space<vmem>>, vector<8x32xf32>
    tpu.vector_store %arg16[%c0_96, %c512], %207 {strides = array<i32>} : memref<8x1024xf32, #tpu.memory_space<vmem>>, vector<8x32xf32>,
    %209 = vector.extract_strided_slice %190 {offsets = [0, 288], sizes = [8, 32], strides = [1, 1]} : vector<8x512xf32> to vector<8x32xf32>
    %c0_97 = arith.constant 0 : index
    %c576 = arith.constant 576 : index
    %210 = vector.load %arg16[%c0_97, %c576] : memref<8x1024xf32, #tpu.memory_space<vmem>>, vector<8x32xf32>
    tpu.vector_store %arg16[%c0_97, %c576], %209 {strides = array<i32>} : memref<8x1024xf32, #tpu.memory_space<vmem>>, vector<8x32xf32>,
    %211 = vector.extract_strided_slice %190 {offsets = [0, 320], sizes = [8, 32], strides = [1, 1]} : vector<8x512xf32> to vector<8x32xf32>
    %c0_98 = arith.constant 0 : index
    %c640 = arith.constant 640 : index
    %212 = vector.load %arg16[%c0_98, %c640] : memref<8x1024xf32, #tpu.memory_space<vmem>>, vector<8x32xf32>
    tpu.vector_store %arg16[%c0_98, %c640], %211 {strides = array<i32>} : memref<8x1024xf32, #tpu.memory_space<vmem>>, vector<8x32xf32>,
    %213 = vector.extract_strided_slice %190 {offsets = [0, 352], sizes = [8, 32], strides = [1, 1]} : vector<8x512xf32> to vector<8x32xf32>
    %c0_99 = arith.constant 0 : index
    %c704 = arith.constant 704 : index
    %214 = vector.load %arg16[%c0_99, %c704] : memref<8x1024xf32, #tpu.memory_space<vmem>>, vector<8x32xf32>
    tpu.vector_store %arg16[%c0_99, %c704], %213 {strides = array<i32>} : memref<8x1024xf32, #tpu.memory_space<vmem>>, vector<8x32xf32>,
    %215 = vector.extract_strided_slice %190 {offsets = [0, 384], sizes = [8, 32], strides = [1, 1]} : vector<8x512xf32> to vector<8x32xf32>
    %c0_100 = arith.constant 0 : index
    %c768 = arith.constant 768 : index
    %216 = vector.load %arg16[%c0_100, %c768] : memref<8x1024xf32, #tpu.memory_space<vmem>>, vector<8x32xf32>
    tpu.vector_store %arg16[%c0_100, %c768], %215 {strides = array<i32>} : memref<8x1024xf32, #tpu.memory_space<vmem>>, vector<8x32xf32>,
    %217 = vector.extract_strided_slice %190 {offsets = [0, 416], sizes = [8, 32], strides = [1, 1]} : vector<8x512xf32> to vector<8x32xf32>
    %c0_101 = arith.constant 0 : index
    %c832 = arith.constant 832 : index
    %218 = vector.load %arg16[%c0_101, %c832] : memref<8x1024xf32, #tpu.memory_space<vmem>>, vector<8x32xf32>
    tpu.vector_store %arg16[%c0_101, %c832], %217 {strides = array<i32>} : memref<8x1024xf32, #tpu.memory_space<vmem>>, vector<8x32xf32>,
    %219 = vector.extract_strided_slice %190 {offsets = [0, 448], sizes = [8, 32], strides = [1, 1]} : vector<8x512xf32> to vector<8x32xf32>
    %c0_102 = arith.constant 0 : index
    %c896 = arith.constant 896 : index
    %220 = vector.load %arg16[%c0_102, %c896] : memref<8x1024xf32, #tpu.memory_space<vmem>>, vector<8x32xf32>
    tpu.vector_store %arg16[%c0_102, %c896], %219 {strides = array<i32>} : memref<8x1024xf32, #tpu.memory_space<vmem>>, vector<8x32xf32>,
    %221 = vector.extract_strided_slice %190 {offsets = [0, 480], sizes = [8, 32], strides = [1, 1]} : vector<8x512xf32> to vector<8x32xf32>
    %c0_103 = arith.constant 0 : index
    %c960 = arith.constant 960 : index
    %222 = vector.load %arg16[%c0_103, %c960] : memref<8x1024xf32, #tpu.memory_space<vmem>>, vector<8x32xf32>
    tpu.vector_store %arg16[%c0_103, %c960], %221 {strides = array<i32>} : memref<8x1024xf32, #tpu.memory_space<vmem>>, vector<8x32xf32>,
    %223 = vector.extract_strided_slice %185 {offsets = [16, 0], sizes = [8, 256], strides = [1, 1]} : vector<32x256xf32> to vector<8x256xf32>
    %224 = vector.extract_strided_slice %185 {offsets = [24, 0], sizes = [8, 256], strides = [1, 1]} : vector<32x256xf32> to vector<8x256xf32>
    %225 = tpu.concatenate %223, %224 in 1 : vector<8x256xf32>, vector<8x256xf32> -> vector<8x512xf32>
    %226 = arith.truncf %225 : vector<8x512xf32> to vector<8x512xbf16>
    %cst_104 = arith.constant dense<0.000000e+00> : vector<8x512xf32>
    %227 = tpu.matmul %226, %183, %cst_104 {dimension_numbers = #tpu.dot_dimension_numbers<[1], [0], [0], [1], [0, 0, 1, 1], [], []>} : vector<8x512xbf16>, vector<512x512xbf16>, vector<8x512xf32> -> vector<8x512xf32>
    %228 = vector.extract_strided_slice %227 {offsets = [0, 0], sizes = [8, 32], strides = [1, 1]} : vector<8x512xf32> to vector<8x32xf32>
    %c0_105 = arith.constant 0 : index
    %c32_106 = arith.constant 32 : index
    %229 = vector.load %arg16[%c0_105, %c32_106] : memref<8x1024xf32, #tpu.memory_space<vmem>>, vector<8x32xf32>
    tpu.vector_store %arg16[%c0_105, %c32_106], %228 {strides = array<i32>} : memref<8x1024xf32, #tpu.memory_space<vmem>>, vector<8x32xf32>,
    %230 = vector.extract_strided_slice %227 {offsets = [0, 32], sizes = [8, 32], strides = [1, 1]} : vector<8x512xf32> to vector<8x32xf32>
    %c0_107 = arith.constant 0 : index
    %c96_108 = arith.constant 96 : index
    %231 = vector.load %arg16[%c0_107, %c96_108] : memref<8x1024xf32, #tpu.memory_space<vmem>>, vector<8x32xf32>
    tpu.vector_store %arg16[%c0_107, %c96_108], %230 {strides = array<i32>} : memref<8x1024xf32, #tpu.memory_space<vmem>>, vector<8x32xf32>,
    %232 = vector.extract_strided_slice %227 {offsets = [0, 64], sizes = [8, 32], strides = [1, 1]} : vector<8x512xf32> to vector<8x32xf32>
    %c0_109 = arith.constant 0 : index
    %c160_110 = arith.constant 160 : index
    %233 = vector.load %arg16[%c0_109, %c160_110] : memref<8x1024xf32, #tpu.memory_space<vmem>>, vector<8x32xf32>
    tpu.vector_store %arg16[%c0_109, %c160_110], %232 {strides = array<i32>} : memref<8x1024xf32, #tpu.memory_space<vmem>>, vector<8x32xf32>,
    %234 = vector.extract_strided_slice %227 {offsets = [0, 96], sizes = [8, 32], strides = [1, 1]} : vector<8x512xf32> to vector<8x32xf32>
    %c0_111 = arith.constant 0 : index
    %c224_112 = arith.constant 224 : index
    %235 = vector.load %arg16[%c0_111, %c224_112] : memref<8x1024xf32, #tpu.memory_space<vmem>>, vector<8x32xf32>
    tpu.vector_store %arg16[%c0_111, %c224_112], %234 {strides = array<i32>} : memref<8x1024xf32, #tpu.memory_space<vmem>>, vector<8x32xf32>,
    %236 = vector.extract_strided_slice %227 {offsets = [0, 128], sizes = [8, 32], strides = [1, 1]} : vector<8x512xf32> to vector<8x32xf32>
    %c0_113 = arith.constant 0 : index
    %c288 = arith.constant 288 : index
    %237 = vector.load %arg16[%c0_113, %c288] : memref<8x1024xf32, #tpu.memory_space<vmem>>, vector<8x32xf32>
    tpu.vector_store %arg16[%c0_113, %c288], %236 {strides = array<i32>} : memref<8x1024xf32, #tpu.memory_space<vmem>>, vector<8x32xf32>,
    %238 = vector.extract_strided_slice %227 {offsets = [0, 160], sizes = [8, 32], strides = [1, 1]} : vector<8x512xf32> to vector<8x32xf32>
    %c0_114 = arith.constant 0 : index
    %c352 = arith.constant 352 : index
    %239 = vector.load %arg16[%c0_114, %c352] : memref<8x1024xf32, #tpu.memory_space<vmem>>, vector<8x32xf32>
    tpu.vector_store %arg16[%c0_114, %c352], %238 {strides = array<i32>} : memref<8x1024xf32, #tpu.memory_space<vmem>>, vector<8x32xf32>,
    %240 = vector.extract_strided_slice %227 {offsets = [0, 192], sizes = [8, 32], strides = [1, 1]} : vector<8x512xf32> to vector<8x32xf32>
    %c0_115 = arith.constant 0 : index
    %c416 = arith.constant 416 : index
    %241 = vector.load %arg16[%c0_115, %c416] : memref<8x1024xf32, #tpu.memory_space<vmem>>, vector<8x32xf32>
    tpu.vector_store %arg16[%c0_115, %c416], %240 {strides = array<i32>} : memref<8x1024xf32, #tpu.memory_space<vmem>>, vector<8x32xf32>,
    %242 = vector.extract_strided_slice %227 {offsets = [0, 224], sizes = [8, 32], strides = [1, 1]} : vector<8x512xf32> to vector<8x32xf32>
    %c0_116 = arith.constant 0 : index
    %c480 = arith.constant 480 : index
    %243 = vector.load %arg16[%c0_116, %c480] : memref<8x1024xf32, #tpu.memory_space<vmem>>, vector<8x32xf32>
    tpu.vector_store %arg16[%c0_116, %c480], %242 {strides = array<i32>} : memref<8x1024xf32, #tpu.memory_space<vmem>>, vector<8x32xf32>,
    %244 = vector.extract_strided_slice %227 {offsets = [0, 256], sizes = [8, 32], strides = [1, 1]} : vector<8x512xf32> to vector<8x32xf32>
    %c0_117 = arith.constant 0 : index
    %c544 = arith.constant 544 : index
    %245 = vector.load %arg16[%c0_117, %c544] : memref<8x1024xf32, #tpu.memory_space<vmem>>, vector<8x32xf32>
    tpu.vector_store %arg16[%c0_117, %c544], %244 {strides = array<i32>} : memref<8x1024xf32, #tpu.memory_space<vmem>>, vector<8x32xf32>,
    %246 = vector.extract_strided_slice %227 {offsets = [0, 288], sizes = [8, 32], strides = [1, 1]} : vector<8x512xf32> to vector<8x32xf32>
    %c0_118 = arith.constant 0 : index
    %c608 = arith.constant 608 : index
    %247 = vector.load %arg16[%c0_118, %c608] : memref<8x1024xf32, #tpu.memory_space<vmem>>, vector<8x32xf32>
    tpu.vector_store %arg16[%c0_118, %c608], %246 {strides = array<i32>} : memref<8x1024xf32, #tpu.memory_space<vmem>>, vector<8x32xf32>,
    %248 = vector.extract_strided_slice %227 {offsets = [0, 320], sizes = [8, 32], strides = [1, 1]} : vector<8x512xf32> to vector<8x32xf32>
    %c0_119 = arith.constant 0 : index
    %c672 = arith.constant 672 : index
    %249 = vector.load %arg16[%c0_119, %c672] : memref<8x1024xf32, #tpu.memory_space<vmem>>, vector<8x32xf32>
    tpu.vector_store %arg16[%c0_119, %c672], %248 {strides = array<i32>} : memref<8x1024xf32, #tpu.memory_space<vmem>>, vector<8x32xf32>,
    %250 = vector.extract_strided_slice %227 {offsets = [0, 352], sizes = [8, 32], strides = [1, 1]} : vector<8x512xf32> to vector<8x32xf32>
    %c0_120 = arith.constant 0 : index
    %c736 = arith.constant 736 : index
    %251 = vector.load %arg16[%c0_120, %c736] : memref<8x1024xf32, #tpu.memory_space<vmem>>, vector<8x32xf32>
    tpu.vector_store %arg16[%c0_120, %c736], %250 {strides = array<i32>} : memref<8x1024xf32, #tpu.memory_space<vmem>>, vector<8x32xf32>,
    %252 = vector.extract_strided_slice %227 {offsets = [0, 384], sizes = [8, 32], strides = [1, 1]} : vector<8x512xf32> to vector<8x32xf32>
    %c0_121 = arith.constant 0 : index
    %c800 = arith.constant 800 : index
    %253 = vector.load %arg16[%c0_121, %c800] : memref<8x1024xf32, #tpu.memory_space<vmem>>, vector<8x32xf32>
    tpu.vector_store %arg16[%c0_121, %c800], %252 {strides = array<i32>} : memref<8x1024xf32, #tpu.memory_space<vmem>>, vector<8x32xf32>,
    %254 = vector.extract_strided_slice %227 {offsets = [0, 416], sizes = [8, 32], strides = [1, 1]} : vector<8x512xf32> to vector<8x32xf32>
    %c0_122 = arith.constant 0 : index
    %c864 = arith.constant 864 : index
    %255 = vector.load %arg16[%c0_122, %c864] : memref<8x1024xf32, #tpu.memory_space<vmem>>, vector<8x32xf32>
    tpu.vector_store %arg16[%c0_122, %c864], %254 {strides = array<i32>} : memref<8x1024xf32, #tpu.memory_space<vmem>>, vector<8x32xf32>,
    %256 = vector.extract_strided_slice %227 {offsets = [0, 448], sizes = [8, 32], strides = [1, 1]} : vector<8x512xf32> to vector<8x32xf32>
    %c0_123 = arith.constant 0 : index
    %c928 = arith.constant 928 : index
    %257 = vector.load %arg16[%c0_123, %c928] : memref<8x1024xf32, #tpu.memory_space<vmem>>, vector<8x32xf32>
    tpu.vector_store %arg16[%c0_123, %c928], %256 {strides = array<i32>} : memref<8x1024xf32, #tpu.memory_space<vmem>>, vector<8x32xf32>,
    %258 = vector.extract_strided_slice %227 {offsets = [0, 480], sizes = [8, 32], strides = [1, 1]} : vector<8x512xf32> to vector<8x32xf32>
    %c0_124 = arith.constant 0 : index
    %c992 = arith.constant 992 : index
    %259 = vector.load %arg16[%c0_124, %c992] : memref<8x1024xf32, #tpu.memory_space<vmem>>, vector<8x32xf32>
    tpu.vector_store %arg16[%c0_124, %c992], %258 {strides = array<i32>} : memref<8x1024xf32, #tpu.memory_space<vmem>>, vector<8x32xf32>,
    %c0_125 = arith.constant 0 : index
    %c0_126 = arith.constant 0 : index
    %260 = vector.load %arg16[%c0_125, %c0_126] : memref<8x1024xf32, #tpu.memory_space<vmem>>, vector<8x1024xf32>
    %261 = vector.broadcast %54 : vector<8x1xf32> to vector<8x1024xf32>
    %262 = arith.addf %260, %261 : vector<8x1024xf32>
    %c0_127 = arith.constant 0 : index
    %c4 = arith.constant 4 : index
    %263 = vector.load %arg3[%c0_127, %c4] : memref<8x9xf32, #tpu.memory_space<vmem>>, vector<8x1xf32>
    %c0_128 = arith.constant 0 : index
    %c5 = arith.constant 5 : index
    %264 = vector.load %arg3[%c0_128, %c5] : memref<8x9xf32, #tpu.memory_space<vmem>>, vector<8x1xf32>
    %c0_129 = arith.constant 0 : index
    %c6 = arith.constant 6 : index
    %265 = vector.load %arg3[%c0_129, %c6] : memref<8x9xf32, #tpu.memory_space<vmem>>, vector<8x1xf32>
    %c0_130 = arith.constant 0 : index
    %c7 = arith.constant 7 : index
    %266 = vector.load %arg3[%c0_130, %c7] : memref<8x9xf32, #tpu.memory_space<vmem>>, vector<1x1xf32>
    %c0_131 = arith.constant 0 : index
    %c8 = arith.constant 8 : index
    %267 = vector.load %arg3[%c0_131, %c8] : memref<8x9xf32, #tpu.memory_space<vmem>>, vector<1x1xf32>
    %268 = tpu.iota {dimensions = array<i32: 1>} : vector<1x1024xi32>
    %c32_i32 = arith.constant 32 : i32
    %c0_i32_132 = arith.constant 0 : i32
    %269 = arith.cmpi eq, %c32_i32, %c0_i32_132 : i32
    %c1_i32_133 = arith.constant 1 : i32
    %270 = arith.select %269, %c1_i32_133, %c32_i32 : i32
    %271 = vector.broadcast %270 : i32 to vector<1x1024xi32>
    %272 = arith.remsi %268, %271 : vector<1x1024xi32>
    %c0_i32_134 = arith.constant 0 : i32
    %273 = vector.broadcast %c0_i32_134 : i32 to vector<1x1024xi32>
    %274 = arith.cmpi ne, %272, %273 : vector<1x1024xi32>
    %c0_i32_135 = arith.constant 0 : i32
    %275 = vector.broadcast %c0_i32_135 : i32 to vector<1x1024xi32>
    %276 = arith.cmpi slt, %272, %275 : vector<1x1024xi32>
    %c0_i32_136 = arith.constant 0 : i32
    %277 = arith.cmpi slt, %270, %c0_i32_136 : i32
    %278 = vector.broadcast %277 : i1 to vector<1x1024xi1>
    %279 = vector.broadcast %278 : vector<1x1024xi1> to vector<1x1024xi1>
    %280 = arith.xori %276, %279 : vector<1x1024xi1>
    %281 = arith.andi %280, %274 : vector<1x1024xi1>
    %282 = vector.broadcast %270 : i32 to vector<1x1024xi32>
    %283 = arith.addi %272, %282 : vector<1x1024xi32>
    %284 = arith.select %281, %283, %272 : vector<1x1024xi1>, vector<1x1024xi32>
    %c32_i32_137 = arith.constant 32 : i32
    %285 = vector.broadcast %c32_i32_137 : i32 to vector<1x1024xi32>
    %286 = arith.cmpi slt, %268, %285 : vector<1x1024xi32>
    %c992_i32 = arith.constant 992 : i32
    %287 = vector.broadcast %c992_i32 : i32 to vector<1x1024xi32>
    %288 = arith.cmpi sge, %268, %287 : vector<1x1024xi32>
    %c0_i32_138 = arith.constant 0 : i32
    %289 = vector.broadcast %c0_i32_138 : i32 to vector<1x1024xi32>
    %290 = arith.cmpi eq, %284, %289 : vector<1x1024xi32>
    %c31_i32 = arith.constant 31 : i32
    %291 = vector.broadcast %c31_i32 : i32 to vector<1x1024xi32>
    %292 = arith.cmpi eq, %284, %291 : vector<1x1024xi32>
    %c0_139 = arith.constant 0 : index
    %c0_140 = arith.constant 0 : index
    %293 = vector.load %arg11[%c0_139, %c0_140] : memref<8x72xbf16, #tpu.memory_space<vmem>>, vector<8x72xbf16>
    %c992_i32_141 = arith.constant 992 : i32
    %294 = tpu.dynamic_rotate %262 by %c992_i32_141 dim 1 : vector<8x1024xf32>, i32 -> vector<8x1024xf32>
    %c32_i32_142 = arith.constant 32 : i32
    %295 = tpu.dynamic_rotate %262 by %c32_i32_142 dim 1 : vector<8x1024xf32>, i32 -> vector<8x1024xf32>
    %296 = vector.shape_cast %286 : vector<1x1024xi1> to vector<1x1024xi1>
    %297 = vector.broadcast %296 : vector<1x1024xi1> to vector<8x1024xi1>
    %298 = arith.select %297, %294, %295 : vector<8x1024xi1>, vector<8x1024xf32>
    %c32_i32_143 = arith.constant 32 : i32
    %299 = tpu.dynamic_rotate %262 by %c32_i32_143 dim 1 : vector<8x1024xf32>, i32 -> vector<8x1024xf32>
    %c992_i32_144 = arith.constant 992 : i32
    %300 = tpu.dynamic_rotate %262 by %c992_i32_144 dim 1 : vector<8x1024xf32>, i32 -> vector<8x1024xf32>
    %301 = vector.shape_cast %288 : vector<1x1024xi1> to vector<1x1024xi1>
    %302 = vector.broadcast %301 : vector<1x1024xi1> to vector<8x1024xi1>
    %303 = arith.select %302, %299, %300 : vector<8x1024xi1>, vector<8x1024xf32>
    %c1023_i32 = arith.constant 1023 : i32
    %304 = tpu.dynamic_rotate %298 by %c1023_i32 dim 1 : vector<8x1024xf32>, i32 -> vector<8x1024xf32>
    %c1_i32_145 = arith.constant 1 : i32
    %305 = tpu.dynamic_rotate %298 by %c1_i32_145 dim 1 : vector<8x1024xf32>, i32 -> vector<8x1024xf32>
    %306 = vector.shape_cast %290 : vector<1x1024xi1> to vector<1x1024xi1>
    %307 = vector.broadcast %306 : vector<1x1024xi1> to vector<8x1024xi1>
    %308 = arith.select %307, %304, %305 : vector<8x1024xi1>, vector<8x1024xf32>
    %c1_i32_146 = arith.constant 1 : i32
    %309 = tpu.dynamic_rotate %298 by %c1_i32_146 dim 1 : vector<8x1024xf32>, i32 -> vector<8x1024xf32>
    %c1023_i32_147 = arith.constant 1023 : i32
    %310 = tpu.dynamic_rotate %298 by %c1023_i32_147 dim 1 : vector<8x1024xf32>, i32 -> vector<8x1024xf32>
    %311 = vector.shape_cast %292 : vector<1x1024xi1> to vector<1x1024xi1>
    %312 = vector.broadcast %311 : vector<1x1024xi1> to vector<8x1024xi1>
    %313 = arith.select %312, %309, %310 : vector<8x1024xi1>, vector<8x1024xf32>
    %c1023_i32_148 = arith.constant 1023 : i32
    %314 = tpu.dynamic_rotate %262 by %c1023_i32_148 dim 1 : vector<8x1024xf32>, i32 -> vector<8x1024xf32>
    %c1_i32_149 = arith.constant 1 : i32
    %315 = tpu.dynamic_rotate %262 by %c1_i32_149 dim 1 : vector<8x1024xf32>, i32 -> vector<8x1024xf32>
    %316 = vector.shape_cast %290 : vector<1x1024xi1> to vector<1x1024xi1>
    %317 = vector.broadcast %316 : vector<1x1024xi1> to vector<8x1024xi1>
    %318 = arith.select %317, %314, %315 : vector<8x1024xi1>, vector<8x1024xf32>
    %c1_i32_150 = arith.constant 1 : i32
    %319 = tpu.dynamic_rotate %262 by %c1_i32_150 dim 1 : vector<8x1024xf32>, i32 -> vector<8x1024xf32>
    %c1023_i32_151 = arith.constant 1023 : i32
    %320 = tpu.dynamic_rotate %262 by %c1023_i32_151 dim 1 : vector<8x1024xf32>, i32 -> vector<8x1024xf32>
    %321 = vector.shape_cast %292 : vector<1x1024xi1> to vector<1x1024xi1>
    %322 = vector.broadcast %321 : vector<1x1024xi1> to vector<8x1024xi1>
    %323 = arith.select %322, %319, %320 : vector<8x1024xi1>, vector<8x1024xf32>
    %c1023_i32_152 = arith.constant 1023 : i32
    %324 = tpu.dynamic_rotate %303 by %c1023_i32_152 dim 1 : vector<8x1024xf32>, i32 -> vector<8x1024xf32>
    %c1_i32_153 = arith.constant 1 : i32
    %325 = tpu.dynamic_rotate %303 by %c1_i32_153 dim 1 : vector<8x1024xf32>, i32 -> vector<8x1024xf32>
    %326 = vector.shape_cast %290 : vector<1x1024xi1> to vector<1x1024xi1>
    %327 = vector.broadcast %326 : vector<1x1024xi1> to vector<8x1024xi1>
    %328 = arith.select %327, %324, %325 : vector<8x1024xi1>, vector<8x1024xf32>
    %c1_i32_154 = arith.constant 1 : i32
    %329 = tpu.dynamic_rotate %303 by %c1_i32_154 dim 1 : vector<8x1024xf32>, i32 -> vector<8x1024xf32>
    %c1023_i32_155 = arith.constant 1023 : i32
    %330 = tpu.dynamic_rotate %303 by %c1023_i32_155 dim 1 : vector<8x1024xf32>, i32 -> vector<8x1024xf32>
    %331 = vector.shape_cast %292 : vector<1x1024xi1> to vector<1x1024xi1>
    %332 = vector.broadcast %331 : vector<1x1024xi1> to vector<8x1024xi1>
    %333 = arith.select %332, %329, %330 : vector<8x1024xi1>, vector<8x1024xf32>
    %334 = tpu.concatenate %308, %298, %313, %318, %262, %323, %328, %303, %333 in 0 : vector<8x1024xf32>, vector<8x1024xf32>, vector<8x1024xf32>, vector<8x1024xf32>, vector<8x1024xf32>, vector<8x1024xf32>, vector<8x1024xf32>, vector<8x1024xf32>, vector<8x1024xf32> -> vector<72x1024xf32>
    %335 = arith.truncf %334 : vector<72x1024xf32> to vector<72x1024xbf16>
    %cst_156 = arith.constant dense<0.000000e+00> : vector<8x1024xf32>
    %336 = tpu.matmul %293, %335, %cst_156 {dimension_numbers = #tpu.dot_dimension_numbers<[1], [0], [0], [1], [0, 0, 1, 1], [], []>} : vector<8x72xbf16>, vector<72x1024xbf16>, vector<8x1024xf32> -> vector<8x1024xf32>
    %337 = vector.broadcast %263 : vector<8x1xf32> to vector<8x1024xf32>
    %338 = arith.addf %336, %337 : vector<8x1024xf32>
    %c0_157 = arith.constant 0 : index
    %c0_158 = arith.constant 0 : index
    %339 = vector.load %arg12[%c0_157, %c0_158] : memref<8x72xbf16, #tpu.memory_space<vmem>>, vector<8x72xbf16>
    %c992_i32_159 = arith.constant 992 : i32
    %340 = tpu.dynamic_rotate %338 by %c992_i32_159 dim 1 : vector<8x1024xf32>, i32 -> vector<8x1024xf32>
    %c32_i32_160 = arith.constant 32 : i32
    %341 = tpu.dynamic_rotate %338 by %c32_i32_160 dim 1 : vector<8x1024xf32>, i32 -> vector<8x1024xf32>
    %342 = vector.shape_cast %286 : vector<1x1024xi1> to vector<1x1024xi1>
    %343 = vector.broadcast %342 : vector<1x1024xi1> to vector<8x1024xi1>
    %344 = arith.select %343, %340, %341 : vector<8x1024xi1>, vector<8x1024xf32>
    %c32_i32_161 = arith.constant 32 : i32
    %345 = tpu.dynamic_rotate %338 by %c32_i32_161 dim 1 : vector<8x1024xf32>, i32 -> vector<8x1024xf32>
    %c992_i32_162 = arith.constant 992 : i32
    %346 = tpu.dynamic_rotate %338 by %c992_i32_162 dim 1 : vector<8x1024xf32>, i32 -> vector<8x1024xf32>
    %347 = vector.shape_cast %288 : vector<1x1024xi1> to vector<1x1024xi1>
    %348 = vector.broadcast %347 : vector<1x1024xi1> to vector<8x1024xi1>
    %349 = arith.select %348, %345, %346 : vector<8x1024xi1>, vector<8x1024xf32>
    %c1023_i32_163 = arith.constant 1023 : i32
    %350 = tpu.dynamic_rotate %344 by %c1023_i32_163 dim 1 : vector<8x1024xf32>, i32 -> vector<8x1024xf32>
    %c1_i32_164 = arith.constant 1 : i32
    %351 = tpu.dynamic_rotate %344 by %c1_i32_164 dim 1 : vector<8x1024xf32>, i32 -> vector<8x1024xf32>
    %352 = vector.shape_cast %290 : vector<1x1024xi1> to vector<1x1024xi1>
    %353 = vector.broadcast %352 : vector<1x1024xi1> to vector<8x1024xi1>
    %354 = arith.select %353, %350, %351 : vector<8x1024xi1>, vector<8x1024xf32>
    %c1_i32_165 = arith.constant 1 : i32
    %355 = tpu.dynamic_rotate %344 by %c1_i32_165 dim 1 : vector<8x1024xf32>, i32 -> vector<8x1024xf32>
    %c1023_i32_166 = arith.constant 1023 : i32
    %356 = tpu.dynamic_rotate %344 by %c1023_i32_166 dim 1 : vector<8x1024xf32>, i32 -> vector<8x1024xf32>
    %357 = vector.shape_cast %292 : vector<1x1024xi1> to vector<1x1024xi1>
    %358 = vector.broadcast %357 : vector<1x1024xi1> to vector<8x1024xi1>
    %359 = arith.select %358, %355, %356 : vector<8x1024xi1>, vector<8x1024xf32>
    %c1023_i32_167 = arith.constant 1023 : i32
    %360 = tpu.dynamic_rotate %338 by %c1023_i32_167 dim 1 : vector<8x1024xf32>, i32 -> vector<8x1024xf32>
    %c1_i32_168 = arith.constant 1 : i32
    %361 = tpu.dynamic_rotate %338 by %c1_i32_168 dim 1 : vector<8x1024xf32>, i32 -> vector<8x1024xf32>
    %362 = vector.shape_cast %290 : vector<1x1024xi1> to vector<1x1024xi1>
    %363 = vector.broadcast %362 : vector<1x1024xi1> to vector<8x1024xi1>
    %364 = arith.select %363, %360, %361 : vector<8x1024xi1>, vector<8x1024xf32>
    %c1_i32_169 = arith.constant 1 : i32
    %365 = tpu.dynamic_rotate %338 by %c1_i32_169 dim 1 : vector<8x1024xf32>, i32 -> vector<8x1024xf32>
    %c1023_i32_170 = arith.constant 1023 : i32
    %366 = tpu.dynamic_rotate %338 by %c1023_i32_170 dim 1 : vector<8x1024xf32>, i32 -> vector<8x1024xf32>
    %367 = vector.shape_cast %292 : vector<1x1024xi1> to vector<1x1024xi1>
    %368 = vector.broadcast %367 : vector<1x1024xi1> to vector<8x1024xi1>
    %369 = arith.select %368, %365, %366 : vector<8x1024xi1>, vector<8x1024xf32>
    %c1023_i32_171 = arith.constant 1023 : i32
    %370 = tpu.dynamic_rotate %349 by %c1023_i32_171 dim 1 : vector<8x1024xf32>, i32 -> vector<8x1024xf32>
    %c1_i32_172 = arith.constant 1 : i32
    %371 = tpu.dynamic_rotate %349 by %c1_i32_172 dim 1 : vector<8x1024xf32>, i32 -> vector<8x1024xf32>
    %372 = vector.shape_cast %290 : vector<1x1024xi1> to vector<1x1024xi1>
    %373 = vector.broadcast %372 : vector<1x1024xi1> to vector<8x1024xi1>
    %374 = arith.select %373, %370, %371 : vector<8x1024xi1>, vector<8x1024xf32>
    %c1_i32_173 = arith.constant 1 : i32
    %375 = tpu.dynamic_rotate %349 by %c1_i32_173 dim 1 : vector<8x1024xf32>, i32 -> vector<8x1024xf32>
    %c1023_i32_174 = arith.constant 1023 : i32
    %376 = tpu.dynamic_rotate %349 by %c1023_i32_174 dim 1 : vector<8x1024xf32>, i32 -> vector<8x1024xf32>
    %377 = vector.shape_cast %292 : vector<1x1024xi1> to vector<1x1024xi1>
    %378 = vector.broadcast %377 : vector<1x1024xi1> to vector<8x1024xi1>
    %379 = arith.select %378, %375, %376 : vector<8x1024xi1>, vector<8x1024xf32>
    %380 = tpu.concatenate %354, %344, %359, %364, %338, %369, %374, %349, %379 in 0 : vector<8x1024xf32>, vector<8x1024xf32>, vector<8x1024xf32>, vector<8x1024xf32>, vector<8x1024xf32>, vector<8x1024xf32>, vector<8x1024xf32>, vector<8x1024xf32>, vector<8x1024xf32> -> vector<72x1024xf32>
    %381 = arith.truncf %380 : vector<72x1024xf32> to vector<72x1024xbf16>
    %cst_175 = arith.constant dense<0.000000e+00> : vector<8x1024xf32>
    %382 = tpu.matmul %339, %381, %cst_175 {dimension_numbers = #tpu.dot_dimension_numbers<[1], [0], [0], [1], [0, 0, 1, 1], [], []>} : vector<8x72xbf16>, vector<72x1024xbf16>, vector<8x1024xf32> -> vector<8x1024xf32>
    %383 = vector.broadcast %264 : vector<8x1xf32> to vector<8x1024xf32>
    %384 = arith.addf %382, %383 : vector<8x1024xf32>
    %cst_176 = arith.constant dense<0.000000e+00> : vector<8xf32>
    %385 = vector.multi_reduction <add>, %384, %cst_176 [1] : vector<8x1024xf32> to vector<8xf32>
    %386 = vector.shape_cast %385 : vector<8xf32> to vector<8x1xf32>
    %cst_177 = arith.constant 1.024000e+03 : f32
    %387 = vector.broadcast %cst_177 : f32 to vector<8x1xf32>
    %388 = arith.divf %386, %387 : vector<8x1xf32>
    %389 = arith.mulf %388, %265 : vector<8x1xf32>
    %cst_178 = arith.constant dense<0.000000e+00> : vector<1xf32>
    %390 = vector.multi_reduction <add>, %389, %cst_178 [0] : vector<8x1xf32> to vector<1xf32>
    %391 = vector.shape_cast %390 : vector<1xf32> to vector<1x1xf32>
    %392 = arith.addf %391, %266 : vector<1x1xf32>
    %c0_179 = arith.constant 0 : index
    %c0_180 = arith.constant 0 : index
    %c0_181 = arith.constant 0 : index
    %393 = vector.load %arg13[%c0_179, %c0_180, %c0_181] : memref<1x1x1xf32, #tpu.memory_space<vmem>>, vector<1x1x1xf32>
    %394 = vector.shape_cast %393 : vector<1x1x1xf32> to vector<1x1xf32>
    %395 = vector.shape_cast %392 : vector<1x1xf32> to vector<1x1x1xf32>
    tpu.vector_store %arg13[%c0_179, %c0_180, %c0_181], %395 {strides = array<i32>} : memref<1x1x1xf32, #tpu.memory_space<vmem>>, vector<1x1x1xf32>,
    %c0_182 = arith.constant 0 : index
    %c0_183 = arith.constant 0 : index
    %c0_184 = arith.constant 0 : index
    %396 = vector.load %arg2[%c0_182, %c0_183, %c0_184] : memref<1x1x32xf32, #tpu.memory_space<vmem>>, vector<1x1x32xf32>
    %397 = vector.shape_cast %396 : vector<1x1x32xf32> to vector<1x32xf32>
    %c0_185 = arith.constant 0 : index
    %c0_186 = arith.constant 0 : index
    %398 = vector.load %arg4[%c0_185, %c0_186] : memref<1x32xf32, #tpu.memory_space<vmem>>, vector<1x32xf32>
    %399 = arith.mulf %397, %398 : vector<1x32xf32>
    %cst_187 = arith.constant dense<0.000000e+00> : vector<1xf32>
    %400 = vector.multi_reduction <add>, %399, %cst_187 [1] : vector<1x32xf32> to vector<1xf32>
    %401 = vector.shape_cast %400 : vector<1xf32> to vector<1x1xf32>
    %402 = arith.addf %401, %267 : vector<1x1xf32>
    %c0_188 = arith.constant 0 : index
    %c0_189 = arith.constant 0 : index
    %c0_190 = arith.constant 0 : index
    %403 = vector.load %arg14[%c0_188, %c0_189, %c0_190] : memref<1x1x1xf32, #tpu.memory_space<vmem>>, vector<1x1x1xf32>
    %404 = vector.shape_cast %403 : vector<1x1x1xf32> to vector<1x1xf32>
    %405 = vector.shape_cast %402 : vector<1x1xf32> to vector<1x1x1xf32>
    tpu.vector_store %arg14[%c0_188, %c0_189, %c0_190], %405 {strides = array<i32>} : memref<1x1x1xf32, #tpu.memory_space<vmem>>, vector<1x1x1xf32>,
    return
  }
  func.func @transform_0(%arg0: i32) -> (i32, i32, i32) {
    %c0_i32 = arith.constant 0 : i32
    %c0_i32_0 = arith.constant 0 : i32
    %c0_i32_1 = arith.constant 0 : i32
    return %arg0, %c0_i32, %c0_i32_0 : i32, i32, i32
  }
  func.func @transform_1(%arg0: i32) -> (i32, i32, i32) {
    %c0_i32 = arith.constant 0 : i32
    %c0_i32_0 = arith.constant 0 : i32
    %c0_i32_1 = arith.constant 0 : i32
    return %arg0, %c0_i32, %c0_i32_0 : i32, i32, i32
  }
  func.func @transform_2(%arg0: i32) -> (i32, i32) {
    %c0_i32 = arith.constant 0 : i32
    %c0_i32_0 = arith.constant 0 : i32
    %c0_i32_1 = arith.constant 0 : i32
    return %c0_i32, %c0_i32_0 : i32, i32
  }
  func.func @transform_3(%arg0: i32) -> (i32, i32) {
    %c0_i32 = arith.constant 0 : i32
    %c0_i32_0 = arith.constant 0 : i32
    %c0_i32_1 = arith.constant 0 : i32
    return %c0_i32, %c0_i32_0 : i32, i32
  }
  func.func @transform_4(%arg0: i32) -> (i32, i32) {
    %c0_i32 = arith.constant 0 : i32
    %c0_i32_0 = arith.constant 0 : i32
    %c0_i32_1 = arith.constant 0 : i32
    return %c0_i32, %c0_i32_0 : i32, i32
  }
  func.func @transform_5(%arg0: i32) -> (i32, i32) {
    %c0_i32 = arith.constant 0 : i32
    %c0_i32_0 = arith.constant 0 : i32
    %c0_i32_1 = arith.constant 0 : i32
    return %c0_i32, %c0_i32_0 : i32, i32
  }
  func.func @transform_6(%arg0: i32) -> (i32, i32) {
    %c0_i32 = arith.constant 0 : i32
    %c0_i32_0 = arith.constant 0 : i32
    %c0_i32_1 = arith.constant 0 : i32
    return %c0_i32, %c0_i32_0 : i32, i32
  }
  func.func @transform_7(%arg0: i32) -> (i32, i32) {
    %c0_i32 = arith.constant 0 : i32
    %c0_i32_0 = arith.constant 0 : i32
    %c0_i32_1 = arith.constant 0 : i32
    return %c0_i32, %c0_i32_0 : i32, i32
  }
  func.func @transform_8(%arg0: i32) -> (i32, i32) {
    %c0_i32 = arith.constant 0 : i32
    %c0_i32_0 = arith.constant 0 : i32
    %c0_i32_1 = arith.constant 0 : i32
    return %c0_i32, %c0_i32_0 : i32, i32
  }
  func.func @transform_9(%arg0: i32) -> (i32, i32) {
    %c0_i32 = arith.constant 0 : i32
    %c0_i32_0 = arith.constant 0 : i32
    %c0_i32_1 = arith.constant 0 : i32
    return %c0_i32, %c0_i32_0 : i32, i32
  }
  func.func @transform_10(%arg0: i32) -> (i32, i32) {
    %c0_i32 = arith.constant 0 : i32
    %c0_i32_0 = arith.constant 0 : i32
    %c0_i32_1 = arith.constant 0 : i32
    return %c0_i32, %c0_i32_0 : i32, i32
  }
  func.func @transform_11(%arg0: i32) -> (i32, i32) {
    %c0_i32 = arith.constant 0 : i32
    %c0_i32_0 = arith.constant 0 : i32
    %c0_i32_1 = arith.constant 0 : i32
    return %c0_i32, %c0_i32_0 : i32, i32
  }
  func.func @transform_12(%arg0: i32) -> (i32, i32, i32) {
    %c0_i32 = arith.constant 0 : i32
    %c0_i32_0 = arith.constant 0 : i32
    %c0_i32_1 = arith.constant 0 : i32
    return %arg0, %c0_i32, %c0_i32_0 : i32, i32, i32
  }
  func.func @transform_13(%arg0: i32) -> (i32, i32, i32) {
    %c0_i32 = arith.constant 0 : i32
    %c0_i32_0 = arith.constant 0 : i32
    %c0_i32_1 = arith.constant 0 : i32
    return %arg0, %c0_i32, %c0_i32_0 : i32, i32, i32
  }
}

</mosaic_0001>

<llo_original>
// kernel: bn_lin_deep_cca_forward.1
$region0: #{bn_lin_deep_cca_forward.1}
  #allocation0 [shape = 'u32[]', space=smem, size = 0x4, offset = 0x4, fixed_abs, tag = 'smem constant byte address 0x4 - core index']
  #allocation1 [shape = 'u32[144,128]{1,0:T(1,128)}', space=vmem, size = 0x12000, scoped, tag = 'internal scratch']
  #allocation2 [shape = 'f32[8,256]{1,0:T(8,128)}', space=vmem, size = 0x2000, scoped, tag = 'scratch operand']
  #allocation3 [shape = 'f32[8,1024]{1,0:T(8,128)}', space=vmem, size = 0x8000, scoped, tag = 'scratch operand']
  %s0 = inlined_call_operand.vmem [shape: f32[2,4,64], index: 0, kind: input, shape index: {}]
  %s1 = inlined_call_operand.vmem [shape: f32[2,1,32], index: 1, kind: input, shape index: {}]
  %s2 = inlined_call_operand.vmem [shape: f32[8,9], index: 2, kind: input, shape index: {}]
  %s3 = inlined_call_operand.vmem [shape: f32[1,32], index: 3, kind: input, shape index: {}]
  %s4 = inlined_call_operand.vmem [shape: bf16[32,4], index: 4, kind: input, shape index: {}]
  %s5 = inlined_call_operand.vmem [shape: bf16[128,128], index: 5, kind: input, shape index: {}]
  %s6 = inlined_call_operand.vmem [shape: bf16[8,72], index: 6, kind: input, shape index: {}]
  %s7 = inlined_call_operand.vmem [shape: bf16[8,72], index: 7, kind: input, shape index: {}]
  %s8 = inlined_call_operand.vmem [shape: bf16[32,8], index: 8, kind: input, shape index: {}]
  %s9 = inlined_call_operand.vmem [shape: bf16[512,512], index: 9, kind: input, shape index: {}]
  %s10 = inlined_call_operand.vmem [shape: bf16[8,72], index: 10, kind: input, shape index: {}]
  %s11 = inlined_call_operand.vmem [shape: bf16[8,72], index: 11, kind: input, shape index: {}]
  %s12 = inlined_call_operand.vmem [shape: f32[2,1,1], index: 12, kind: output, shape index: {0}]
  %s13 = inlined_call_operand.vmem [shape: f32[2,1,1], index: 13, kind: output, shape index: {1}]
  %14 = xla_tuple %s12, %s13
  %s15 = sld [smem:[#allocation0]]
  $region89: #{bn_lin_deep_cca_forward.1} parent=0
    _
  %s17 = ssub.s32 1, %s15
  %s18 = scalar_select 0, %s17, %s15
  loop: start=0, step=1, limit=4
  $region2: #{bn_lin_deep_cca_forward.1} parent=0 // loop_pre_header
    _
  $region3: #{bn_lin_deep_cca_forward.1} parent=0 // loop_header
    %s20 = sphi 0, %s24
    %p21 = scmp.ge.s32.totalorder %s20, 4
    %s30 = sphi 0, %s32
    %s33 = sphi 0, %s30
    %s34 = sphi 0, %s33
    %s50 = sphi 0, %s34
    %s56 = sphi 0, %s58
    %s59 = sphi 0, %s56
    %s60 = sphi 0, %s59
    %s76 = sphi 0, %s60
    %s80 = sphi 0, %s80
    %s82 = sphi 0, %s80
    %s83 = sphi 0, %s82
    %s97 = sphi 0, %s83
    %s101 = sphi 0, %s101
    %s103 = sphi 0, %s101
    %s104 = sphi 0, %s103
    %s118 = sphi 0, %s104
    %s122 = sphi 0, %s122
    %s124 = sphi 0, %s122
    %s125 = sphi 0, %s124
    %s139 = sphi 0, %s125
    %s143 = sphi 0, %s143
    %s145 = sphi 0, %s143
    %s146 = sphi 0, %s145
    %s160 = sphi 0, %s146
    %s164 = sphi 0, %s164
    %s166 = sphi 0, %s164
    %s167 = sphi 0, %s166
    %s181 = sphi 0, %s167
    %s185 = sphi 0, %s185
    %s187 = sphi 0, %s185
    %s188 = sphi 0, %s187
    %s202 = sphi 0, %s188
    %s206 = sphi 0, %s206
    %s208 = sphi 0, %s206
    %s209 = sphi 0, %s208
    %s223 = sphi 0, %s209
    %s227 = sphi 0, %s227
    %s229 = sphi 0, %s227
    %s230 = sphi 0, %s229
    %s244 = sphi 0, %s230
    %s248 = sphi 0, %s248
    %s250 = sphi 0, %s248
    %s251 = sphi 0, %s250
    %s265 = sphi 0, %s251
    %s269 = sphi 0, %s269
    %s271 = sphi 0, %s269
    %s272 = sphi 0, %s271
    %s286 = sphi 0, %s272
    %s292 = sphi 0, %s294
    %s295 = sphi 0, %s292
    %s296 = sphi 0, %s295
    %s312 = sphi 0, %s296
    %s318 = sphi 0, %s320
    %s321 = sphi 0, %s318
    %s322 = sphi 0, %s321
    %s338 = sphi 0, %s322
  $region4: #{bn_lin_deep_cca_forward.1} parent=0 // loop_header_branch
    %23 = sbr.rel (%p21) target = $region8
  $region5: #{bn_lin_deep_cca_forward.1} parent=0 // loop_body
    %s25 = ssub.s32 %s20, 1
    %s26 = ssub.s32 %s20, 2
    %s27 = sadd.s32 %s20, 1
    %s28 = ssub.s32 %s20, %s27
    %p29 = scmp.eq.s32.totalorder %s28, 0
    %s31 = sadd.s32 %s30, 1
    %s32 = scalar_select %p29, %s30, %s31
    %p35 = pneg %p29
    %p36 = scmp.eq.s32.totalorder %s20, 1
    %p37 = por %p35, %p36
    %p38 = scmp.ne.s32.totalorder %s30, %s33
    %p39 = scmp.eq.s32.totalorder %s20, 0
    %p40 = por %p38, %p39
    %p41 = scmp.ne.s32.totalorder %s30, %s33
    %p42 = scmp.eq.s32.totalorder %s25, 1
    %p43 = por %p41, %p42
    %p44 = scmp.ne.s32.totalorder %s33, %s34
    %p45 = scmp.eq.s32.totalorder %s25, 0
    %p46 = por %p44, %p45
    %p47 = scmp.ne.s32.totalorder %s33, %s34
    %p48 = scmp.eq.s32.totalorder %s26, 1
    %p49 = por %p47, %p48
    %p51 = scmp.ne.s32.totalorder %s34, %s50
    %p52 = scmp.eq.s32.totalorder %s26, 0
    %p53 = por %p51, %p52
    %s54 = ssub.s32 %s20, %s27
    %p55 = scmp.eq.s32.totalorder %s54, 0
    %s57 = sadd.s32 %s56, 1
    %s58 = scalar_select %p55, %s56, %s57
    %p61 = pneg %p55
    %p62 = scmp.eq.s32.totalorder %s20, 1
    %p63 = por %p61, %p62
    %p64 = scmp.ne.s32.totalorder %s56, %s59
    %p65 = scmp.eq.s32.totalorder %s20, 0
    %p66 = por %p64, %p65
    %p67 = scmp.ne.s32.totalorder %s56, %s59
    %p68 = scmp.eq.s32.totalorder %s25, 1
    %p69 = por %p67, %p68
    %p70 = scmp.ne.s32.totalorder %s59, %s60
    %p71 = scmp.eq.s32.totalorder %s25, 0
    %p72 = por %p70, %p71
    %p73 = scmp.ne.s32.totalorder %s59, %s60
    %p74 = scmp.eq.s32.totalorder %s26, 1
    %p75 = por %p73, %p74
    %p77 = scmp.ne.s32.totalorder %s60, %s76
    %p78 = scmp.eq.s32.totalorder %s26, 0
    %p79 = por %p77, %p78
    %s81 = sadd.s32 %s80, 1
    %p84 = scmp.eq.s32.totalorder %s20, 1
    %p85 = scmp.ne.s32.totalorder %s80, %s82
    %p86 = scmp.eq.s32.totalorder %s20, 0
    %p87 = por %p85, %p86
    %p88 = scmp.ne.s32.totalorder %s80, %s82
    %p89 = scmp.eq.s32.totalorder %s25, 1
    %p90 = por %p88, %p89
    %p91 = scmp.ne.s32.totalorder %s82, %s83
    %p92 = scmp.eq.s32.totalorder %s25, 0
    %p93 = por %p91, %p92
    %p94 = scmp.ne.s32.totalorder %s82, %s83
    %p95 = scmp.eq.s32.totalorder %s26, 1
    %p96 = por %p94, %p95
    %p98 = scmp.ne.s32.totalorder %s83, %s97
    %p99 = scmp.eq.s32.totalorder %s26, 0
    %p100 = por %p98, %p99
    %s102 = sadd.s32 %s101, 1
    %p105 = scmp.eq.s32.totalorder %s20, 1
    %p106 = scmp.ne.s32.totalorder %s101, %s103
    %p107 = scmp.eq.s32.totalorder %s20, 0
    %p108 = por %p106, %p107
    %p109 = scmp.ne.s32.totalorder %s101, %s103
    %p110 = scmp.eq.s32.totalorder %s25, 1
    %p111 = por %p109, %p110
    %p112 = scmp.ne.s32.totalorder %s103, %s104
    %p113 = scmp.eq.s32.totalorder %s25, 0
    %p114 = por %p112, %p113
    %p115 = scmp.ne.s32.totalorder %s103, %s104
    %p116 = scmp.eq.s32.totalorder %s26, 1
    %p117 = por %p115, %p116
    %p119 = scmp.ne.s32.totalorder %s104, %s118
    %p120 = scmp.eq.s32.totalorder %s26, 0
    %p121 = por %p119, %p120
    %s123 = sadd.s32 %s122, 1
    %p126 = scmp.eq.s32.totalorder %s20, 1
    %p127 = scmp.ne.s32.totalorder %s122, %s124
    %p128 = scmp.eq.s32.totalorder %s20, 0
    %p129 = por %p127, %p128
    %p130 = scmp.ne.s32.totalorder %s122, %s124
    %p131 = scmp.eq.s32.totalorder %s25, 1
    %p132 = por %p130, %p131
    %p133 = scmp.ne.s32.totalorder %s124, %s125
    %p134 = scmp.eq.s32.totalorder %s25, 0
    %p135 = por %p133, %p134
    %p136 = scmp.ne.s32.totalorder %s124, %s125
    %p137 = scmp.eq.s32.totalorder %s26, 1
    %p138 = por %p136, %p137
    %p140 = scmp.ne.s32.totalorder %s125, %s139
    %p141 = scmp.eq.s32.totalorder %s26, 0
    %p142 = por %p140, %p141
    %s144 = sadd.s32 %s143, 1
    %p147 = scmp.eq.s32.totalorder %s20, 1
    %p148 = scmp.ne.s32.totalorder %s143, %s145
    %p149 = scmp.eq.s32.totalorder %s20, 0
    %p150 = por %p148, %p149
    %p151 = scmp.ne.s32.totalorder %s143, %s145
    %p152 = scmp.eq.s32.totalorder %s25, 1
    %p153 = por %p151, %p152
    %p154 = scmp.ne.s32.totalorder %s145, %s146
    %p155 = scmp.eq.s32.totalorder %s25, 0
    %p156 = por %p154, %p155
    %p157 = scmp.ne.s32.totalorder %s145, %s146
    %p158 = scmp.eq.s32.totalorder %s26, 1
    %p159 = por %p157, %p158
    %p161 = scmp.ne.s32.totalorder %s146, %s160
    %p162 = scmp.eq.s32.totalorder %s26, 0
    %p163 = por %p161, %p162
    %s165 = sadd.s32 %s164, 1
    %p168 = scmp.eq.s32.totalorder %s20, 1
    %p169 = scmp.ne.s32.totalorder %s164, %s166
    %p170 = scmp.eq.s32.totalorder %s20, 0
    %p171 = por %p169, %p170
    %p172 = scmp.ne.s32.totalorder %s164, %s166
    %p173 = scmp.eq.s32.totalorder %s25, 1
    %p174 = por %p172, %p173
    %p175 = scmp.ne.s32.totalorder %s166, %s167
    %p176 = scmp.eq.s32.totalorder %s25, 0
    %p177 = por %p175, %p176
    %p178 = scmp.ne.s32.totalorder %s166, %s167
    %p179 = scmp.eq.s32.totalorder %s26, 1
    %p180 = por %p178, %p179
    %p182 = scmp.ne.s32.totalorder %s167, %s181
    %p183 = scmp.eq.s32.totalorder %s26, 0
    %p184 = por %p182, %p183
    %s186 = sadd.s32 %s185, 1
    %p189 = scmp.eq.s32.totalorder %s20, 1
    %p190 = scmp.ne.s32.totalorder %s185, %s187
    %p191 = scmp.eq.s32.totalorder %s20, 0
    %p192 = por %p190, %p191
    %p193 = scmp.ne.s32.totalorder %s185, %s187
    %p194 = scmp.eq.s32.totalorder %s25, 1
    %p195 = por %p193, %p194
    %p196 = scmp.ne.s32.totalorder %s187, %s188
    %p197 = scmp.eq.s32.totalorder %s25, 0
    %p198 = por %p196, %p197
    %p199 = scmp.ne.s32.totalorder %s187, %s188
    %p200 = scmp.eq.s32.totalorder %s26, 1
    %p201 = por %p199, %p200
    %p203 = scmp.ne.s32.totalorder %s188, %s202
    %p204 = scmp.eq.s32.totalorder %s26, 0
    %p205 = por %p203, %p204
    %s207 = sadd.s32 %s206, 1
    %p210 = scmp.eq.s32.totalorder %s20, 1
    %p211 = scmp.ne.s32.totalorder %s206, %s208
    %p212 = scmp.eq.s32.totalorder %s20, 0
    %p213 = por %p211, %p212
    %p214 = scmp.ne.s32.totalorder %s206, %s208
    %p215 = scmp.eq.s32.totalorder %s25, 1
    %p216 = por %p214, %p215
    %p217 = scmp.ne.s32.totalorder %s208, %s209
    %p218 = scmp.eq.s32.totalorder %s25, 0
    %p219 = por %p217, %p218
    %p220 = scmp.ne.s32.totalorder %s208, %s209
    %p221 = scmp.eq.s32.totalorder %s26, 1
    %p222 = por %p220, %p221
    %p224 = scmp.ne.s32.totalorder %s209, %s223
    %p225 = scmp.eq.s32.totalorder %s26, 0
    %p226 = por %p224, %p225
    %s228 = sadd.s32 %s227, 1
    %p231 = scmp.eq.s32.totalorder %s20, 1
    %p232 = scmp.ne.s32.totalorder %s227, %s229
    %p233 = scmp.eq.s32.totalorder %s20, 0
    %p234 = por %p232, %p233
    %p235 = scmp.ne.s32.totalorder %s227, %s229
    %p236 = scmp.eq.s32.totalorder %s25, 1
    %p237 = por %p235, %p236
    %p238 = scmp.ne.s32.totalorder %s229, %s230
    %p239 = scmp.eq.s32.totalorder %s25, 0
    %p240 = por %p238, %p239
    %p241 = scmp.ne.s32.totalorder %s229, %s230
    %p242 = scmp.eq.s32.totalorder %s26, 1
    %p243 = por %p241, %p242
    %p245 = scmp.ne.s32.totalorder %s230, %s244
    %p246 = scmp.eq.s32.totalorder %s26, 0
    %p247 = por %p245, %p246
    %s249 = sadd.s32 %s248, 1
    %p252 = scmp.eq.s32.totalorder %s20, 1
    %p253 = scmp.ne.s32.totalorder %s248, %s250
    %p254 = scmp.eq.s32.totalorder %s20, 0
    %p255 = por %p253, %p254
    %p256 = scmp.ne.s32.totalorder %s248, %s250
    %p257 = scmp.eq.s32.totalorder %s25, 1
    %p258 = por %p256, %p257
    %p259 = scmp.ne.s32.totalorder %s250, %s251
    %p260 = scmp.eq.s32.totalorder %s25, 0
    %p261 = por %p259, %p260
    %p262 = scmp.ne.s32.totalorder %s250, %s251
    %p263 = scmp.eq.s32.totalorder %s26, 1
    %p264 = por %p262, %p263
    %p266 = scmp.ne.s32.totalorder %s251, %s265
    %p267 = scmp.eq.s32.totalorder %s26, 0
    %p268 = por %p266, %p267
    %s270 = sadd.s32 %s269, 1
    %p273 = scmp.eq.s32.totalorder %s20, 1
    %p274 = scmp.ne.s32.totalorder %s269, %s271
    %p275 = scmp.eq.s32.totalorder %s20, 0
    %p276 = por %p274, %p275
    %p277 = scmp.ne.s32.totalorder %s269, %s271
    %p278 = scmp.eq.s32.totalorder %s25, 1
    %p279 = por %p277, %p278
    %p280 = scmp.ne.s32.totalorder %s271, %s272
    %p281 = scmp.eq.s32.totalorder %s25, 0
    %p282 = por %p280, %p281
    %p283 = scmp.ne.s32.totalorder %s271, %s272
    %p284 = scmp.eq.s32.totalorder %s26, 1
    %p285 = por %p283, %p284
    %p287 = scmp.ne.s32.totalorder %s272, %s286
    %p288 = scmp.eq.s32.totalorder %s26, 0
    %p289 = por %p287, %p288
    %s290 = ssub.s32 %s20, %s27
    %p291 = scmp.eq.s32.totalorder %s290, 0
    %s293 = sadd.s32 %s292, 1
    %s294 = scalar_select %p291, %s292, %s293
    %p297 = pneg %p291
    %p298 = scmp.eq.s32.totalorder %s20, 1
    %p299 = por %p297, %p298
    %p300 = scmp.ne.s32.totalorder %s292, %s295
    %p301 = scmp.eq.s32.totalorder %s20, 0
    %p302 = por %p300, %p301
    %p303 = scmp.ne.s32.totalorder %s292, %s295
    %p304 = scmp.eq.s32.totalorder %s25, 1
    %p305 = por %p303, %p304
    %p306 = scmp.ne.s32.totalorder %s295, %s296
    %p307 = scmp.eq.s32.totalorder %s25, 0
    %p308 = por %p306, %p307
    %p309 = scmp.ne.s32.totalorder %s295, %s296
    %p310 = scmp.eq.s32.totalorder %s26, 1
    %p311 = por %p309, %p310
    %p313 = scmp.ne.s32.totalorder %s296, %s312
    %p314 = scmp.eq.s32.totalorder %s26, 0
    %p315 = por %p313, %p314
    %s316 = ssub.s32 %s20, %s27
    %p317 = scmp.eq.s32.totalorder %s316, 0
    %s319 = sadd.s32 %s318, 1
    %s320 = scalar_select %p317, %s318, %s319
    %p323 = pneg %p317
    %p324 = scmp.eq.s32.totalorder %s20, 1
    %p325 = por %p323, %p324
    %p326 = scmp.ne.s32.totalorder %s318, %s321
    %p327 = scmp.eq.s32.totalorder %s20, 0
    %p328 = por %p326, %p327
    %p329 = scmp.ne.s32.totalorder %s318, %s321
    %p330 = scmp.eq.s32.totalorder %s25, 1
    %p331 = por %p329, %p330
    %p332 = scmp.ne.s32.totalorder %s321, %s322
    %p333 = scmp.eq.s32.totalorder %s25, 0
    %p334 = por %p332, %p333
    %p335 = scmp.ne.s32.totalorder %s321, %s322
    %p336 = scmp.eq.s32.totalorder %s26, 1
    %p337 = por %p335, %p336
    %p339 = scmp.ne.s32.totalorder %s322, %s338
    %p340 = scmp.eq.s32.totalorder %s26, 0
    %p341 = por %p339, %p340
    %p342 = scmp.le.s32.totalorder 1, %s20
    %p343 = scmp.lt.s32.totalorder %s20, 3
    %p344 = pnand %p342, %p343
    %p345 = pneg %p344
    // Predicated region
    $region9: #{bn_lin_deep_cca_forward.1} parent=5 // pred_check
      _
    $region10: #{bn_lin_deep_cca_forward.1} parent=5 // pred_check_branch
      %347 = sbr.rel (%p344) target = $region12
    $region11: #{bn_lin_deep_cca_forward.1} parent=5 // pred_region
      %s348 = ssub.s32 %s20, 1
      // Predicated region
      $region13: #{bn_lin_deep_cca_forward.1} parent=11 // pred_check
        %p349 = pneg %p93
      $region14: #{bn_lin_deep_cca_forward.1} parent=11 // pred_check_branch
        %351 = sbr.rel (%p349) target = $region16
      $region15: #{bn_lin_deep_cca_forward.1} parent=11 // pred_region
        _
      $region16: #{bn_lin_deep_cca_forward.1} parent=11 // pred_fallthru
        _
      // Predicated region
      $region17: #{bn_lin_deep_cca_forward.1} parent=11 // pred_check
        %p352 = pneg %p114
      $region18: #{bn_lin_deep_cca_forward.1} parent=11 // pred_check_branch
        %354 = sbr.rel (%p352) target = $region20
      $region19: #{bn_lin_deep_cca_forward.1} parent=11 // pred_region
        _
      $region20: #{bn_lin_deep_cca_forward.1} parent=11 // pred_fallthru
        _
      // Predicated region
      $region21: #{bn_lin_deep_cca_forward.1} parent=11 // pred_check
        %p355 = pneg %p135
      $region22: #{bn_lin_deep_cca_forward.1} parent=11 // pred_check_branch
        %357 = sbr.rel (%p355) target = $region24
      $region23: #{bn_lin_deep_cca_forward.1} parent=11 // pred_region
        _
      $region24: #{bn_lin_deep_cca_forward.1} parent=11 // pred_fallthru
        _
      // Predicated region
      $region25: #{bn_lin_deep_cca_forward.1} parent=11 // pred_check
        %p358 = pneg %p156
      $region26: #{bn_lin_deep_cca_forward.1} parent=11 // pred_check_branch
        %360 = sbr.rel (%p358) target = $region28
      $region27: #{bn_lin_deep_cca_forward.1} parent=11 // pred_region
        _
      $region28: #{bn_lin_deep_cca_forward.1} parent=11 // pred_fallthru
        _
      // Predicated region
      $region29: #{bn_lin_deep_cca_forward.1} parent=11 // pred_check
        %p361 = pneg %p177
      $region30: #{bn_lin_deep_cca_forward.1} parent=11 // pred_check_branch
        %363 = sbr.rel (%p361) target = $region32
      $region31: #{bn_lin_deep_cca_forward.1} parent=11 // pred_region
        _
      $region32: #{bn_lin_deep_cca_forward.1} parent=11 // pred_fallthru
        _
      // Predicated region
      $region33: #{bn_lin_deep_cca_forward.1} parent=11 // pred_check
        %p364 = pneg %p198
      $region34: #{bn_lin_deep_cca_forward.1} parent=11 // pred_check_branch
        %366 = sbr.rel (%p364) target = $region36
      $region35: #{bn_lin_deep_cca_forward.1} parent=11 // pred_region
        _
      $region36: #{bn_lin_deep_cca_forward.1} parent=11 // pred_fallthru
        _
      // Predicated region
      $region37: #{bn_lin_deep_cca_forward.1} parent=11 // pred_check
        %p367 = pneg %p219
      $region38: #{bn_lin_deep_cca_forward.1} parent=11 // pred_check_branch
        %369 = sbr.rel (%p367) target = $region40
      $region39: #{bn_lin_deep_cca_forward.1} parent=11 // pred_region
        _
      $region40: #{bn_lin_deep_cca_forward.1} parent=11 // pred_fallthru
        _
      // Predicated region
      $region41: #{bn_lin_deep_cca_forward.1} parent=11 // pred_check
        %p370 = pneg %p240
      $region42: #{bn_lin_deep_cca_forward.1} parent=11 // pred_check_branch
        %372 = sbr.rel (%p370) target = $region44
      $region43: #{bn_lin_deep_cca_forward.1} parent=11 // pred_region
        _
      $region44: #{bn_lin_deep_cca_forward.1} parent=11 // pred_fallthru
        _
      // Predicated region
      $region45: #{bn_lin_deep_cca_forward.1} parent=11 // pred_check
        %p373 = pneg %p261
      $region46: #{bn_lin_deep_cca_forward.1} parent=11 // pred_check_branch
        %375 = sbr.rel (%p373) target = $region48
      $region47: #{bn_lin_deep_cca_forward.1} parent=11 // pred_region
        _
      $region48: #{bn_lin_deep_cca_forward.1} parent=11 // pred_fallthru
        _
      // Predicated region
      $region49: #{bn_lin_deep_cca_forward.1} parent=11 // pred_check
        %p376 = pneg %p282
      $region50: #{bn_lin_deep_cca_forward.1} parent=11 // pred_check_branch
        %378 = sbr.rel (%p376) target = $region52
      $region51: #{bn_lin_deep_cca_forward.1} parent=11 // pred_region
        _
      $region52: #{bn_lin_deep_cca_forward.1} parent=11 // pred_fallthru
        _
    $region12: #{bn_lin_deep_cca_forward.1} parent=5 // pred_fallthru
      _
    %p379 = scmp.lt.s32.totalorder %s20, 2
    // Predicated region
    $region53: #{bn_lin_deep_cca_forward.1} parent=5 // pred_check
      %p380 = pneg %p379
    $region54: #{bn_lin_deep_cca_forward.1} parent=5 // pred_check_branch
      %382 = sbr.rel (%p380) target = $region56
    $region55: #{bn_lin_deep_cca_forward.1} parent=5 // pred_region
      // Predicated region
      $region57: #{bn_lin_deep_cca_forward.1} parent=55 // pred_check
        %p383 = pneg %p40
      $region58: #{bn_lin_deep_cca_forward.1} parent=55 // pred_check_branch
        %385 = sbr.rel (%p383) target = $region60
      $region59: #{bn_lin_deep_cca_forward.1} parent=55 // pred_region
        %p386 = scmp.lt.s32.totalorder %s20, 1
        %s387 = scalar_select %p386, %s20, 1
        %s388 = smul.addr %s387, 4
        %s389 = scalar_lea.vmem %s0, %s388
      $region60: #{bn_lin_deep_cca_forward.1} parent=55 // pred_fallthru
        _
      // Predicated region
      $region61: #{bn_lin_deep_cca_forward.1} parent=55 // pred_check
        %p390 = pneg %p66
      $region62: #{bn_lin_deep_cca_forward.1} parent=55 // pred_check_branch
        %392 = sbr.rel (%p390) target = $region64
      $region63: #{bn_lin_deep_cca_forward.1} parent=55 // pred_region
        %p393 = scmp.lt.s32.totalorder %s20, 1
        %s394 = scalar_select %p393, %s20, 1
        %s395 = scalar_lea.vmem %s1, %s394
      $region64: #{bn_lin_deep_cca_forward.1} parent=55 // pred_fallthru
        _
    $region56: #{bn_lin_deep_cca_forward.1} parent=5 // pred_fallthru
      _
    %p396 = scmp.le.s32.totalorder 1, %s20
    %p397 = scmp.lt.s32.totalorder %s20, 3
    %p398 = pnand %p396, %p397
    %p399 = pneg %p398
    // Predicated region
    $region65: #{bn_lin_deep_cca_forward.1} parent=5 // pred_check
      _
    $region66: #{bn_lin_deep_cca_forward.1} parent=5 // pred_check_branch
      %401 = sbr.rel (%p398) target = $region68
    $region67: #{bn_lin_deep_cca_forward.1} parent=5 // pred_region
      %s402 = ssub.s32 %s20, 1
      %p403 = scmp.lt.s32.totalorder %s25, 1
      %s404 = scalar_select %p403, %s25, 1
      %s405 = smul.addr %s404, 4
      %s406 = scalar_lea.vmem %s0, %s405
      %p407 = pneg %p46
      %p408 = pneg %p43
      %p409 = scmp.lt.s32.totalorder %s25, 1
      %s410 = scalar_select %p409, %s25, 1
      %s411 = scalar_lea.vmem %s1, %s410
      %p412 = pneg %p72
      %p413 = pneg %p69
      %p414 = pneg %p93
      %p415 = pneg %p90
      %p416 = pneg %p114
      %p417 = pneg %p111
      %p418 = pneg %p135
      %p419 = pneg %p132
      %p420 = pneg %p156
      %p421 = pneg %p153
      %p422 = pneg %p177
      %p423 = pneg %p174
      %p424 = pneg %p198
      %p425 = pneg %p195
      %p426 = pneg %p219
      %p427 = pneg %p216
      %p428 = pneg %p240
      %p429 = pneg %p237
      %p430 = pneg %p261
      %p431 = pneg %p258
      %p432 = pneg %p282
      %p433 = pneg %p279
      %p434 = pneg %p308
      %p435 = pneg %p305
      %p436 = scmp.lt.s32.totalorder %s25, 1
      %s437 = scalar_select %p436, %s25, 1
      %s438 = scalar_lea.vmem %s12, %s437
      %p439 = pneg %p334
      %p440 = pneg %p331
      %p441 = scmp.lt.s32.totalorder %s25, 1
      %s442 = scalar_select %p441, %s25, 1
      %s443 = scalar_lea.vmem %s13, %s442
      %p444 = scmp.lt.s32.totalorder %s25, 1
      %s445 = scalar_select %p444, %s25, 1
      %s446 = smul.addr %s445, 4
      %s447 = scalar_lea.vmem %s0, %s446
      %p448 = scmp.lt.s32.totalorder %s25, 1
      %s449 = scalar_select %p448, %s25, 1
      %s450 = scalar_lea.vmem %s1, %s449
      %p451 = scmp.lt.s32.totalorder %s25, 1
      %s452 = scalar_select %p451, %s25, 1
      %s453 = scalar_lea.vmem %s12, %s452
      %p454 = scmp.lt.s32.totalorder %s25, 1
      %s455 = scalar_select %p454, %s25, 1
      %s456 = scalar_lea.vmem %s13, %s455
      %v458 = vld [vmem:[%s447] sm:$0xf]
      %v459 = vld [vmem:[%s4] sm:$0xf]
      %v460 = vld [vmem:[%s4 + $0x4] sm:$0xf]
      %v461 = vld [vmem:[%s4 + $0x8] sm:$0xf]
      %v462 = vld [vmem:[%s4 + $0xc] sm:$0xf]
      %v463 = vld [vmem:[%s5] sm:$0xf]
      %v464 = vld [vmem:[%s5 + $0x4] sm:$0xf]
      %v465 = vld [vmem:[%s5 + $0x8] sm:$0xf]
      %v466 = vld [vmem:[%s5 + $0xc] sm:$0xf]
      %v467 = vld [vmem:[%s5 + $0x10] sm:$0xf]
      %v468 = vld [vmem:[%s5 + $0x14] sm:$0xf]
      %v469 = vld [vmem:[%s5 + $0x18] sm:$0xf]
      %v470 = vld [vmem:[%s5 + $0x1c] sm:$0xf]
      %v471 = vld [vmem:[%s5 + $0x20] sm:$0xf]
      %v472 = vld [vmem:[%s5 + $0x24] sm:$0xf]
      %v473 = vld [vmem:[%s5 + $0x28] sm:$0xf]
      %v474 = vld [vmem:[%s5 + $0x2c] sm:$0xf]
      %v475 = vld [vmem:[%s5 + $0x30] sm:$0xf]
      %v476 = vld [vmem:[%s5 + $0x34] sm:$0xf]
      %v477 = vld [vmem:[%s5 + $0x38] sm:$0xf]
      %v478 = vld [vmem:[%s5 + $0x3c] sm:$0xf]
      %v479 = vld [vmem:[%s2] sm:$0xff]
      %v480 = vpack.c.bf16 %v458, %v458
      %v485 = vunpack.c.l.b16 %v459
      %v486 = vunpack.c.l.b16 %v460
      %v487 = vunpack.c.l.b16 %v461
      %v488 = vunpack.c.l.b16 %v462
      %v489 = vpack.c.b16 %v486, %v485
      %v490 = vpack.c.b16 %v488, %v487
      %vm491 = vcmask 31744
      %v493 = vsel %vm491, %v489, 0
      %v496 = vsel %vm491, %v490, 0
      %vm498 = vcmask 1041408
      %v500 = vsel %vm498, %v480, 0
      %502 = vmatprep.subr.bf16.mxu0 0
      %503 = vmatpush1.bf16.msra.mxu0 %v500
      %504 = vmatprep.subr.bf16.mxu0 0
      %505 = vmatpush1.bf16.msra.mxu0 0
      %506 = vmatprep.subr.bf16.mxu0 0
      %507 = vmatpush1.bf16.msra.mxu0 0
      %508 = vmatprep.subr.bf16.mxu0 0
      %509 = vmatpush1.bf16.msra.mxu0 0
      %510 = vmatprep.subr.bf16.mxu0 0
      %511 = vmatpush1.bf16.msra.mxu0 0
      %512 = vmatprep.subr.bf16.mxu0 0
      %513 = vmatpush1.bf16.msra.mxu0 0
      %514 = vmatprep.subr.bf16.mxu0 0
      %515 = vmatpush1.bf16.msra.mxu0 0
      %516 = vmatprep.subr.bf16.mxu0 0
      %517 = vmatpush1.bf16.msra.mxu0 0
      %518 = vmatprep.subr.bf16.mxu0 0
      %519 = vmatpush1.bf16.msra.mxu0 0
      %520 = vmatprep.subr.bf16.mxu0 0
      %521 = vmatpush1.bf16.msra.mxu0 0
      %522 = vmatprep.subr.bf16.mxu0 0
      %523 = vmatpush1.bf16.msra.mxu0 0
      %524 = vmatprep.subr.bf16.mxu0 0
      %525 = vmatpush1.bf16.msra.mxu0 0
      %526 = vmatprep.subr.bf16.mxu0 0
      %527 = vmatpush1.bf16.msra.mxu0 0
      %528 = vmatprep.subr.bf16.mxu0 0
      %529 = vmatpush1.bf16.msra.mxu0 0
      %530 = vmatprep.subr.bf16.mxu0 0
      %531 = vmatpush1.bf16.msra.mxu0 0
      %532 = vmatprep.subr.bf16.mxu0 0
      %533 = vmatpush1.bf16.msra.mxu0 0
      %534 = vmatprep.mubr.bf16.mxu0 0
      %535 = vmatmul.mubr.bf16.gmra.mrb[0].mxu0 %v493
      %v536 = vpop.f32.mrb[0].mxu0
      %v537 = vadd.f32 0.0, %v536
      %v538 = vpop.f32.mrb[0].mxu0
      %v539 = vpop.f32.mrb[0].mxu0
      %v540 = vadd.f32 0.0, %v539
      %v541 = vpop.f32.mrb[0].mxu0
      %542 = vmatprep.mubr.bf16.mxu0 0
      %543 = vmatmul.mubr.bf16.gmra.mrb[0].mxu0 %v496
      %v544 = vpop.f32.mrb[0].mxu0
      %v545 = vadd.f32 0.0, %v544
      %v546 = vpop.f32.mrb[0].mxu0
      %v547 = vpop.f32.mrb[0].mxu0
      %v548 = vadd.f32 0.0, %v547
      %v549 = vpop.f32.mrb[0].mxu0
      %550 = vdwg.mxu0
      %552 = vrot.lane.b32.xlu0 %v540, 64
      %v553 = vpop.permute.xlu0 %552
      %vm555 = vcmask 523264
      %v556 = vsel %vm555, %v537, %v553
      %v557 = vpack.c.bf16 %v556, %v556
      %v574 = vunpack.c.l.b16 %v463
      %v575 = vunpack.c.l.b16 %v464
      %v576 = vunpack.c.l.b16 %v465
      %v577 = vunpack.c.l.b16 %v466
      %v578 = vunpack.c.l.b16 %v467
      %v579 = vunpack.c.l.b16 %v468
      %v580 = vunpack.c.l.b16 %v469
      %v581 = vunpack.c.l.b16 %v470
      %v582 = vunpack.c.l.b16 %v471
      %v583 = vunpack.c.l.b16 %v472
      %v584 = vunpack.c.l.b16 %v473
      %v585 = vunpack.c.l.b16 %v474
      %v586 = vunpack.c.l.b16 %v475
      %v587 = vunpack.c.l.b16 %v476
      %v588 = vunpack.c.l.b16 %v477
      %v589 = vunpack.c.l.b16 %v478
      %v590 = vpack.c.b16 %v575, %v574
      %v591 = vpack.c.b16 %v577, %v576
      %v592 = vpack.c.b16 %v579, %v578
      %v593 = vpack.c.b16 %v581, %v580
      %v594 = vpack.c.b16 %v583, %v582
      %v595 = vpack.c.b16 %v585, %v584
      %v596 = vpack.c.b16 %v587, %v586
      %v597 = vpack.c.b16 %v589, %v588
      %606 = vmatprep.subr.bf16.mxu0 0
      %607 = vmatpush1.bf16.msra.mxu0 %v590
      %608 = vmatprep.subr.bf16.mxu0 0
      %609 = vmatpush1.bf16.msra.mxu0 %v591
      %610 = vmatprep.subr.bf16.mxu0 0
      %611 = vmatpush1.bf16.msra.mxu0 %v592
      %612 = vmatprep.subr.bf16.mxu0 0
      %613 = vmatpush1.bf16.msra.mxu0 %v593
      %614 = vmatprep.subr.bf16.mxu0 0
      %615 = vmatpush1.bf16.msra.mxu0 %v594
      %616 = vmatprep.subr.bf16.mxu0 0
      %617 = vmatpush1.bf16.msra.mxu0 %v595
      %618 = vmatprep.subr.bf16.mxu0 0
      %619 = vmatpush1.bf16.msra.mxu0 %v596
      %620 = vmatprep.subr.bf16.mxu0 0
      %621 = vmatpush1.bf16.msra.mxu0 %v597
      %622 = vmatprep.subr.bf16.mxu0 0
      %623 = vmatpush1.bf16.msra.mxu0 0
      %624 = vmatprep.subr.bf16.mxu0 0
      %625 = vmatpush1.bf16.msra.mxu0 0
      %626 = vmatprep.subr.bf16.mxu0 0
      %627 = vmatpush1.bf16.msra.mxu0 0
      %628 = vmatprep.subr.bf16.mxu0 0
      %629 = vmatpush1.bf16.msra.mxu0 0
      %630 = vmatprep.subr.bf16.mxu0 0
      %631 = vmatpush1.bf16.msra.mxu0 0
      %632 = vmatprep.subr.bf16.mxu0 0
      %633 = vmatpush1.bf16.msra.mxu0 0
      %634 = vmatprep.subr.bf16.mxu0 0
      %635 = vmatpush1.bf16.msra.mxu0 0
      %636 = vmatprep.subr.bf16.mxu0 0
      %637 = vmatpush1.bf16.msra.mxu0 0
      %638 = vmatprep.mubr.bf16.mxu0 0
      %639 = vmatmul.mubr.bf16.gmra.mrb[0].mxu0 %v557
      %v640 = vpop.f32.mrb[0].mxu0
      %v641 = vadd.f32 0.0, %v640
      %v642 = vpop.f32.mrb[0].mxu0
      %v643 = vpop.f32.mrb[0].mxu0
      %v644 = vpop.f32.mrb[0].mxu0
      %645 = vdwg.mxu0
      %vm646 = vcmask 130048
      %647 = vst.msk [vmem:[#allocation2] sm:$0xff] %vm646, %v641
      %649 = vrot.lane.b32.xlu0 %v641, 16
      %v650 = vpop.permute.xlu0 %649
      %vm652 = vcmask 392448
      %653 = vst.msk [vmem:[#allocation2] sm:$0xff] %vm652, %v650
      %654 = vrot.lane.b32.xlu0 %v641, 32
      %v655 = vpop.permute.xlu0 %654
      %vm657 = vcmask 654848
      %658 = vst.msk [vmem:[#allocation2] sm:$0xff] %vm657, %v655
      %659 = vrot.lane.b32.xlu0 %v641, 48
      %v660 = vpop.permute.xlu0 %659
      %vm662 = vcmask 917248
      %663 = vst.msk [vmem:[#allocation2] sm:$0xff] %vm662, %v660
      %664 = vrot.lane.b32.xlu0 %v641, 64
      %v665 = vpop.permute.xlu0 %664
      %667 = vst.msk [vmem:[#allocation2 + $0x8] sm:$0xff] %vm646, %v665
      %668 = vrot.lane.b32.xlu0 %v641, 80
      %v669 = vpop.permute.xlu0 %668
      %671 = vst.msk [vmem:[#allocation2 + $0x8] sm:$0xff] %vm652, %v669
      %672 = vrot.lane.b32.xlu0 %v641, 96
      %v673 = vpop.permute.xlu0 %672
      %675 = vst.msk [vmem:[#allocation2 + $0x8] sm:$0xff] %vm657, %v673
      %676 = vrot.lane.b32.xlu0 %v641, 112
      %v677 = vpop.permute.xlu0 %676
      %679 = vst.msk [vmem:[#allocation2 + $0x8] sm:$0xff] %vm662, %v677
      %681 = vrot.lane.b32.xlu0 %v548, 64
      %v682 = vpop.permute.xlu0 %681
      %v684 = vsel %vm555, %v545, %v682
      %v685 = vpack.c.bf16 %v684, %v684
      %686 = vmatprep.subr.bf16.mxu0 0
      %687 = vmatpush1.bf16.msra.mxu0 %v590
      %688 = vmatprep.subr.bf16.mxu0 0
      %689 = vmatpush1.bf16.msra.mxu0 %v591
      %690 = vmatprep.subr.bf16.mxu0 0
      %691 = vmatpush1.bf16.msra.mxu0 %v592
      %692 = vmatprep.subr.bf16.mxu0 0
      %693 = vmatpush1.bf16.msra.mxu0 %v593
      %694 = vmatprep.subr.bf16.mxu0 0
      %695 = vmatpush1.bf16.msra.mxu0 %v594
      %696 = vmatprep.subr.bf16.mxu0 0
      %697 = vmatpush1.bf16.msra.mxu0 %v595
      %698 = vmatprep.subr.bf16.mxu0 0
      %699 = vmatpush1.bf16.msra.mxu0 %v596
      %700 = vmatprep.subr.bf16.mxu0 0
      %701 = vmatpush1.bf16.msra.mxu0 %v597
      %702 = vmatprep.subr.bf16.mxu0 0
      %703 = vmatpush1.bf16.msra.mxu0 0
      %704 = vmatprep.subr.bf16.mxu0 0
      %705 = vmatpush1.bf16.msra.mxu0 0
      %706 = vmatprep.subr.bf16.mxu0 0
      %707 = vmatpush1.bf16.msra.mxu0 0
      %708 = vmatprep.subr.bf16.mxu0 0
      %709 = vmatpush1.bf16.msra.mxu0 0
      %710 = vmatprep.subr.bf16.mxu0 0
      %711 = vmatpush1.bf16.msra.mxu0 0
      %712 = vmatprep.subr.bf16.mxu0 0
      %713 = vmatpush1.bf16.msra.mxu0 0
      %714 = vmatprep.subr.bf16.mxu0 0
      %715 = vmatpush1.bf16.msra.mxu0 0
      %716 = vmatprep.subr.bf16.mxu0 0
      %717 = vmatpush1.bf16.msra.mxu0 0
      %718 = vmatprep.mubr.bf16.mxu0 0
      %719 = vmatmul.mubr.bf16.gmra.mrb[0].mxu0 %v685
      %v720 = vpop.f32.mrb[0].mxu0
      %v721 = vadd.f32 0.0, %v720
      %v722 = vpop.f32.mrb[0].mxu0
      %v723 = vpop.f32.mrb[0].mxu0
      %v724 = vpop.f32.mrb[0].mxu0
      %725 = vdwg.mxu0
      %727 = vrot.lane.b32.xlu0 %v721, 16
      %v728 = vpop.permute.xlu0 %727
      %vm730 = vcmask 261248
      %731 = vst.msk [vmem:[#allocation2] sm:$0xff] %vm730, %v728
      %732 = vrot.lane.b32.xlu0 %v721, 32
      %v733 = vpop.permute.xlu0 %732
      %vm735 = vcmask 523648
      %736 = vst.msk [vmem:[#allocation2] sm:$0xff] %vm735, %v733
      %737 = vrot.lane.b32.xlu0 %v721, 48
      %v738 = vpop.permute.xlu0 %737
      %vm740 = vcmask 786048
      %741 = vst.msk [vmem:[#allocation2] sm:$0xff] %vm740, %v738
      %742 = vrot.lane.b32.xlu0 %v721, 64
      %v743 = vpop.permute.xlu0 %742
      %vm745 = vcmask 1048448
      %746 = vst.msk [vmem:[#allocation2] sm:$0xff] %vm745, %v743
      %747 = vrot.lane.b32.xlu0 %v721, 80
      %v748 = vpop.permute.xlu0 %747
      %750 = vst.msk [vmem:[#allocation2 + $0x8] sm:$0xff] %vm730, %v748
      %751 = vrot.lane.b32.xlu0 %v721, 96
      %v752 = vpop.permute.xlu0 %751
      %754 = vst.msk [vmem:[#allocation2 + $0x8] sm:$0xff] %vm735, %v752
      %755 = vrot.lane.b32.xlu0 %v721, 112
      %v756 = vpop.permute.xlu0 %755
      %758 = vst.msk [vmem:[#allocation2 + $0x8] sm:$0xff] %vm740, %v756
      %759 = vst.msk [vmem:[#allocation2 + $0x8] sm:$0xff] %vm745, %v721
      %v760 = vld [vmem:[#allocation2] sm:$0xff]
      %v761 = vld [vmem:[#allocation2 + $0x8] sm:$0xff]
      %763 = vset.pattern.permute.xlu0 0
      %764 = vperm.xlu0 %763, %v479
      %v765 = vpop.permute.xlu0 %764
      %v767 = vadd.f32 %v760, %v765
      %v768 = vadd.f32 %v761, %v765
      %v769 = vld [vmem:[%s2] sm:$0xff]
      %v770 = vlaneseq
      %v771 = vand.u32 %v770, 127
      %v772 = vadd.s32 %v771, 128
      %vm773 = vcmp.lt.s32.totalorder %v771, 0
      %v774 = vsub.s32 0, %v771
      %v775 = vsel %vm773, %v774, %v771
      %v776 = vshrl.u32 %v775, 4
      %v777 = vand.u32 %v775, 15
      %v778 = vsub.s32 0, %v777
      %v779 = vsel %vm773, %v778, %v777
      %vm780 = vcmp.lt.s32.totalorder %v772, 0
      %v781 = vsub.s32 0, %v772
      %v782 = vsel %vm780, %v781, %v772
      %v783 = vshrl.u32 %v782, 4
      %v784 = vand.u32 %v782, 15
      %v785 = vsub.s32 0, %v784
      %v786 = vsel %vm780, %v785, %v784
      %vm787 = vcmp.ne.s32.totalorder %v779, 0
      %vm788 = vcmp.ne.s32.totalorder %v786, 0
      %vm789 = vcmp.lt.s32.totalorder %v779, 0
      %vm790 = vcmp.lt.s32.totalorder %v786, 0
      %vm791 = vmand %vm789, %vm787
      %vm792 = vmand %vm790, %vm788
      %v793 = vadd.s32 %v779, 16
      %v794 = vadd.s32 %v786, 16
      %v795 = vsel %vm791, %v793, %v779
      %v796 = vsel %vm792, %v794, %v786
      %vm797 = vcmp.lt.s32.totalorder %v771, 16
      %vm798 = vcmp.lt.s32.totalorder %v772, 16
      %vm799 = vcmp.ge.s32.totalorder %v771, 240
      %vm800 = vcmp.ge.s32.totalorder %v772, 240
      %vm801 = vcmp.eq.s32.totalorder %v795, 0
      %vm802 = vcmp.eq.s32.totalorder %v796, 0
      %vm803 = vcmp.eq.s32.totalorder %v795, 15
      %vm804 = vcmp.eq.s32.totalorder %v796, 15
      %v805 = vld [vmem:[%s6] sm:$0xf]
      %806 = vrot.lane.b32.xlu0 %v767, 112
      %v807 = vpop.permute.xlu0 %806
      %808 = vrot.lane.b32.xlu0 %v768, 112
      %v809 = vpop.permute.xlu0 %808
      %vm810 = vcmp.lt.s32.totalorder %v771, 112
      %v811 = vsel %vm810, %v807, %v809
      %v812 = vsel %vm810, %v809, %v807
      %813 = vrot.lane.b32.xlu0 %v767, 16
      %v814 = vpop.permute.xlu0 %813
      %815 = vrot.lane.b32.xlu0 %v768, 16
      %v816 = vpop.permute.xlu0 %815
      %v817 = vsel %vm797, %v814, %v816
      %v818 = vsel %vm797, %v816, %v814
      %v819 = vsel %vm797, 1, 0
      %v820 = vsel %vm798, 1, 0
      %vm821 = vcmp.eq.s32.totalorder %v819, 1
      %vm822 = vcmp.eq.s32.totalorder %v820, 1
      %v823 = vsel %vm821, %v811, %v818
      %v824 = vsel %vm822, %v812, %v817
      %v825 = vsel %vm799, 1, 0
      %v826 = vsel %vm800, 1, 0
      %vm827 = vcmp.eq.s32.totalorder %v825, 1
      %vm828 = vcmp.eq.s32.totalorder %v826, 1
      %v829 = vsel %vm827, %v818, %v811
      %v830 = vsel %vm828, %v817, %v812
      %831 = vrot.lane.b32.xlu0 %v823, 127
      %v832 = vpop.permute.xlu0 %831
      %833 = vrot.lane.b32.xlu0 %v824, 127
      %v834 = vpop.permute.xlu0 %833
      %vm835 = vcmp.lt.s32.totalorder %v771, 127
      %v836 = vsel %vm835, %v832, %v834
      %v837 = vsel %vm835, %v834, %v832
      %838 = vrot.lane.b32.xlu0 %v823, 1
      %v839 = vpop.permute.xlu0 %838
      %840 = vrot.lane.b32.xlu0 %v824, 1
      %v841 = vpop.permute.xlu0 %840
      %vm842 = vcmp.lt.s32.totalorder %v771, 1
      %v843 = vsel %vm842, %v839, %v841
      %v844 = vsel %vm842, %v841, %v839
      %v845 = vsel %vm801, 1, 0
      %v846 = vsel %vm802, 1, 0
      %vm847 = vcmp.eq.s32.totalorder %v845, 1
      %vm848 = vcmp.eq.s32.totalorder %v846, 1
      %v849 = vsel %vm847, %v836, %v844
      %v850 = vsel %vm848, %v837, %v843
      %v851 = vsel %vm803, 1, 0
      %v852 = vsel %vm804, 1, 0
      %vm853 = vcmp.eq.s32.totalorder %v851, 1
      %vm854 = vcmp.eq.s32.totalorder %v852, 1
      %v855 = vsel %vm853, %v844, %v836
      %v856 = vsel %vm854, %v843, %v837
      %857 = vrot.lane.b32.xlu0 %v767, 127
      %v858 = vpop.permute.xlu0 %857
      %859 = vrot.lane.b32.xlu0 %v768, 127
      %v860 = vpop.permute.xlu0 %859
      %v861 = vsel %vm835, %v858, %v860
      %v862 = vsel %vm835, %v860, %v858
      %863 = vrot.lane.b32.xlu0 %v767, 1
      %v864 = vpop.permute.xlu0 %863
      %865 = vrot.lane.b32.xlu0 %v768, 1
      %v866 = vpop.permute.xlu0 %865
      %v867 = vsel %vm842, %v864, %v866
      %v868 = vsel %vm842, %v866, %v864
      %v869 = vsel %vm847, %v861, %v868
      %v870 = vsel %vm848, %v862, %v867
      %v871 = vsel %vm853, %v868, %v861
      %v872 = vsel %vm854, %v867, %v862
      %873 = vrot.lane.b32.xlu0 %v829, 127
      %v874 = vpop.permute.xlu0 %873
      %875 = vrot.lane.b32.xlu0 %v830, 127
      %v876 = vpop.permute.xlu0 %875
      %v877 = vsel %vm835, %v874, %v876
      %v878 = vsel %vm835, %v876, %v874
      %879 = vrot.lane.b32.xlu0 %v829, 1
      %v880 = vpop.permute.xlu0 %879
      %881 = vrot.lane.b32.xlu0 %v830, 1
      %v882 = vpop.permute.xlu0 %881
      %v883 = vsel %vm842, %v880, %v882
      %v884 = vsel %vm842, %v882, %v880
      %v885 = vsel %vm847, %v877, %v884
      %v886 = vsel %vm848, %v878, %v883
      %v887 = vsel %vm853, %v884, %v877
      %v888 = vsel %vm854, %v883, %v878
      %v889 = vpack.c.bf16 %v823, %v849
      %v890 = vpack.c.bf16 %v824, %v850
      %v891 = vpack.c.bf16 %v869, %v855
      %v892 = vpack.c.bf16 %v870, %v856
      %v893 = vpack.c.bf16 %v871, %v767
      %v894 = vpack.c.bf16 %v872, %v768
      %v895 = vpack.c.bf16 %v829, %v885
      %v896 = vpack.c.bf16 %v830, %v886
      %v897 = vpack.c.bf16 %v887, %v887
      %v898 = vpack.c.bf16 %v888, %v888
      %900 = vset.pattern.permute.xlu0 1
      %901 = vperm.xlu0 %900, %v769
      %v902 = vpop.permute.xlu0 %901
      %vm904 = vcmask 588800
      %v906 = vsel %vm904, %v805, 0
      %vm908 = vcmask 1043456
      %v910 = vsel %vm908, %v897, 0
      %v913 = vsel %vm908, %v898, 0
      %915 = vmatprep.subr.bf16.mxu0 %v890
      %916 = vmatpush1.bf16.msra.mxu0 %v889
      %917 = vmatprep.subr.bf16.mxu0 %v892
      %918 = vmatpush1.bf16.msra.mxu0 %v891
      %919 = vmatprep.subr.bf16.mxu0 %v894
      %920 = vmatpush1.bf16.msra.mxu0 %v893
      %921 = vmatprep.subr.bf16.mxu0 %v896
      %922 = vmatpush1.bf16.msra.mxu0 %v895
      %923 = vmatprep.subr.bf16.mxu0 %v913
      %924 = vmatpush1.bf16.msra.mxu0 %v910
      %925 = vmatprep.subr.bf16.mxu0 0
      %926 = vmatpush1.bf16.msra.mxu0 0
      %927 = vmatprep.subr.bf16.mxu0 0
      %928 = vmatpush1.bf16.msra.mxu0 0
      %929 = vmatprep.subr.bf16.mxu0 0
      %930 = vmatpush1.bf16.msra.mxu0 0
      %931 = vmatprep.subr.bf16.mxu0 0
      %932 = vmatpush1.bf16.msra.mxu0 0
      %933 = vmatprep.subr.bf16.mxu0 0
      %934 = vmatpush1.bf16.msra.mxu0 0
      %935 = vmatprep.subr.bf16.mxu0 0
      %936 = vmatpush1.bf16.msra.mxu0 0
      %937 = vmatprep.subr.bf16.mxu0 0
      %938 = vmatpush1.bf16.msra.mxu0 0
      %939 = vmatprep.subr.bf16.mxu0 0
      %940 = vmatpush1.bf16.msra.mxu0 0
      %941 = vmatprep.subr.bf16.mxu0 0
      %942 = vmatpush1.bf16.msra.mxu0 0
      %943 = vmatprep.subr.bf16.mxu0 0
      %944 = vmatpush1.bf16.msra.mxu0 0
      %945 = vmatprep.subr.bf16.mxu0 0
      %946 = vmatpush1.bf16.msra.mxu0 0
      %947 = vmatprep.mubr.bf16.mxu0 0
      %948 = vmatmul.mubr.bf16.gmra.mrb[0].mxu0 %v906
      %v949 = vpop.f32.mrb[0].mxu0
      %v950 = vadd.f32 %v902, %v949
      %v951 = vpop.f32.mrb[0].mxu0
      %v952 = vadd.f32 %v902, %v951
      %v953 = vpop.f32.mrb[0].mxu0
      %v954 = vpop.f32.mrb[0].mxu0
      %955 = vdwg.mxu0
      %vm956 = vcmp.ge.f32.partialorder %v950, 0.0
      %vm957 = vcmp.ge.f32.partialorder %v952, 0.0
      %v958 = vmul.f32 %v950, 0.01
      %v959 = vmul.f32 %v952, 0.01
      %v960 = vsel %vm956, %v950, %v958
      %v961 = vsel %vm957, %v952, %v959
      %v962 = vld [vmem:[%s7] sm:$0xf]
      %963 = vrot.lane.b32.xlu0 %v960, 112
      %v964 = vpop.permute.xlu0 %963
      %965 = vrot.lane.b32.xlu0 %v961, 112
      %v966 = vpop.permute.xlu0 %965
      %v967 = vsel %vm810, %v964, %v966
      %v968 = vsel %vm810, %v966, %v964
      %969 = vrot.lane.b32.xlu0 %v960, 16
      %v970 = vpop.permute.xlu0 %969
      %971 = vrot.lane.b32.xlu0 %v961, 16
      %v972 = vpop.permute.xlu0 %971
      %v973 = vsel %vm797, %v970, %v972
      %v974 = vsel %vm797, %v972, %v970
      %v975 = vsel %vm821, %v967, %v974
      %v976 = vsel %vm822, %v968, %v973
      %v977 = vsel %vm827, %v974, %v967
      %v978 = vsel %vm828, %v973, %v968
      %979 = vrot.lane.b32.xlu0 %v975, 127
      %v980 = vpop.permute.xlu0 %979
      %981 = vrot.lane.b32.xlu0 %v976, 127
      %v982 = vpop.permute.xlu0 %981
      %v983 = vsel %vm835, %v980, %v982
      %v984 = vsel %vm835, %v982, %v980
      %985 = vrot.lane.b32.xlu0 %v975, 1
      %v986 = vpop.permute.xlu0 %985
      %987 = vrot.lane.b32.xlu0 %v976, 1
      %v988 = vpop.permute.xlu0 %987
      %v989 = vsel %vm842, %v986, %v988
      %v990 = vsel %vm842, %v988, %v986
      %v991 = vsel %vm847, %v983, %v990
      %v992 = vsel %vm848, %v984, %v989
      %v993 = vsel %vm853, %v990, %v983
      %v994 = vsel %vm854, %v989, %v984
      %995 = vrot.lane.b32.xlu0 %v960, 127
      %v996 = vpop.permute.xlu0 %995
      %997 = vrot.lane.b32.xlu0 %v961, 127
      %v998 = vpop.permute.xlu0 %997
      %v999 = vsel %vm835, %v996, %v998
      %v1000 = vsel %vm835, %v998, %v996
      %1001 = vrot.lane.b32.xlu0 %v960, 1
      %v1002 = vpop.permute.xlu0 %1001
      %1003 = vrot.lane.b32.xlu0 %v961, 1
      %v1004 = vpop.permute.xlu0 %1003
      %v1005 = vsel %vm842, %v1002, %v1004
      %v1006 = vsel %vm842, %v1004, %v1002
      %v1007 = vsel %vm847, %v999, %v1006
      %v1008 = vsel %vm848, %v1000, %v1005
      %v1009 = vsel %vm853, %v1006, %v999
      %v1010 = vsel %vm854, %v1005, %v1000
      %1011 = vrot.lane.b32.xlu0 %v977, 127
      %v1012 = vpop.permute.xlu0 %1011
      %1013 = vrot.lane.b32.xlu0 %v978, 127
      %v1014 = vpop.permute.xlu0 %1013
      %v1015 = vsel %vm835, %v1012, %v1014
      %v1016 = vsel %vm835, %v1014, %v1012
      %1017 = vrot.lane.b32.xlu0 %v977, 1
      %v1018 = vpop.permute.xlu0 %1017
      %1019 = vrot.lane.b32.xlu0 %v978, 1
      %v1020 = vpop.permute.xlu0 %1019
      %v1021 = vsel %vm842, %v1018, %v1020
      %v1022 = vsel %vm842, %v1020, %v1018
      %v1023 = vsel %vm847, %v1015, %v1022
      %v1024 = vsel %vm848, %v1016, %v1021
      %v1025 = vsel %vm853, %v1022, %v1015
      %v1026 = vsel %vm854, %v1021, %v1016
      %v1027 = vpack.c.bf16 %v975, %v991
      %v1028 = vpack.c.bf16 %v976, %v992
      %v1029 = vpack.c.bf16 %v1007, %v993
      %v1030 = vpack.c.bf16 %v1008, %v994
      %v1031 = vpack.c.bf16 %v1009, %v960
      %v1032 = vpack.c.bf16 %v1010, %v961
      %v1033 = vpack.c.bf16 %v977, %v1023
      %v1034 = vpack.c.bf16 %v978, %v1024
      %v1035 = vpack.c.bf16 %v1025, %v1025
      %v1036 = vpack.c.bf16 %v1026, %v1026
      %1037 = vset.pattern.permute.xlu0 2
      %1038 = vperm.xlu0 %1037, %v769
      %v1039 = vpop.permute.xlu0 %1038
      %v1042 = vsel %vm904, %v962, 0
      %v1045 = vsel %vm908, %v1035, 0
      %v1048 = vsel %vm908, %v1036, 0
      %1050 = vmatprep.subr.bf16.mxu0 %v1028
      %1051 = vmatpush1.bf16.msra.mxu0 %v1027
      %1052 = vmatprep.subr.bf16.mxu0 %v1030
      %1053 = vmatpush1.bf16.msra.mxu0 %v1029
      %1054 = vmatprep.subr.bf16.mxu0 %v1032
      %1055 = vmatpush1.bf16.msra.mxu0 %v1031
      %1056 = vmatprep.subr.bf16.mxu0 %v1034
      %1057 = vmatpush1.bf16.msra.mxu0 %v1033
      %1058 = vmatprep.subr.bf16.mxu0 %v1048
      %1059 = vmatpush1.bf16.msra.mxu0 %v1045
      %1060 = vmatprep.subr.bf16.mxu0 0
      %1061 = vmatpush1.bf16.msra.mxu0 0
      %1062 = vmatprep.subr.bf16.mxu0 0
      %1063 = vmatpush1.bf16.msra.mxu0 0
      %1064 = vmatprep.subr.bf16.mxu0 0
      %1065 = vmatpush1.bf16.msra.mxu0 0
      %1066 = vmatprep.subr.bf16.mxu0 0
      %1067 = vmatpush1.bf16.msra.mxu0 0
      %1068 = vmatprep.subr.bf16.mxu0 0
      %1069 = vmatpush1.bf16.msra.mxu0 0
      %1070 = vmatprep.subr.bf16.mxu0 0
      %1071 = vmatpush1.bf16.msra.mxu0 0
      %1072 = vmatprep.subr.bf16.mxu0 0
      %1073 = vmatpush1.bf16.msra.mxu0 0
      %1074 = vmatprep.subr.bf16.mxu0 0
      %1075 = vmatpush1.bf16.msra.mxu0 0
      %1076 = vmatprep.subr.bf16.mxu0 0
      %1077 = vmatpush1.bf16.msra.mxu0 0
      %1078 = vmatprep.subr.bf16.mxu0 0
      %1079 = vmatpush1.bf16.msra.mxu0 0
      %1080 = vmatprep.subr.bf16.mxu0 0
      %1081 = vmatpush1.bf16.msra.mxu0 0
      %1082 = vmatprep.mubr.bf16.mxu0 0
      %1083 = vmatmul.mubr.bf16.gmra.mrb[0].mxu0 %v1042
      %v1084 = vpop.f32.mrb[0].mxu0
      %v1085 = vadd.f32 %v1039, %v1084
      %v1086 = vpop.f32.mrb[0].mxu0
      %v1087 = vadd.f32 %v1039, %v1086
      %v1088 = vpop.f32.mrb[0].mxu0
      %v1089 = vpop.f32.mrb[0].mxu0
      %1090 = vdwg.mxu0
      %vm1091 = vcmp.ge.f32.partialorder %v1085, 0.0
      %vm1092 = vcmp.ge.f32.partialorder %v1087, 0.0
      %v1093 = vmul.f32 %v1085, 0.01
      %v1094 = vmul.f32 %v1087, 0.01
      %v1095 = vsel %vm1091, %v1085, %v1093
      %v1096 = vsel %vm1092, %v1087, %v1094
      %v1097 = vld [vmem:[%s8] sm:$0xf]
      %v1098 = vld [vmem:[%s8 + $0x4] sm:$0xf]
      %v1099 = vld [vmem:[%s8 + $0x8] sm:$0xf]
      %v1100 = vld [vmem:[%s8 + $0xc] sm:$0xf]
      %v1101 = vld [vmem:[%s9] sm:$0xff]
      %v1102 = vld [vmem:[%s9 + $0x8] sm:$0xff]
      %v1103 = vld [vmem:[%s9 + $0x10] sm:$0xff]
      %v1104 = vld [vmem:[%s9 + $0x18] sm:$0xff]
      %v1105 = vld [vmem:[%s9 + $0x20] sm:$0xff]
      %v1106 = vld [vmem:[%s9 + $0x28] sm:$0xff]
      %v1107 = vld [vmem:[%s9 + $0x30] sm:$0xff]
      %v1108 = vld [vmem:[%s9 + $0x38] sm:$0xff]
      %v1109 = vld [vmem:[%s9 + $0x40] sm:$0xff]
      %v1110 = vld [vmem:[%s9 + $0x48] sm:$0xff]
      %v1111 = vld [vmem:[%s9 + $0x50] sm:$0xff]
      %v1112 = vld [vmem:[%s9 + $0x58] sm:$0xff]
      %v1113 = vld [vmem:[%s9 + $0x60] sm:$0xff]
      %v1114 = vld [vmem:[%s9 + $0x68] sm:$0xff]
      %v1115 = vld [vmem:[%s9 + $0x70] sm:$0xff]
      %v1116 = vld [vmem:[%s9 + $0x78] sm:$0xff]
      %v1117 = vld [vmem:[%s9 + $0x80] sm:$0xff]
      %v1118 = vld [vmem:[%s9 + $0x88] sm:$0xff]
      %v1119 = vld [vmem:[%s9 + $0x90] sm:$0xff]
      %v1120 = vld [vmem:[%s9 + $0x98] sm:$0xff]
      %v1121 = vld [vmem:[%s9 + $0xa0] sm:$0xff]
      %v1122 = vld [vmem:[%s9 + $0xa8] sm:$0xff]
      %v1123 = vld [vmem:[%s9 + $0xb0] sm:$0xff]
      %v1124 = vld [vmem:[%s9 + $0xb8] sm:$0xff]
      %v1125 = vld [vmem:[%s9 + $0xc0] sm:$0xff]
      %v1126 = vld [vmem:[%s9 + $0xc8] sm:$0xff]
      %v1127 = vld [vmem:[%s9 + $0xd0] sm:$0xff]
      %v1128 = vld [vmem:[%s9 + $0xd8] sm:$0xff]
      %v1129 = vld [vmem:[%s9 + $0xe0] sm:$0xff]
      %v1130 = vld [vmem:[%s9 + $0xe8] sm:$0xff]
      %v1131 = vld [vmem:[%s9 + $0xf0] sm:$0xff]
      %v1132 = vld [vmem:[%s9 + $0xf8] sm:$0xff]
      %v1133 = vld [vmem:[%s9 + $0x100] sm:$0xff]
      %v1134 = vld [vmem:[%s9 + $0x108] sm:$0xff]
      %v1135 = vld [vmem:[%s9 + $0x110] sm:$0xff]
      %v1136 = vld [vmem:[%s9 + $0x118] sm:$0xff]
      %v1137 = vld [vmem:[%s9 + $0x120] sm:$0xff]
      %v1138 = vld [vmem:[%s9 + $0x128] sm:$0xff]
      %v1139 = vld [vmem:[%s9 + $0x130] sm:$0xff]
      %v1140 = vld [vmem:[%s9 + $0x138] sm:$0xff]
      %v1141 = vld [vmem:[%s9 + $0x140] sm:$0xff]
      %v1142 = vld [vmem:[%s9 + $0x148] sm:$0xff]
      %v1143 = vld [vmem:[%s9 + $0x150] sm:$0xff]
      %v1144 = vld [vmem:[%s9 + $0x158] sm:$0xff]
      %v1145 = vld [vmem:[%s9 + $0x160] sm:$0xff]
      %v1146 = vld [vmem:[%s9 + $0x168] sm:$0xff]
      %v1147 = vld [vmem:[%s9 + $0x170] sm:$0xff]
      %v1148 = vld [vmem:[%s9 + $0x178] sm:$0xff]
      %v1149 = vld [vmem:[%s9 + $0x180] sm:$0xff]
      %v1150 = vld [vmem:[%s9 + $0x188] sm:$0xff]
      %v1151 = vld [vmem:[%s9 + $0x190] sm:$0xff]
      %v1152 = vld [vmem:[%s9 + $0x198] sm:$0xff]
      %v1153 = vld [vmem:[%s9 + $0x1a0] sm:$0xff]
      %v1154 = vld [vmem:[%s9 + $0x1a8] sm:$0xff]
      %v1155 = vld [vmem:[%s9 + $0x1b0] sm:$0xff]
      %v1156 = vld [vmem:[%s9 + $0x1b8] sm:$0xff]
      %v1157 = vld [vmem:[%s9 + $0x1c0] sm:$0xff]
      %v1158 = vld [vmem:[%s9 + $0x1c8] sm:$0xff]
      %v1159 = vld [vmem:[%s9 + $0x1d0] sm:$0xff]
      %v1160 = vld [vmem:[%s9 + $0x1d8] sm:$0xff]
      %v1161 = vld [vmem:[%s9 + $0x1e0] sm:$0xff]
      %v1162 = vld [vmem:[%s9 + $0x1e8] sm:$0xff]
      %v1163 = vld [vmem:[%s9 + $0x1f0] sm:$0xff]
      %v1164 = vld [vmem:[%s9 + $0x1f8] sm:$0xff]
      %v1165 = vld [vmem:[%s9 + $0x200] sm:$0xff]
      %v1166 = vld [vmem:[%s9 + $0x208] sm:$0xff]
      %v1167 = vld [vmem:[%s9 + $0x210] sm:$0xff]
      %v1168 = vld [vmem:[%s9 + $0x218] sm:$0xff]
      %v1169 = vld [vmem:[%s9 + $0x220] sm:$0xff]
      %v1170 = vld [vmem:[%s9 + $0x228] sm:$0xff]
      %v1171 = vld [vmem:[%s9 + $0x230] sm:$0xff]
      %v1172 = vld [vmem:[%s9 + $0x238] sm:$0xff]
      %v1173 = vld [vmem:[%s9 + $0x240] sm:$0xff]
      %v1174 = vld [vmem:[%s9 + $0x248] sm:$0xff]
      %v1175 = vld [vmem:[%s9 + $0x250] sm:$0xff]
      %v1176 = vld [vmem:[%s9 + $0x258] sm:$0xff]
      %v1177 = vld [vmem:[%s9 + $0x260] sm:$0xff]
      %v1178 = vld [vmem:[%s9 + $0x268] sm:$0xff]
      %v1179 = vld [vmem:[%s9 + $0x270] sm:$0xff]
      %v1180 = vld [vmem:[%s9 + $0x278] sm:$0xff]
      %v1181 = vld [vmem:[%s9 + $0x280] sm:$0xff]
      %v1182 = vld [vmem:[%s9 + $0x288] sm:$0xff]
      %v1183 = vld [vmem:[%s9 + $0x290] sm:$0xff]
      %v1184 = vld [vmem:[%s9 + $0x298] sm:$0xff]
      %v1185 = vld [vmem:[%s9 + $0x2a0] sm:$0xff]
      %v1186 = vld [vmem:[%s9 + $0x2a8] sm:$0xff]
      %v1187 = vld [vmem:[%s9 + $0x2b0] sm:$0xff]
      %v1188 = vld [vmem:[%s9 + $0x2b8] sm:$0xff]
      %v1189 = vld [vmem:[%s9 + $0x2c0] sm:$0xff]
      %v1190 = vld [vmem:[%s9 + $0x2c8] sm:$0xff]
      %v1191 = vld [vmem:[%s9 + $0x2d0] sm:$0xff]
      %v1192 = vld [vmem:[%s9 + $0x2d8] sm:$0xff]
      %v1193 = vld [vmem:[%s9 + $0x2e0] sm:$0xff]
      %v1194 = vld [vmem:[%s9 + $0x2e8] sm:$0xff]
      %v1195 = vld [vmem:[%s9 + $0x2f0] sm:$0xff]
      %v1196 = vld [vmem:[%s9 + $0x2f8] sm:$0xff]
      %v1197 = vld [vmem:[%s9 + $0x300] sm:$0xff]
      %v1198 = vld [vmem:[%s9 + $0x308] sm:$0xff]
      %v1199 = vld [vmem:[%s9 + $0x310] sm:$0xff]
      %v1200 = vld [vmem:[%s9 + $0x318] sm:$0xff]
      %v1201 = vld [vmem:[%s9 + $0x320] sm:$0xff]
      %v1202 = vld [vmem:[%s9 + $0x328] sm:$0xff]
      %v1203 = vld [vmem:[%s9 + $0x330] sm:$0xff]
      %v1204 = vld [vmem:[%s9 + $0x338] sm:$0xff]
      %v1205 = vld [vmem:[%s9 + $0x340] sm:$0xff]
      %v1206 = vld [vmem:[%s9 + $0x348] sm:$0xff]
      %v1207 = vld [vmem:[%s9 + $0x350] sm:$0xff]
      %v1208 = vld [vmem:[%s9 + $0x358] sm:$0xff]
      %v1209 = vld [vmem:[%s9 + $0x360] sm:$0xff]
      %v1210 = vld [vmem:[%s9 + $0x368] sm:$0xff]
      %v1211 = vld [vmem:[%s9 + $0x370] sm:$0xff]
      %v1212 = vld [vmem:[%s9 + $0x378] sm:$0xff]
      %v1213 = vld [vmem:[%s9 + $0x380] sm:$0xff]
      %v1214 = vld [vmem:[%s9 + $0x388] sm:$0xff]
      %v1215 = vld [vmem:[%s9 + $0x390] sm:$0xff]
      %v1216 = vld [vmem:[%s9 + $0x398] sm:$0xff]
      %v1217 = vld [vmem:[%s9 + $0x3a0] sm:$0xff]
      %v1218 = vld [vmem:[%s9 + $0x3a8] sm:$0xff]
      %v1219 = vld [vmem:[%s9 + $0x3b0] sm:$0xff]
      %v1220 = vld [vmem:[%s9 + $0x3b8] sm:$0xff]
      %v1221 = vld [vmem:[%s9 + $0x3c0] sm:$0xff]
      %v1222 = vld [vmem:[%s9 + $0x3c8] sm:$0xff]
      %v1223 = vld [vmem:[%s9 + $0x3d0] sm:$0xff]
      %v1224 = vld [vmem:[%s9 + $0x3d8] sm:$0xff]
      %v1225 = vld [vmem:[%s9 + $0x3e0] sm:$0xff]
      %v1226 = vld [vmem:[%s9 + $0x3e8] sm:$0xff]
      %v1227 = vld [vmem:[%s9 + $0x3f0] sm:$0xff]
      %v1228 = vld [vmem:[%s9 + $0x3f8] sm:$0xff]
      %v1229 = vpack.c.bf16 %v1095, %v1095
      %v1230 = vpack.c.bf16 %v1096, %v1096
      %v1235 = vunpack.c.l.b16 %v1097
      %v1236 = vunpack.c.l.b16 %v1098
      %v1237 = vunpack.c.l.b16 %v1099
      %v1238 = vunpack.c.l.b16 %v1100
      %v1239 = vpack.c.b16 %v1236, %v1235
      %v1240 = vpack.c.b16 %v1238, %v1237
      %vm1241 = vcmask 64512
      %v1243 = vsel %vm1241, %v1239, 0
      %v1246 = vsel %vm1241, %v1240, 0
      %v1249 = vsel %vm908, %v1229, 0
      %v1252 = vsel %vm908, %v1230, 0
      %1254 = vmatprep.subr.bf16.mxu0 %v1252
      %1255 = vmatpush1.bf16.msra.mxu0 %v1249
      %1256 = vmatprep.subr.bf16.mxu0 0
      %1257 = vmatpush1.bf16.msra.mxu0 0
      %1258 = vmatprep.subr.bf16.mxu0 0
      %1259 = vmatpush1.bf16.msra.mxu0 0
      %1260 = vmatprep.subr.bf16.mxu0 0
      %1261 = vmatpush1.bf16.msra.mxu0 0
      %1262 = vmatprep.subr.bf16.mxu0 0
      %1263 = vmatpush1.bf16.msra.mxu0 0
      %1264 = vmatprep.subr.bf16.mxu0 0
      %1265 = vmatpush1.bf16.msra.mxu0 0
      %1266 = vmatprep.subr.bf16.mxu0 0
      %1267 = vmatpush1.bf16.msra.mxu0 0
      %1268 = vmatprep.subr.bf16.mxu0 0
      %1269 = vmatpush1.bf16.msra.mxu0 0
      %1270 = vmatprep.subr.bf16.mxu0 0
      %1271 = vmatpush1.bf16.msra.mxu0 0
      %1272 = vmatprep.subr.bf16.mxu0 0
      %1273 = vmatpush1.bf16.msra.mxu0 0
      %1274 = vmatprep.subr.bf16.mxu0 0
      %1275 = vmatpush1.bf16.msra.mxu0 0
      %1276 = vmatprep.subr.bf16.mxu0 0
      %1277 = vmatpush1.bf16.msra.mxu0 0
      %1278 = vmatprep.subr.bf16.mxu0 0
      %1279 = vmatpush1.bf16.msra.mxu0 0
      %1280 = vmatprep.subr.bf16.mxu0 0
      %1281 = vmatpush1.bf16.msra.mxu0 0
      %1282 = vmatprep.subr.bf16.mxu0 0
      %1283 = vmatpush1.bf16.msra.mxu0 0
      %1284 = vmatprep.subr.bf16.mxu0 0
      %1285 = vmatpush1.bf16.msra.mxu0 0
      %1286 = vmatprep.mubr.bf16.mxu0 0
      %1287 = vmatmul.mubr.bf16.gmra.mrb[0].mxu0 %v1243
      %v1288 = vpop.f32.mrb[0].mxu0
      %v1289 = vadd.f32 0.0, %v1288
      %v1290 = vpop.f32.mrb[0].mxu0
      %v1291 = vadd.f32 0.0, %v1290
      %v1292 = vpop.f32.mrb[0].mxu0
      %v1293 = vadd.f32 0.0, %v1292
      %v1294 = vpop.f32.mrb[0].mxu0
      %v1295 = vadd.f32 0.0, %v1294
      %1296 = vmatprep.mubr.bf16.mxu0 0
      %1297 = vmatmul.mubr.bf16.gmra.mrb[0].mxu0 %v1246
      %v1298 = vpop.f32.mrb[0].mxu0
      %v1299 = vadd.f32 0.0, %v1298
      %v1300 = vpop.f32.mrb[0].mxu0
      %v1301 = vadd.f32 0.0, %v1300
      %v1302 = vpop.f32.mrb[0].mxu0
      %v1303 = vadd.f32 0.0, %v1302
      %v1304 = vpop.f32.mrb[0].mxu0
      %v1305 = vadd.f32 0.0, %v1304
      %1306 = vdwg.mxu0
      %v1307 = vpack.c.bf16 %v1289, %v1289
      %v1308 = vpack.c.bf16 %v1291, %v1291
      %v1309 = vpack.c.bf16 %v1293, %v1293
      %v1310 = vpack.c.bf16 %v1295, %v1295
      %v1439 = vunpack.c.l.b16 %v1101
      %v1440 = vunpack.c.h.b16 %v1101
      %v1441 = vunpack.c.l.b16 %v1102
      %v1442 = vunpack.c.h.b16 %v1102
      %v1443 = vunpack.c.l.b16 %v1103
      %v1444 = vunpack.c.h.b16 %v1103
      %v1445 = vunpack.c.l.b16 %v1104
      %v1446 = vunpack.c.h.b16 %v1104
      %v1447 = vunpack.c.l.b16 %v1105
      %v1448 = vunpack.c.h.b16 %v1105
      %v1449 = vunpack.c.l.b16 %v1106
      %v1450 = vunpack.c.h.b16 %v1106
      %v1451 = vunpack.c.l.b16 %v1107
      %v1452 = vunpack.c.h.b16 %v1107
      %v1453 = vunpack.c.l.b16 %v1108
      %v1454 = vunpack.c.h.b16 %v1108
      %v1455 = vunpack.c.l.b16 %v1109
      %v1456 = vunpack.c.h.b16 %v1109
      %v1457 = vunpack.c.l.b16 %v1110
      %v1458 = vunpack.c.h.b16 %v1110
      %v1459 = vunpack.c.l.b16 %v1111
      %v1460 = vunpack.c.h.b16 %v1111
      %v1461 = vunpack.c.l.b16 %v1112
      %v1462 = vunpack.c.h.b16 %v1112
      %v1463 = vunpack.c.l.b16 %v1113
      %v1464 = vunpack.c.h.b16 %v1113
      %v1465 = vunpack.c.l.b16 %v1114
      %v1466 = vunpack.c.h.b16 %v1114
      %v1467 = vunpack.c.l.b16 %v1115
      %v1468 = vunpack.c.h.b16 %v1115
      %v1469 = vunpack.c.l.b16 %v1116
      %v1470 = vunpack.c.h.b16 %v1116
      %v1471 = vunpack.c.l.b16 %v1117
      %v1472 = vunpack.c.h.b16 %v1117
      %v1473 = vunpack.c.l.b16 %v1118
      %v1474 = vunpack.c.h.b16 %v1118
      %v1475 = vunpack.c.l.b16 %v1119
      %v1476 = vunpack.c.h.b16 %v1119
      %v1477 = vunpack.c.l.b16 %v1120
      %v1478 = vunpack.c.h.b16 %v1120
      %v1479 = vunpack.c.l.b16 %v1121
      %v1480 = vunpack.c.h.b16 %v1121
      %v1481 = vunpack.c.l.b16 %v1122
      %v1482 = vunpack.c.h.b16 %v1122
      %v1483 = vunpack.c.l.b16 %v1123
      %v1484 = vunpack.c.h.b16 %v1123
      %v1485 = vunpack.c.l.b16 %v1124
      %v1486 = vunpack.c.h.b16 %v1124
      %v1487 = vunpack.c.l.b16 %v1125
      %v1488 = vunpack.c.h.b16 %v1125
      %v1489 = vunpack.c.l.b16 %v1126
      %v1490 = vunpack.c.h.b16 %v1126
      %v1491 = vunpack.c.l.b16 %v1127
      %v1492 = vunpack.c.h.b16 %v1127
      %v1493 = vunpack.c.l.b16 %v1128
      %v1494 = vunpack.c.h.b16 %v1128
      %v1495 = vunpack.c.l.b16 %v1129
      %v1496 = vunpack.c.h.b16 %v1129
      %v1497 = vunpack.c.l.b16 %v1130
      %v1498 = vunpack.c.h.b16 %v1130
      %v1499 = vunpack.c.l.b16 %v1131
      %v1500 = vunpack.c.h.b16 %v1131
      %v1501 = vunpack.c.l.b16 %v1132
      %v1502 = vunpack.c.h.b16 %v1132
      %v1503 = vunpack.c.l.b16 %v1133
      %v1504 = vunpack.c.h.b16 %v1133
      %v1505 = vunpack.c.l.b16 %v1134
      %v1506 = vunpack.c.h.b16 %v1134
      %v1507 = vunpack.c.l.b16 %v1135
      %v1508 = vunpack.c.h.b16 %v1135
      %v1509 = vunpack.c.l.b16 %v1136
      %v1510 = vunpack.c.h.b16 %v1136
      %v1511 = vunpack.c.l.b16 %v1137
      %v1512 = vunpack.c.h.b16 %v1137
      %v1513 = vunpack.c.l.b16 %v1138
      %v1514 = vunpack.c.h.b16 %v1138
      %v1515 = vunpack.c.l.b16 %v1139
      %v1516 = vunpack.c.h.b16 %v1139
      %v1517 = vunpack.c.l.b16 %v1140
      %v1518 = vunpack.c.h.b16 %v1140
      %v1519 = vunpack.c.l.b16 %v1141
      %v1520 = vunpack.c.h.b16 %v1141
      %v1521 = vunpack.c.l.b16 %v1142
      %v1522 = vunpack.c.h.b16 %v1142
      %v1523 = vunpack.c.l.b16 %v1143
      %v1524 = vunpack.c.h.b16 %v1143
      %v1525 = vunpack.c.l.b16 %v1144
      %v1526 = vunpack.c.h.b16 %v1144
      %v1527 = vunpack.c.l.b16 %v1145
      %v1528 = vunpack.c.h.b16 %v1145
      %v1529 = vunpack.c.l.b16 %v1146
      %v1530 = vunpack.c.h.b16 %v1146
      %v1531 = vunpack.c.l.b16 %v1147
      %v1532 = vunpack.c.h.b16 %v1147
      %v1533 = vunpack.c.l.b16 %v1148
      %v1534 = vunpack.c.h.b16 %v1148
      %v1535 = vunpack.c.l.b16 %v1149
      %v1536 = vunpack.c.h.b16 %v1149
      %v1537 = vunpack.c.l.b16 %v1150
      %v1538 = vunpack.c.h.b16 %v1150
      %v1539 = vunpack.c.l.b16 %v1151
      %v1540 = vunpack.c.h.b16 %v1151
      %v1541 = vunpack.c.l.b16 %v1152
      %v1542 = vunpack.c.h.b16 %v1152
      %v1543 = vunpack.c.l.b16 %v1153
      %v1544 = vunpack.c.h.b16 %v1153
      %v1545 = vunpack.c.l.b16 %v1154
      %v1546 = vunpack.c.h.b16 %v1154
      %v1547 = vunpack.c.l.b16 %v1155
      %v1548 = vunpack.c.h.b16 %v1155
      %v1549 = vunpack.c.l.b16 %v1156
      %v1550 = vunpack.c.h.b16 %v1156
      %v1551 = vunpack.c.l.b16 %v1157
      %v1552 = vunpack.c.h.b16 %v1157
      %v1553 = vunpack.c.l.b16 %v1158
      %v1554 = vunpack.c.h.b16 %v1158
      %v1555 = vunpack.c.l.b16 %v1159
      %v1556 = vunpack.c.h.b16 %v1159
      %v1557 = vunpack.c.l.b16 %v1160
      %v1558 = vunpack.c.h.b16 %v1160
      %v1559 = vunpack.c.l.b16 %v1161
      %v1560 = vunpack.c.h.b16 %v1161
      %v1561 = vunpack.c.l.b16 %v1162
      %v1562 = vunpack.c.h.b16 %v1162
      %v1563 = vunpack.c.l.b16 %v1163
      %v1564 = vunpack.c.h.b16 %v1163
      %v1565 = vunpack.c.l.b16 %v1164
      %v1566 = vunpack.c.h.b16 %v1164
      %v1567 = vunpack.c.l.b16 %v1165
      %v1568 = vunpack.c.h.b16 %v1165
      %v1569 = vunpack.c.l.b16 %v1166
      %v1570 = vunpack.c.h.b16 %v1166
      %v1571 = vunpack.c.l.b16 %v1167
      %v1572 = vunpack.c.h.b16 %v1167
      %v1573 = vunpack.c.l.b16 %v1168
      %v1574 = vunpack.c.h.b16 %v1168
      %v1575 = vunpack.c.l.b16 %v1169
      %v1576 = vunpack.c.h.b16 %v1169
      %v1577 = vunpack.c.l.b16 %v1170
      %v1578 = vunpack.c.h.b16 %v1170
      %v1579 = vunpack.c.l.b16 %v1171
      %v1580 = vunpack.c.h.b16 %v1171
      %v1581 = vunpack.c.l.b16 %v1172
      %v1582 = vunpack.c.h.b16 %v1172
      %v1583 = vunpack.c.l.b16 %v1173
      %v1584 = vunpack.c.h.b16 %v1173
      %v1585 = vunpack.c.l.b16 %v1174
      %v1586 = vunpack.c.h.b16 %v1174
      %v1587 = vunpack.c.l.b16 %v1175
      %v1588 = vunpack.c.h.b16 %v1175
      %v1589 = vunpack.c.l.b16 %v1176
      %v1590 = vunpack.c.h.b16 %v1176
      %v1591 = vunpack.c.l.b16 %v1177
      %v1592 = vunpack.c.h.b16 %v1177
      %v1593 = vunpack.c.l.b16 %v1178
      %v1594 = vunpack.c.h.b16 %v1178
      %v1595 = vunpack.c.l.b16 %v1179
      %v1596 = vunpack.c.h.b16 %v1179
      %v1597 = vunpack.c.l.b16 %v1180
      %v1598 = vunpack.c.h.b16 %v1180
      %v1599 = vunpack.c.l.b16 %v1181
      %v1600 = vunpack.c.h.b16 %v1181
      %v1601 = vunpack.c.l.b16 %v1182
      %v1602 = vunpack.c.h.b16 %v1182
      %v1603 = vunpack.c.l.b16 %v1183
      %v1604 = vunpack.c.h.b16 %v1183
      %v1605 = vunpack.c.l.b16 %v1184
      %v1606 = vunpack.c.h.b16 %v1184
      %v1607 = vunpack.c.l.b16 %v1185
      %v1608 = vunpack.c.h.b16 %v1185
      %v1609 = vunpack.c.l.b16 %v1186
      %v1610 = vunpack.c.h.b16 %v1186
      %v1611 = vunpack.c.l.b16 %v1187
      %v1612 = vunpack.c.h.b16 %v1187
      %v1613 = vunpack.c.l.b16 %v1188
      %v1614 = vunpack.c.h.b16 %v1188
      %v1615 = vunpack.c.l.b16 %v1189
      %v1616 = vunpack.c.h.b16 %v1189
      %v1617 = vunpack.c.l.b16 %v1190
      %v1618 = vunpack.c.h.b16 %v1190
      %v1619 = vunpack.c.l.b16 %v1191
      %v1620 = vunpack.c.h.b16 %v1191
      %v1621 = vunpack.c.l.b16 %v1192
      %v1622 = vunpack.c.h.b16 %v1192
      %v1623 = vunpack.c.l.b16 %v1193
      %v1624 = vunpack.c.h.b16 %v1193
      %v1625 = vunpack.c.l.b16 %v1194
      %v1626 = vunpack.c.h.b16 %v1194
      %v1627 = vunpack.c.l.b16 %v1195
      %v1628 = vunpack.c.h.b16 %v1195
      %v1629 = vunpack.c.l.b16 %v1196
      %v1630 = vunpack.c.h.b16 %v1196
      %v1631 = vunpack.c.l.b16 %v1197
      %v1632 = vunpack.c.h.b16 %v1197
      %v1633 = vunpack.c.l.b16 %v1198
      %v1634 = vunpack.c.h.b16 %v1198
      %v1635 = vunpack.c.l.b16 %v1199
      %v1636 = vunpack.c.h.b16 %v1199
      %v1637 = vunpack.c.l.b16 %v1200
      %v1638 = vunpack.c.h.b16 %v1200
      %v1639 = vunpack.c.l.b16 %v1201
      %v1640 = vunpack.c.h.b16 %v1201
      %v1641 = vunpack.c.l.b16 %v1202
      %v1642 = vunpack.c.h.b16 %v1202
      %v1643 = vunpack.c.l.b16 %v1203
      %v1644 = vunpack.c.h.b16 %v1203
      %v1645 = vunpack.c.l.b16 %v1204
      %v1646 = vunpack.c.h.b16 %v1204
      %v1647 = vunpack.c.l.b16 %v1205
      %v1648 = vunpack.c.h.b16 %v1205
      %v1649 = vunpack.c.l.b16 %v1206
      %v1650 = vunpack.c.h.b16 %v1206
      %v1651 = vunpack.c.l.b16 %v1207
      %v1652 = vunpack.c.h.b16 %v1207
      %v1653 = vunpack.c.l.b16 %v1208
      %v1654 = vunpack.c.h.b16 %v1208
      %v1655 = vunpack.c.l.b16 %v1209
      %v1656 = vunpack.c.h.b16 %v1209
      %v1657 = vunpack.c.l.b16 %v1210
      %v1658 = vunpack.c.h.b16 %v1210
      %v1659 = vunpack.c.l.b16 %v1211
      %v1660 = vunpack.c.h.b16 %v1211
      %v1661 = vunpack.c.l.b16 %v1212
      %v1662 = vunpack.c.h.b16 %v1212
      %v1663 = vunpack.c.l.b16 %v1213
      %v1664 = vunpack.c.h.b16 %v1213
      %v1665 = vunpack.c.l.b16 %v1214
      %v1666 = vunpack.c.h.b16 %v1214
      %v1667 = vunpack.c.l.b16 %v1215
      %v1668 = vunpack.c.h.b16 %v1215
      %v1669 = vunpack.c.l.b16 %v1216
      %v1670 = vunpack.c.h.b16 %v1216
      %v1671 = vunpack.c.l.b16 %v1217
      %v1672 = vunpack.c.h.b16 %v1217
      %v1673 = vunpack.c.l.b16 %v1218
      %v1674 = vunpack.c.h.b16 %v1218
      %v1675 = vunpack.c.l.b16 %v1219
      %v1676 = vunpack.c.h.b16 %v1219
      %v1677 = vunpack.c.l.b16 %v1220
      %v1678 = vunpack.c.h.b16 %v1220
      %v1679 = vunpack.c.l.b16 %v1221
      %v1680 = vunpack.c.h.b16 %v1221
      %v1681 = vunpack.c.l.b16 %v1222
      %v1682 = vunpack.c.h.b16 %v1222
      %v1683 = vunpack.c.l.b16 %v1223
      %v1684 = vunpack.c.h.b16 %v1223
      %v1685 = vunpack.c.l.b16 %v1224
      %v1686 = vunpack.c.h.b16 %v1224
      %v1687 = vunpack.c.l.b16 %v1225
      %v1688 = vunpack.c.h.b16 %v1225
      %v1689 = vunpack.c.l.b16 %v1226
      %v1690 = vunpack.c.h.b16 %v1226
      %v1691 = vunpack.c.l.b16 %v1227
      %v1692 = vunpack.c.h.b16 %v1227
      %v1693 = vunpack.c.l.b16 %v1228
      %v1694 = vunpack.c.h.b16 %v1228
      %v1695 = vpack.c.b16 %v1443, %v1439
      %v1696 = vpack.c.b16 %v1444, %v1440
      %v1697 = vpack.c.b16 %v1445, %v1441
      %v1698 = vpack.c.b16 %v1446, %v1442
      %v1699 = vpack.c.b16 %v1451, %v1447
      %v1700 = vpack.c.b16 %v1452, %v1448
      %v1701 = vpack.c.b16 %v1453, %v1449
      %v1702 = vpack.c.b16 %v1454, %v1450
      %v1703 = vpack.c.b16 %v1459, %v1455
      %v1704 = vpack.c.b16 %v1460, %v1456
      %v1705 = vpack.c.b16 %v1461, %v1457
      %v1706 = vpack.c.b16 %v1462, %v1458
      %v1707 = vpack.c.b16 %v1467, %v1463
      %v1708 = vpack.c.b16 %v1468, %v1464
      %v1709 = vpack.c.b16 %v1469, %v1465
      %v1710 = vpack.c.b16 %v1470, %v1466
      %v1711 = vpack.c.b16 %v1475, %v1471
      %v1712 = vpack.c.b16 %v1476, %v1472
      %v1713 = vpack.c.b16 %v1477, %v1473
      %v1714 = vpack.c.b16 %v1478, %v1474
      %v1715 = vpack.c.b16 %v1483, %v1479
      %v1716 = vpack.c.b16 %v1484, %v1480
      %v1717 = vpack.c.b16 %v1485, %v1481
      %v1718 = vpack.c.b16 %v1486, %v1482
      %v1719 = vpack.c.b16 %v1491, %v1487
      %v1720 = vpack.c.b16 %v1492, %v1488
      %v1721 = vpack.c.b16 %v1493, %v1489
      %v1722 = vpack.c.b16 %v1494, %v1490
      %v1723 = vpack.c.b16 %v1499, %v1495
      %v1724 = vpack.c.b16 %v1500, %v1496
      %v1725 = vpack.c.b16 %v1501, %v1497
      %v1726 = vpack.c.b16 %v1502, %v1498
      %v1727 = vpack.c.b16 %v1507, %v1503
      %v1728 = vpack.c.b16 %v1508, %v1504
      %v1729 = vpack.c.b16 %v1509, %v1505
      %v1730 = vpack.c.b16 %v1510, %v1506
      %v1731 = vpack.c.b16 %v1515, %v1511
      %v1732 = vpack.c.b16 %v1516, %v1512
      %v1733 = vpack.c.b16 %v1517, %v1513
      %v1734 = vpack.c.b16 %v1518, %v1514
      %v1735 = vpack.c.b16 %v1523, %v1519
      %v1736 = vpack.c.b16 %v1524, %v1520
      %v1737 = vpack.c.b16 %v1525, %v1521
      %v1738 = vpack.c.b16 %v1526, %v1522
      %v1739 = vpack.c.b16 %v1531, %v1527
      %v1740 = vpack.c.b16 %v1532, %v1528
      %v1741 = vpack.c.b16 %v1533, %v1529
      %v1742 = vpack.c.b16 %v1534, %v1530
      %v1743 = vpack.c.b16 %v1539, %v1535
      %v1744 = vpack.c.b16 %v1540, %v1536
      %v1745 = vpack.c.b16 %v1541, %v1537
      %v1746 = vpack.c.b16 %v1542, %v1538
      %v1747 = vpack.c.b16 %v1547, %v1543
      %v1748 = vpack.c.b16 %v1548, %v1544
      %v1749 = vpack.c.b16 %v1549, %v1545
      %v1750 = vpack.c.b16 %v1550, %v1546
      %v1751 = vpack.c.b16 %v1555, %v1551
      %v1752 = vpack.c.b16 %v1556, %v1552
      %v1753 = vpack.c.b16 %v1557, %v1553
      %v1754 = vpack.c.b16 %v1558, %v1554
      %v1755 = vpack.c.b16 %v1563, %v1559
      %v1756 = vpack.c.b16 %v1564, %v1560
      %v1757 = vpack.c.b16 %v1565, %v1561
      %v1758 = vpack.c.b16 %v1566, %v1562
      %v1759 = vpack.c.b16 %v1571, %v1567
      %v1760 = vpack.c.b16 %v1572, %v1568
      %v1761 = vpack.c.b16 %v1573, %v1569
      %v1762 = vpack.c.b16 %v1574, %v1570
      %v1763 = vpack.c.b16 %v1579, %v1575
      %v1764 = vpack.c.b16 %v1580, %v1576
      %v1765 = vpack.c.b16 %v1581, %v1577
      %v1766 = vpack.c.b16 %v1582, %v1578
      %v1767 = vpack.c.b16 %v1587, %v1583
      %v1768 = vpack.c.b16 %v1588, %v1584
      %v1769 = vpack.c.b16 %v1589, %v1585
      %v1770 = vpack.c.b16 %v1590, %v1586
      %v1771 = vpack.c.b16 %v1595, %v1591
      %v1772 = vpack.c.b16 %v1596, %v1592
      %v1773 = vpack.c.b16 %v1597, %v1593
      %v1774 = vpack.c.b16 %v1598, %v1594
      %v1775 = vpack.c.b16 %v1603, %v1599
      %v1776 = vpack.c.b16 %v1604, %v1600
      %v1777 = vpack.c.b16 %v1605, %v1601
      %v1778 = vpack.c.b16 %v1606, %v1602
      %v1779 = vpack.c.b16 %v1611, %v1607
      %v1780 = vpack.c.b16 %v1612, %v1608
      %v1781 = vpack.c.b16 %v1613, %v1609
      %v1782 = vpack.c.b16 %v1614, %v1610
      %v1783 = vpack.c.b16 %v1619, %v1615
      %v1784 = vpack.c.b16 %v1620, %v1616
      %v1785 = vpack.c.b16 %v1621, %v1617
      %v1786 = vpack.c.b16 %v1622, %v1618
      %v1787 = vpack.c.b16 %v1627, %v1623
      %v1788 = vpack.c.b16 %v1628, %v1624
      %v1789 = vpack.c.b16 %v1629, %v1625
      %v1790 = vpack.c.b16 %v1630, %v1626
      %v1791 = vpack.c.b16 %v1635, %v1631
      %v1792 = vpack.c.b16 %v1636, %v1632
      %v1793 = vpack.c.b16 %v1637, %v1633
      %v1794 = vpack.c.b16 %v1638, %v1634
      %v1795 = vpack.c.b16 %v1643, %v1639
      %v1796 = vpack.c.b16 %v1644, %v1640
      %v1797 = vpack.c.b16 %v1645, %v1641
      %v1798 = vpack.c.b16 %v1646, %v1642
      %v1799 = vpack.c.b16 %v1651, %v1647
      %v1800 = vpack.c.b16 %v1652, %v1648
      %v1801 = vpack.c.b16 %v1653, %v1649
      %v1802 = vpack.c.b16 %v1654, %v1650
      %v1803 = vpack.c.b16 %v1659, %v1655
      %v1804 = vpack.c.b16 %v1660, %v1656
      %v1805 = vpack.c.b16 %v1661, %v1657
      %v1806 = vpack.c.b16 %v1662, %v1658
      %v1807 = vpack.c.b16 %v1667, %v1663
      %v1808 = vpack.c.b16 %v1668, %v1664
      %v1809 = vpack.c.b16 %v1669, %v1665
      %v1810 = vpack.c.b16 %v1670, %v1666
      %v1811 = vpack.c.b16 %v1675, %v1671
      %v1812 = vpack.c.b16 %v1676, %v1672
      %v1813 = vpack.c.b16 %v1677, %v1673
      %v1814 = vpack.c.b16 %v1678, %v1674
      %v1815 = vpack.c.b16 %v1683, %v1679
      %v1816 = vpack.c.b16 %v1684, %v1680
      %v1817 = vpack.c.b16 %v1685, %v1681
      %v1818 = vpack.c.b16 %v1686, %v1682
      %v1819 = vpack.c.b16 %v1691, %v1687
      %v1820 = vpack.c.b16 %v1692, %v1688
      %v1821 = vpack.c.b16 %v1693, %v1689
      %v1822 = vpack.c.b16 %v1694, %v1690
      %1951 = vmatprep.subr.bf16.mxu0 %v1696
      %1952 = vmatpush1.bf16.msra.mxu0 %v1695
      %1953 = vmatprep.subr.bf16.mxu0 %v1700
      %1954 = vmatpush1.bf16.msra.mxu0 %v1699
      %1955 = vmatprep.subr.bf16.mxu0 %v1704
      %1956 = vmatpush1.bf16.msra.mxu0 %v1703
      %1957 = vmatprep.subr.bf16.mxu0 %v1708
      %1958 = vmatpush1.bf16.msra.mxu0 %v1707
      %1959 = vmatprep.subr.bf16.mxu0 %v1712
      %1960 = vmatpush1.bf16.msra.mxu0 %v1711
      %1961 = vmatprep.subr.bf16.mxu0 %v1716
      %1962 = vmatpush1.bf16.msra.mxu0 %v1715
      %1963 = vmatprep.subr.bf16.mxu0 %v1720
      %1964 = vmatpush1.bf16.msra.mxu0 %v1719
      %1965 = vmatprep.subr.bf16.mxu0 %v1724
      %1966 = vmatpush1.bf16.msra.mxu0 %v1723
      %1967 = vmatprep.subr.bf16.mxu0 %v1728
      %1968 = vmatpush1.bf16.msra.mxu0 %v1727
      %1969 = vmatprep.subr.bf16.mxu0 %v1732
      %1970 = vmatpush1.bf16.msra.mxu0 %v1731
      %1971 = vmatprep.subr.bf16.mxu0 %v1736
      %1972 = vmatpush1.bf16.msra.mxu0 %v1735
      %1973 = vmatprep.subr.bf16.mxu0 %v1740
      %1974 = vmatpush1.bf16.msra.mxu0 %v1739
      %1975 = vmatprep.subr.bf16.mxu0 %v1744
      %1976 = vmatpush1.bf16.msra.mxu0 %v1743
      %1977 = vmatprep.subr.bf16.mxu0 %v1748
      %1978 = vmatpush1.bf16.msra.mxu0 %v1747
      %1979 = vmatprep.subr.bf16.mxu0 %v1752
      %1980 = vmatpush1.bf16.msra.mxu0 %v1751
      %1981 = vmatprep.subr.bf16.mxu0 %v1756
      %1982 = vmatpush1.bf16.msra.mxu0 %v1755
      %1983 = vmatprep.mubr.bf16.mxu0 %v1308
      %1984 = vmatmul.mubr.bf16.gmra.mrb[0].mxu0 %v1307
      %v1985 = vpop.f32.mrb[0].mxu0
      %v1986 = vadd.f32 0.0, %v1985
      %v1987 = vpop.f32.mrb[0].mxu0
      %v1988 = vadd.f32 0.0, %v1987
      %v1989 = vpop.f32.mrb[0].mxu0
      %v1990 = vpop.f32.mrb[0].mxu0
      %1991 = vdwg.mxu0
      %1992 = vmatprep.subr.bf16.mxu0 %v1760
      %1993 = vmatpush1.bf16.msra.mxu0 %v1759
      %1994 = vmatprep.subr.bf16.mxu0 %v1764
      %1995 = vmatpush1.bf16.msra.mxu0 %v1763
      %1996 = vmatprep.subr.bf16.mxu0 %v1768
      %1997 = vmatpush1.bf16.msra.mxu0 %v1767
      %1998 = vmatprep.subr.bf16.mxu0 %v1772
      %1999 = vmatpush1.bf16.msra.mxu0 %v1771
      %2000 = vmatprep.subr.bf16.mxu0 %v1776
      %2001 = vmatpush1.bf16.msra.mxu0 %v1775
      %2002 = vmatprep.subr.bf16.mxu0 %v1780
      %2003 = vmatpush1.bf16.msra.mxu0 %v1779
      %2004 = vmatprep.subr.bf16.mxu0 %v1784
      %2005 = vmatpush1.bf16.msra.mxu0 %v1783
      %2006 = vmatprep.subr.bf16.mxu0 %v1788
      %2007 = vmatpush1.bf16.msra.mxu0 %v1787
      %2008 = vmatprep.subr.bf16.mxu0 %v1792
      %2009 = vmatpush1.bf16.msra.mxu0 %v1791
      %2010 = vmatprep.subr.bf16.mxu0 %v1796
      %2011 = vmatpush1.bf16.msra.mxu0 %v1795
      %2012 = vmatprep.subr.bf16.mxu0 %v1800
      %2013 = vmatpush1.bf16.msra.mxu0 %v1799
      %2014 = vmatprep.subr.bf16.mxu0 %v1804
      %2015 = vmatpush1.bf16.msra.mxu0 %v1803
      %2016 = vmatprep.subr.bf16.mxu0 %v1808
      %2017 = vmatpush1.bf16.msra.mxu0 %v1807
      %2018 = vmatprep.subr.bf16.mxu0 %v1812
      %2019 = vmatpush1.bf16.msra.mxu0 %v1811
      %2020 = vmatprep.subr.bf16.mxu0 %v1816
      %2021 = vmatpush1.bf16.msra.mxu0 %v1815
      %2022 = vmatprep.subr.bf16.mxu0 %v1820
      %2023 = vmatpush1.bf16.msra.mxu0 %v1819
      %2024 = vmatprep.mubr.bf16.mxu0 %v1310
      %2025 = vmatmul.mubr.bf16.gmra.mrb[0].mxu0 %v1309
      %v2026 = vpop.f32.mrb[0].mxu0
      %v2027 = vadd.f32 %v1986, %v2026
      %v2028 = vpop.f32.mrb[0].mxu0
      %v2029 = vadd.f32 %v1988, %v2028
      %v2030 = vpop.f32.mrb[0].mxu0
      %v2031 = vpop.f32.mrb[0].mxu0
      %2032 = vdwg.mxu0
      %2033 = vmatprep.subr.bf16.mxu0 %v1698
      %2034 = vmatpush1.bf16.msra.mxu0 %v1697
      %2035 = vmatprep.subr.bf16.mxu0 %v1702
      %2036 = vmatpush1.bf16.msra.mxu0 %v1701
      %2037 = vmatprep.subr.bf16.mxu0 %v1706
      %2038 = vmatpush1.bf16.msra.mxu0 %v1705
      %2039 = vmatprep.subr.bf16.mxu0 %v1710
      %2040 = vmatpush1.bf16.msra.mxu0 %v1709
      %2041 = vmatprep.subr.bf16.mxu0 %v1714
      %2042 = vmatpush1.bf16.msra.mxu0 %v1713
      %2043 = vmatprep.subr.bf16.mxu0 %v1718
      %2044 = vmatpush1.bf16.msra.mxu0 %v1717
      %2045 = vmatprep.subr.bf16.mxu0 %v1722
      %2046 = vmatpush1.bf16.msra.mxu0 %v1721
      %2047 = vmatprep.subr.bf16.mxu0 %v1726
      %2048 = vmatpush1.bf16.msra.mxu0 %v1725
      %2049 = vmatprep.subr.bf16.mxu0 %v1730
      %2050 = vmatpush1.bf16.msra.mxu0 %v1729
      %2051 = vmatprep.subr.bf16.mxu0 %v1734
      %2052 = vmatpush1.bf16.msra.mxu0 %v1733
      %2053 = vmatprep.subr.bf16.mxu0 %v1738
      %2054 = vmatpush1.bf16.msra.mxu0 %v1737
      %2055 = vmatprep.subr.bf16.mxu0 %v1742
      %2056 = vmatpush1.bf16.msra.mxu0 %v1741
      %2057 = vmatprep.subr.bf16.mxu0 %v1746
      %2058 = vmatpush1.bf16.msra.mxu0 %v1745
      %2059 = vmatprep.subr.bf16.mxu0 %v1750
      %2060 = vmatpush1.bf16.msra.mxu0 %v1749
      %2061 = vmatprep.subr.bf16.mxu0 %v1754
      %2062 = vmatpush1.bf16.msra.mxu0 %v1753
      %2063 = vmatprep.subr.bf16.mxu0 %v1758
      %2064 = vmatpush1.bf16.msra.mxu0 %v1757
      %2065 = vmatprep.mubr.bf16.mxu0 %v1308
      %2066 = vmatmul.mubr.bf16.gmra.mrb[0].mxu0 %v1307
      %v2067 = vpop.f32.mrb[0].mxu0
      %v2068 = vadd.f32 0.0, %v2067
      %v2069 = vpop.f32.mrb[0].mxu0
      %v2070 = vadd.f32 0.0, %v2069
      %v2071 = vpop.f32.mrb[0].mxu0
      %v2072 = vpop.f32.mrb[0].mxu0
      %2073 = vdwg.mxu0
      %2074 = vmatprep.subr.bf16.mxu0 %v1762
      %2075 = vmatpush1.bf16.msra.mxu0 %v1761
      %2076 = vmatprep.subr.bf16.mxu0 %v1766
      %2077 = vmatpush1.bf16.msra.mxu0 %v1765
      %2078 = vmatprep.subr.bf16.mxu0 %v1770
      %2079 = vmatpush1.bf16.msra.mxu0 %v1769
      %2080 = vmatprep.subr.bf16.mxu0 %v1774
      %2081 = vmatpush1.bf16.msra.mxu0 %v1773
      %2082 = vmatprep.subr.bf16.mxu0 %v1778
      %2083 = vmatpush1.bf16.msra.mxu0 %v1777
      %2084 = vmatprep.subr.bf16.mxu0 %v1782
      %2085 = vmatpush1.bf16.msra.mxu0 %v1781
      %2086 = vmatprep.subr.bf16.mxu0 %v1786
      %2087 = vmatpush1.bf16.msra.mxu0 %v1785
      %2088 = vmatprep.subr.bf16.mxu0 %v1790
      %2089 = vmatpush1.bf16.msra.mxu0 %v1789
      %2090 = vmatprep.subr.bf16.mxu0 %v1794
      %2091 = vmatpush1.bf16.msra.mxu0 %v1793
      %2092 = vmatprep.subr.bf16.mxu0 %v1798
      %2093 = vmatpush1.bf16.msra.mxu0 %v1797
      %2094 = vmatprep.subr.bf16.mxu0 %v1802
      %2095 = vmatpush1.bf16.msra.mxu0 %v1801
      %2096 = vmatprep.subr.bf16.mxu0 %v1806
      %2097 = vmatpush1.bf16.msra.mxu0 %v1805
      %2098 = vmatprep.subr.bf16.mxu0 %v1810
      %2099 = vmatpush1.bf16.msra.mxu0 %v1809
      %2100 = vmatprep.subr.bf16.mxu0 %v1814
      %2101 = vmatpush1.bf16.msra.mxu0 %v1813
      %2102 = vmatprep.subr.bf16.mxu0 %v1818
      %2103 = vmatpush1.bf16.msra.mxu0 %v1817
      %2104 = vmatprep.subr.bf16.mxu0 %v1822
      %2105 = vmatpush1.bf16.msra.mxu0 %v1821
      %2106 = vmatprep.mubr.bf16.mxu0 %v1310
      %2107 = vmatmul.mubr.bf16.gmra.mrb[0].mxu0 %v1309
      %v2108 = vpop.f32.mrb[0].mxu0
      %v2109 = vadd.f32 %v2068, %v2108
      %v2110 = vpop.f32.mrb[0].mxu0
      %v2111 = vadd.f32 %v2070, %v2110
      %v2112 = vpop.f32.mrb[0].mxu0
      %v2113 = vpop.f32.mrb[0].mxu0
      %2114 = vdwg.mxu0
      %vm2115 = vcmask 261120
      %2116 = vst.msk [vmem:[#allocation3] sm:$0xff] %vm2115, %v2027
      %2118 = vrot.lane.b32.xlu0 %v2027, 32
      %v2119 = vpop.permute.xlu0 %2118
      %vm2121 = vcmask 785920
      %2122 = vst.msk [vmem:[#allocation3] sm:$0xff] %vm2121, %v2119
      %2123 = vrot.lane.b32.xlu0 %v2027, 64
      %v2124 = vpop.permute.xlu0 %2123
      %2126 = vst.msk [vmem:[#allocation3 + $0x8] sm:$0xff] %vm2115, %v2124
      %2127 = vrot.lane.b32.xlu0 %v2027, 96
      %v2128 = vpop.permute.xlu0 %2127
      %2130 = vst.msk [vmem:[#allocation3 + $0x8] sm:$0xff] %vm2121, %v2128
      %2131 = vst.msk [vmem:[#allocation3 + $0x10] sm:$0xff] %vm2115, %v2029
      %2133 = vrot.lane.b32.xlu0 %v2029, 32
      %v2134 = vpop.permute.xlu0 %2133
      %2136 = vst.msk [vmem:[#allocation3 + $0x10] sm:$0xff] %vm2121, %v2134
      %2137 = vrot.lane.b32.xlu0 %v2029, 64
      %v2138 = vpop.permute.xlu0 %2137
      %2140 = vst.msk [vmem:[#allocation3 + $0x18] sm:$0xff] %vm2115, %v2138
      %2141 = vrot.lane.b32.xlu0 %v2029, 96
      %v2142 = vpop.permute.xlu0 %2141
      %2144 = vst.msk [vmem:[#allocation3 + $0x18] sm:$0xff] %vm2121, %v2142
      %2145 = vst.msk [vmem:[#allocation3 + $0x20] sm:$0xff] %vm2115, %v2109
      %2147 = vrot.lane.b32.xlu0 %v2109, 32
      %v2148 = vpop.permute.xlu0 %2147
      %2150 = vst.msk [vmem:[#allocation3 + $0x20] sm:$0xff] %vm2121, %v2148
      %2151 = vrot.lane.b32.xlu0 %v2109, 64
      %v2152 = vpop.permute.xlu0 %2151
      %2154 = vst.msk [vmem:[#allocation3 + $0x28] sm:$0xff] %vm2115, %v2152
      %2155 = vrot.lane.b32.xlu0 %v2109, 96
      %v2156 = vpop.permute.xlu0 %2155
      %2158 = vst.msk [vmem:[#allocation3 + $0x28] sm:$0xff] %vm2121, %v2156
      %2159 = vst.msk [vmem:[#allocation3 + $0x30] sm:$0xff] %vm2115, %v2111
      %2161 = vrot.lane.b32.xlu0 %v2111, 32
      %v2162 = vpop.permute.xlu0 %2161
      %2164 = vst.msk [vmem:[#allocation3 + $0x30] sm:$0xff] %vm2121, %v2162
      %2165 = vrot.lane.b32.xlu0 %v2111, 64
      %v2166 = vpop.permute.xlu0 %2165
      %2168 = vst.msk [vmem:[#allocation3 + $0x38] sm:$0xff] %vm2115, %v2166
      %2169 = vrot.lane.b32.xlu0 %v2111, 96
      %v2170 = vpop.permute.xlu0 %2169
      %2172 = vst.msk [vmem:[#allocation3 + $0x38] sm:$0xff] %vm2121, %v2170
      %v2173 = vpack.c.bf16 %v1299, %v1299
      %v2174 = vpack.c.bf16 %v1301, %v1301
      %v2175 = vpack.c.bf16 %v1303, %v1303
      %v2176 = vpack.c.bf16 %v1305, %v1305
      %2177 = vmatprep.subr.bf16.mxu0 %v1696
      %2178 = vmatpush1.bf16.msra.mxu0 %v1695
      %2179 = vmatprep.subr.bf16.mxu0 %v1700
      %2180 = vmatpush1.bf16.msra.mxu0 %v1699
      %2181 = vmatprep.subr.bf16.mxu0 %v1704
      %2182 = vmatpush1.bf16.msra.mxu0 %v1703
      %2183 = vmatprep.subr.bf16.mxu0 %v1708
      %2184 = vmatpush1.bf16.msra.mxu0 %v1707
      %2185 = vmatprep.subr.bf16.mxu0 %v1712
      %2186 = vmatpush1.bf16.msra.mxu0 %v1711
      %2187 = vmatprep.subr.bf16.mxu0 %v1716
      %2188 = vmatpush1.bf16.msra.mxu0 %v1715
      %2189 = vmatprep.subr.bf16.mxu0 %v1720
      %2190 = vmatpush1.bf16.msra.mxu0 %v1719
      %2191 = vmatprep.subr.bf16.mxu0 %v1724
      %2192 = vmatpush1.bf16.msra.mxu0 %v1723
      %2193 = vmatprep.subr.bf16.mxu0 %v1728
      %2194 = vmatpush1.bf16.msra.mxu0 %v1727
      %2195 = vmatprep.subr.bf16.mxu0 %v1732
      %2196 = vmatpush1.bf16.msra.mxu0 %v1731
      %2197 = vmatprep.subr.bf16.mxu0 %v1736
      %2198 = vmatpush1.bf16.msra.mxu0 %v1735
      %2199 = vmatprep.subr.bf16.mxu0 %v1740
      %2200 = vmatpush1.bf16.msra.mxu0 %v1739
      %2201 = vmatprep.subr.bf16.mxu0 %v1744
      %2202 = vmatpush1.bf16.msra.mxu0 %v1743
      %2203 = vmatprep.subr.bf16.mxu0 %v1748
      %2204 = vmatpush1.bf16.msra.mxu0 %v1747
      %2205 = vmatprep.subr.bf16.mxu0 %v1752
      %2206 = vmatpush1.bf16.msra.mxu0 %v1751
      %2207 = vmatprep.subr.bf16.mxu0 %v1756
      %2208 = vmatpush1.bf16.msra.mxu0 %v1755
      %2209 = vmatprep.mubr.bf16.mxu0 %v2174
      %2210 = vmatmul.mubr.bf16.gmra.mrb[0].mxu0 %v2173
      %v2211 = vpop.f32.mrb[0].mxu0
      %v2212 = vadd.f32 0.0, %v2211
      %v2213 = vpop.f32.mrb[0].mxu0
      %v2214 = vadd.f32 0.0, %v2213
      %v2215 = vpop.f32.mrb[0].mxu0
      %v2216 = vpop.f32.mrb[0].mxu0
      %2217 = vdwg.mxu0
      %2218 = vmatprep.subr.bf16.mxu0 %v1760
      %2219 = vmatpush1.bf16.msra.mxu0 %v1759
      %2220 = vmatprep.subr.bf16.mxu0 %v1764
      %2221 = vmatpush1.bf16.msra.mxu0 %v1763
      %2222 = vmatprep.subr.bf16.mxu0 %v1768
      %2223 = vmatpush1.bf16.msra.mxu0 %v1767
      %2224 = vmatprep.subr.bf16.mxu0 %v1772
      %2225 = vmatpush1.bf16.msra.mxu0 %v1771
      %2226 = vmatprep.subr.bf16.mxu0 %v1776
      %2227 = vmatpush1.bf16.msra.mxu0 %v1775
      %2228 = vmatprep.subr.bf16.mxu0 %v1780
      %2229 = vmatpush1.bf16.msra.mxu0 %v1779
      %2230 = vmatprep.subr.bf16.mxu0 %v1784
      %2231 = vmatpush1.bf16.msra.mxu0 %v1783
      %2232 = vmatprep.subr.bf16.mxu0 %v1788
      %2233 = vmatpush1.bf16.msra.mxu0 %v1787
      %2234 = vmatprep.subr.bf16.mxu0 %v1792
      %2235 = vmatpush1.bf16.msra.mxu0 %v1791
      %2236 = vmatprep.subr.bf16.mxu0 %v1796
      %2237 = vmatpush1.bf16.msra.mxu0 %v1795
      %2238 = vmatprep.subr.bf16.mxu0 %v1800
      %2239 = vmatpush1.bf16.msra.mxu0 %v1799
      %2240 = vmatprep.subr.bf16.mxu0 %v1804
      %2241 = vmatpush1.bf16.msra.mxu0 %v1803
      %2242 = vmatprep.subr.bf16.mxu0 %v1808
      %2243 = vmatpush1.bf16.msra.mxu0 %v1807
      %2244 = vmatprep.subr.bf16.mxu0 %v1812
      %2245 = vmatpush1.bf16.msra.mxu0 %v1811
      %2246 = vmatprep.subr.bf16.mxu0 %v1816
      %2247 = vmatpush1.bf16.msra.mxu0 %v1815
      %2248 = vmatprep.subr.bf16.mxu0 %v1820
      %2249 = vmatpush1.bf16.msra.mxu0 %v1819
      %2250 = vmatprep.mubr.bf16.mxu0 %v2176
      %2251 = vmatmul.mubr.bf16.gmra.mrb[0].mxu0 %v2175
      %v2252 = vpop.f32.mrb[0].mxu0
      %v2253 = vadd.f32 %v2212, %v2252
      %v2254 = vpop.f32.mrb[0].mxu0
      %v2255 = vadd.f32 %v2214, %v2254
      %v2256 = vpop.f32.mrb[0].mxu0
      %v2257 = vpop.f32.mrb[0].mxu0
      %2258 = vdwg.mxu0
      %2259 = vmatprep.subr.bf16.mxu0 %v1698
      %2260 = vmatpush1.bf16.msra.mxu0 %v1697
      %2261 = vmatprep.subr.bf16.mxu0 %v1702
      %2262 = vmatpush1.bf16.msra.mxu0 %v1701
      %2263 = vmatprep.subr.bf16.mxu0 %v1706
      %2264 = vmatpush1.bf16.msra.mxu0 %v1705
      %2265 = vmatprep.subr.bf16.mxu0 %v1710
      %2266 = vmatpush1.bf16.msra.mxu0 %v1709
      %2267 = vmatprep.subr.bf16.mxu0 %v1714
      %2268 = vmatpush1.bf16.msra.mxu0 %v1713
      %2269 = vmatprep.subr.bf16.mxu0 %v1718
      %2270 = vmatpush1.bf16.msra.mxu0 %v1717
      %2271 = vmatprep.subr.bf16.mxu0 %v1722
      %2272 = vmatpush1.bf16.msra.mxu0 %v1721
      %2273 = vmatprep.subr.bf16.mxu0 %v1726
      %2274 = vmatpush1.bf16.msra.mxu0 %v1725
      %2275 = vmatprep.subr.bf16.mxu0 %v1730
      %2276 = vmatpush1.bf16.msra.mxu0 %v1729
      %2277 = vmatprep.subr.bf16.mxu0 %v1734
      %2278 = vmatpush1.bf16.msra.mxu0 %v1733
      %2279 = vmatprep.subr.bf16.mxu0 %v1738
      %2280 = vmatpush1.bf16.msra.mxu0 %v1737
      %2281 = vmatprep.subr.bf16.mxu0 %v1742
      %2282 = vmatpush1.bf16.msra.mxu0 %v1741
      %2283 = vmatprep.subr.bf16.mxu0 %v1746
      %2284 = vmatpush1.bf16.msra.mxu0 %v1745
      %2285 = vmatprep.subr.bf16.mxu0 %v1750
      %2286 = vmatpush1.bf16.msra.mxu0 %v1749
      %2287 = vmatprep.subr.bf16.mxu0 %v1754
      %2288 = vmatpush1.bf16.msra.mxu0 %v1753
      %2289 = vmatprep.subr.bf16.mxu0 %v1758
      %2290 = vmatpush1.bf16.msra.mxu0 %v1757
      %2291 = vmatprep.mubr.bf16.mxu0 %v2174
      %2292 = vmatmul.mubr.bf16.gmra.mrb[0].mxu0 %v2173
      %v2293 = vpop.f32.mrb[0].mxu0
      %v2294 = vadd.f32 0.0, %v2293
      %v2295 = vpop.f32.mrb[0].mxu0
      %v2296 = vadd.f32 0.0, %v2295
      %v2297 = vpop.f32.mrb[0].mxu0
      %v2298 = vpop.f32.mrb[0].mxu0
      %2299 = vdwg.mxu0
      %2300 = vmatprep.subr.bf16.mxu0 %v1762
      %2301 = vmatpush1.bf16.msra.mxu0 %v1761
      %2302 = vmatprep.subr.bf16.mxu0 %v1766
      %2303 = vmatpush1.bf16.msra.mxu0 %v1765
      %2304 = vmatprep.subr.bf16.mxu0 %v1770
      %2305 = vmatpush1.bf16.msra.mxu0 %v1769
      %2306 = vmatprep.subr.bf16.mxu0 %v1774
      %2307 = vmatpush1.bf16.msra.mxu0 %v1773
      %2308 = vmatprep.subr.bf16.mxu0 %v1778
      %2309 = vmatpush1.bf16.msra.mxu0 %v1777
      %2310 = vmatprep.subr.bf16.mxu0 %v1782
      %2311 = vmatpush1.bf16.msra.mxu0 %v1781
      %2312 = vmatprep.subr.bf16.mxu0 %v1786
      %2313 = vmatpush1.bf16.msra.mxu0 %v1785
      %2314 = vmatprep.subr.bf16.mxu0 %v1790
      %2315 = vmatpush1.bf16.msra.mxu0 %v1789
      %2316 = vmatprep.subr.bf16.mxu0 %v1794
      %2317 = vmatpush1.bf16.msra.mxu0 %v1793
      %2318 = vmatprep.subr.bf16.mxu0 %v1798
      %2319 = vmatpush1.bf16.msra.mxu0 %v1797
      %2320 = vmatprep.subr.bf16.mxu0 %v1802
      %2321 = vmatpush1.bf16.msra.mxu0 %v1801
      %2322 = vmatprep.subr.bf16.mxu0 %v1806
      %2323 = vmatpush1.bf16.msra.mxu0 %v1805
      %2324 = vmatprep.subr.bf16.mxu0 %v1810
      %2325 = vmatpush1.bf16.msra.mxu0 %v1809
      %2326 = vmatprep.subr.bf16.mxu0 %v1814
      %2327 = vmatpush1.bf16.msra.mxu0 %v1813
      %2328 = vmatprep.subr.bf16.mxu0 %v1818
      %2329 = vmatpush1.bf16.msra.mxu0 %v1817
      %2330 = vmatprep.subr.bf16.mxu0 %v1822
      %2331 = vmatpush1.bf16.msra.mxu0 %v1821
      %2332 = vmatprep.mubr.bf16.mxu0 %v2176
      %2333 = vmatmul.mubr.bf16.gmra.mrb[0].mxu0 %v2175
      %v2334 = vpop.f32.mrb[0].mxu0
      %v2335 = vadd.f32 %v2294, %v2334
      %v2336 = vpop.f32.mrb[0].mxu0
      %v2337 = vadd.f32 %v2296, %v2336
      %v2338 = vpop.f32.mrb[0].mxu0
      %v2339 = vpop.f32.mrb[0].mxu0
      %2340 = vdwg.mxu0
      %2342 = vrot.lane.b32.xlu0 %v2253, 32
      %v2343 = vpop.permute.xlu0 %2342
      %vm2345 = vcmask 523520
      %2346 = vst.msk [vmem:[#allocation3] sm:$0xff] %vm2345, %v2343
      %2347 = vrot.lane.b32.xlu0 %v2253, 64
      %v2348 = vpop.permute.xlu0 %2347
      %vm2350 = vcmask 1048320
      %2351 = vst.msk [vmem:[#allocation3] sm:$0xff] %vm2350, %v2348
      %2352 = vrot.lane.b32.xlu0 %v2253, 96
      %v2353 = vpop.permute.xlu0 %2352
      %2355 = vst.msk [vmem:[#allocation3 + $0x8] sm:$0xff] %vm2345, %v2353
      %2356 = vst.msk [vmem:[#allocation3 + $0x8] sm:$0xff] %vm2350, %v2253
      %2358 = vrot.lane.b32.xlu0 %v2255, 32
      %v2359 = vpop.permute.xlu0 %2358
      %2361 = vst.msk [vmem:[#allocation3 + $0x10] sm:$0xff] %vm2345, %v2359
      %2362 = vrot.lane.b32.xlu0 %v2255, 64
      %v2363 = vpop.permute.xlu0 %2362
      %2365 = vst.msk [vmem:[#allocation3 + $0x10] sm:$0xff] %vm2350, %v2363
      %2366 = vrot.lane.b32.xlu0 %v2255, 96
      %v2367 = vpop.permute.xlu0 %2366
      %2369 = vst.msk [vmem:[#allocation3 + $0x18] sm:$0xff] %vm2345, %v2367
      %2370 = vst.msk [vmem:[#allocation3 + $0x18] sm:$0xff] %vm2350, %v2255
      %2372 = vrot.lane.b32.xlu0 %v2335, 32
      %v2373 = vpop.permute.xlu0 %2372
      %2375 = vst.msk [vmem:[#allocation3 + $0x20] sm:$0xff] %vm2345, %v2373
      %2376 = vrot.lane.b32.xlu0 %v2335, 64
      %v2377 = vpop.permute.xlu0 %2376
      %2379 = vst.msk [vmem:[#allocation3 + $0x20] sm:$0xff] %vm2350, %v2377
      %2380 = vrot.lane.b32.xlu0 %v2335, 96
      %v2381 = vpop.permute.xlu0 %2380
      %2383 = vst.msk [vmem:[#allocation3 + $0x28] sm:$0xff] %vm2345, %v2381
      %2384 = vst.msk [vmem:[#allocation3 + $0x28] sm:$0xff] %vm2350, %v2335
      %2386 = vrot.lane.b32.xlu0 %v2337, 32
      %v2387 = vpop.permute.xlu0 %2386
      %2389 = vst.msk [vmem:[#allocation3 + $0x30] sm:$0xff] %vm2345, %v2387
      %2390 = vrot.lane.b32.xlu0 %v2337, 64
      %v2391 = vpop.permute.xlu0 %2390
      %2393 = vst.msk [vmem:[#allocation3 + $0x30] sm:$0xff] %vm2350, %v2391
      %2394 = vrot.lane.b32.xlu0 %v2337, 96
      %v2395 = vpop.permute.xlu0 %2394
      %2397 = vst.msk [vmem:[#allocation3 + $0x38] sm:$0xff] %vm2345, %v2395
      %2398 = vst.msk [vmem:[#allocation3 + $0x38] sm:$0xff] %vm2350, %v2337
      %v2399 = vld [vmem:[#allocation3] sm:$0xff]
      %v2400 = vld [vmem:[#allocation3 + $0x8] sm:$0xff]
      %v2401 = vld [vmem:[#allocation3 + $0x10] sm:$0xff]
      %v2402 = vld [vmem:[#allocation3 + $0x18] sm:$0xff]
      %v2403 = vld [vmem:[#allocation3 + $0x20] sm:$0xff]
      %v2404 = vld [vmem:[#allocation3 + $0x28] sm:$0xff]
      %v2405 = vld [vmem:[#allocation3 + $0x30] sm:$0xff]
      %v2406 = vld [vmem:[#allocation3 + $0x38] sm:$0xff]
      %2407 = vset.pattern.permute.xlu0 3
      %2408 = vperm.xlu0 %2407, %v769
      %v2409 = vpop.permute.xlu0 %2408
      %v2411 = vadd.f32 %v2399, %v2409
      %v2412 = vadd.f32 %v2400, %v2409
      %v2413 = vadd.f32 %v2401, %v2409
      %v2414 = vadd.f32 %v2402, %v2409
      %v2415 = vadd.f32 %v2403, %v2409
      %v2416 = vadd.f32 %v2404, %v2409
      %v2417 = vadd.f32 %v2405, %v2409
      %v2418 = vadd.f32 %v2406, %v2409
      %v2419 = vld [vmem:[%s2] sm:$0xff]
      %v2420 = vld [vmem:[%s2] sm:$0x1]
      %v2421 = vadd.s32 %v771, 256
      %v2422 = vadd.s32 %v771, 384
      %v2423 = vadd.s32 %v771, 512
      %v2424 = vadd.s32 %v771, 640
      %v2425 = vadd.s32 %v771, 768
      %v2426 = vadd.s32 %v771, 896
      %vm2427 = vcmp.lt.s32.totalorder %v771, 0
      %v2428 = vsub.s32 0, %v771
      %v2429 = vsel %vm2427, %v2428, %v771
      %v2430 = vshrl.u32 %v2429, 5
      %v2431 = vand.u32 %v2429, 31
      %v2432 = vsub.s32 0, %v2431
      %v2433 = vsel %vm2427, %v2432, %v2431
      %vm2434 = vcmp.lt.s32.totalorder %v772, 0
      %v2435 = vsub.s32 0, %v772
      %v2436 = vsel %vm2434, %v2435, %v772
      %v2437 = vshrl.u32 %v2436, 5
      %v2438 = vand.u32 %v2436, 31
      %v2439 = vsub.s32 0, %v2438
      %v2440 = vsel %vm2434, %v2439, %v2438
      %vm2441 = vcmp.lt.s32.totalorder %v2421, 0
      %v2442 = vsub.s32 0, %v2421
      %v2443 = vsel %vm2441, %v2442, %v2421
      %v2444 = vshrl.u32 %v2443, 5
      %v2445 = vand.u32 %v2443, 31
      %v2446 = vsub.s32 0, %v2445
      %v2447 = vsel %vm2441, %v2446, %v2445
      %vm2448 = vcmp.lt.s32.totalorder %v2422, 0
      %v2449 = vsub.s32 0, %v2422
      %v2450 = vsel %vm2448, %v2449, %v2422
      %v2451 = vshrl.u32 %v2450, 5
      %v2452 = vand.u32 %v2450, 31
      %v2453 = vsub.s32 0, %v2452
      %v2454 = vsel %vm2448, %v2453, %v2452
      %vm2455 = vcmp.lt.s32.totalorder %v2423, 0
      %v2456 = vsub.s32 0, %v2423
      %v2457 = vsel %vm2455, %v2456, %v2423
      %v2458 = vshrl.u32 %v2457, 5
      %v2459 = vand.u32 %v2457, 31
      %v2460 = vsub.s32 0, %v2459
      %v2461 = vsel %vm2455, %v2460, %v2459
      %vm2462 = vcmp.lt.s32.totalorder %v2424, 0
      %v2463 = vsub.s32 0, %v2424
      %v2464 = vsel %vm2462, %v2463, %v2424
      %v2465 = vshrl.u32 %v2464, 5
      %v2466 = vand.u32 %v2464, 31
      %v2467 = vsub.s32 0, %v2466
      %v2468 = vsel %vm2462, %v2467, %v2466
      %vm2469 = vcmp.lt.s32.totalorder %v2425, 0
      %v2470 = vsub.s32 0, %v2425
      %v2471 = vsel %vm2469, %v2470, %v2425
      %v2472 = vshrl.u32 %v2471, 5
      %v2473 = vand.u32 %v2471, 31
      %v2474 = vsub.s32 0, %v2473
      %v2475 = vsel %vm2469, %v2474, %v2473
      %vm2476 = vcmp.lt.s32.totalorder %v2426, 0
      %v2477 = vsub.s32 0, %v2426
      %v2478 = vsel %vm2476, %v2477, %v2426
      %v2479 = vshrl.u32 %v2478, 5
      %v2480 = vand.u32 %v2478, 31
      %v2481 = vsub.s32 0, %v2480
      %v2482 = vsel %vm2476, %v2481, %v2480
      %vm2483 = vcmp.ne.s32.totalorder %v2433, 0
      %vm2484 = vcmp.ne.s32.totalorder %v2440, 0
      %vm2485 = vcmp.ne.s32.totalorder %v2447, 0
      %vm2486 = vcmp.ne.s32.totalorder %v2454, 0
      %vm2487 = vcmp.ne.s32.totalorder %v2461, 0
      %vm2488 = vcmp.ne.s32.totalorder %v2468, 0
      %vm2489 = vcmp.ne.s32.totalorder %v2475, 0
      %vm2490 = vcmp.ne.s32.totalorder %v2482, 0
      %vm2491 = vcmp.lt.s32.totalorder %v2433, 0
      %vm2492 = vcmp.lt.s32.totalorder %v2440, 0
      %vm2493 = vcmp.lt.s32.totalorder %v2447, 0
      %vm2494 = vcmp.lt.s32.totalorder %v2454, 0
      %vm2495 = vcmp.lt.s32.totalorder %v2461, 0
      %vm2496 = vcmp.lt.s32.totalorder %v2468, 0
      %vm2497 = vcmp.lt.s32.totalorder %v2475, 0
      %vm2498 = vcmp.lt.s32.totalorder %v2482, 0
      %vm2499 = vmand %vm2491, %vm2483
      %vm2500 = vmand %vm2492, %vm2484
      %vm2501 = vmand %vm2493, %vm2485
      %vm2502 = vmand %vm2494, %vm2486
      %vm2503 = vmand %vm2495, %vm2487
      %vm2504 = vmand %vm2496, %vm2488
      %vm2505 = vmand %vm2497, %vm2489
      %vm2506 = vmand %vm2498, %vm2490
      %v2507 = vadd.s32 %v2433, 32
      %v2508 = vadd.s32 %v2440, 32
      %v2509 = vadd.s32 %v2447, 32
      %v2510 = vadd.s32 %v2454, 32
      %v2511 = vadd.s32 %v2461, 32
      %v2512 = vadd.s32 %v2468, 32
      %v2513 = vadd.s32 %v2475, 32
      %v2514 = vadd.s32 %v2482, 32
      %v2515 = vsel %vm2499, %v2507, %v2433
      %v2516 = vsel %vm2500, %v2508, %v2440
      %v2517 = vsel %vm2501, %v2509, %v2447
      %v2518 = vsel %vm2502, %v2510, %v2454
      %v2519 = vsel %vm2503, %v2511, %v2461
      %v2520 = vsel %vm2504, %v2512, %v2468
      %v2521 = vsel %vm2505, %v2513, %v2475
      %v2522 = vsel %vm2506, %v2514, %v2482
      %vm2523 = vcmp.lt.s32.totalorder %v771, 32
      %vm2524 = vcmp.lt.s32.totalorder %v772, 32
      %vm2525 = vcmp.lt.s32.totalorder %v2421, 32
      %vm2526 = vcmp.lt.s32.totalorder %v2422, 32
      %vm2527 = vcmp.lt.s32.totalorder %v2423, 32
      %vm2528 = vcmp.lt.s32.totalorder %v2424, 32
      %vm2529 = vcmp.lt.s32.totalorder %v2425, 32
      %vm2530 = vcmp.lt.s32.totalorder %v2426, 32
      %vm2531 = vcmp.ge.s32.totalorder %v771, 992
      %vm2532 = vcmp.ge.s32.totalorder %v772, 992
      %vm2533 = vcmp.ge.s32.totalorder %v2421, 992
      %vm2534 = vcmp.ge.s32.totalorder %v2422, 992
      %vm2535 = vcmp.ge.s32.totalorder %v2423, 992
      %vm2536 = vcmp.ge.s32.totalorder %v2424, 992
      %vm2537 = vcmp.ge.s32.totalorder %v2425, 992
      %vm2538 = vcmp.ge.s32.totalorder %v2426, 992
      %vm2539 = vcmp.eq.s32.totalorder %v2515, 0
      %vm2540 = vcmp.eq.s32.totalorder %v2516, 0
      %vm2541 = vcmp.eq.s32.totalorder %v2517, 0
      %vm2542 = vcmp.eq.s32.totalorder %v2518, 0
      %vm2543 = vcmp.eq.s32.totalorder %v2519, 0
      %vm2544 = vcmp.eq.s32.totalorder %v2520, 0
      %vm2545 = vcmp.eq.s32.totalorder %v2521, 0
      %vm2546 = vcmp.eq.s32.totalorder %v2522, 0
      %vm2547 = vcmp.eq.s32.totalorder %v2515, 31
      %vm2548 = vcmp.eq.s32.totalorder %v2516, 31
      %vm2549 = vcmp.eq.s32.totalorder %v2517, 31
      %vm2550 = vcmp.eq.s32.totalorder %v2518, 31
      %vm2551 = vcmp.eq.s32.totalorder %v2519, 31
      %vm2552 = vcmp.eq.s32.totalorder %v2520, 31
      %vm2553 = vcmp.eq.s32.totalorder %v2521, 31
      %vm2554 = vcmp.eq.s32.totalorder %v2522, 31
      %v2555 = vld [vmem:[%s10] sm:$0xf]
      %2556 = vrot.lane.b32.xlu0 %v2411, 96
      %v2557 = vpop.permute.xlu0 %2556
      %2558 = vrot.lane.b32.xlu0 %v2412, 96
      %v2559 = vpop.permute.xlu0 %2558
      %2560 = vrot.lane.b32.xlu0 %v2413, 96
      %v2561 = vpop.permute.xlu0 %2560
      %2562 = vrot.lane.b32.xlu0 %v2414, 96
      %v2563 = vpop.permute.xlu0 %2562
      %2564 = vrot.lane.b32.xlu0 %v2415, 96
      %v2565 = vpop.permute.xlu0 %2564
      %2566 = vrot.lane.b32.xlu0 %v2416, 96
      %v2567 = vpop.permute.xlu0 %2566
      %2568 = vrot.lane.b32.xlu0 %v2417, 96
      %v2569 = vpop.permute.xlu0 %2568
      %2570 = vrot.lane.b32.xlu0 %v2418, 96
      %v2571 = vpop.permute.xlu0 %2570
      %vm2572 = vcmp.lt.s32.totalorder %v771, 96
      %v2573 = vsel %vm2572, %v2569, %v2571
      %v2574 = vsel %vm2572, %v2567, %v2569
      %v2575 = vsel %vm2572, %v2565, %v2567
      %v2576 = vsel %vm2572, %v2563, %v2565
      %v2577 = vsel %vm2572, %v2561, %v2563
      %v2578 = vsel %vm2572, %v2559, %v2561
      %v2579 = vsel %vm2572, %v2557, %v2559
      %v2580 = vsel %vm2572, %v2571, %v2557
      %2581 = vrot.lane.b32.xlu0 %v2411, 32
      %v2582 = vpop.permute.xlu0 %2581
      %2583 = vrot.lane.b32.xlu0 %v2412, 32
      %v2584 = vpop.permute.xlu0 %2583
      %2585 = vrot.lane.b32.xlu0 %v2413, 32
      %v2586 = vpop.permute.xlu0 %2585
      %2587 = vrot.lane.b32.xlu0 %v2414, 32
      %v2588 = vpop.permute.xlu0 %2587
      %2589 = vrot.lane.b32.xlu0 %v2415, 32
      %v2590 = vpop.permute.xlu0 %2589
      %2591 = vrot.lane.b32.xlu0 %v2416, 32
      %v2592 = vpop.permute.xlu0 %2591
      %2593 = vrot.lane.b32.xlu0 %v2417, 32
      %v2594 = vpop.permute.xlu0 %2593
      %2595 = vrot.lane.b32.xlu0 %v2418, 32
      %v2596 = vpop.permute.xlu0 %2595
      %v2597 = vsel %vm2523, %v2594, %v2596
      %v2598 = vsel %vm2523, %v2592, %v2594
      %v2599 = vsel %vm2523, %v2590, %v2592
      %v2600 = vsel %vm2523, %v2588, %v2590
      %v2601 = vsel %vm2523, %v2586, %v2588
      %v2602 = vsel %vm2523, %v2584, %v2586
      %v2603 = vsel %vm2523, %v2582, %v2584
      %v2604 = vsel %vm2523, %v2596, %v2582
      %v2605 = vsel %vm2523, 1, 0
      %v2606 = vsel %vm2524, 1, 0
      %v2607 = vsel %vm2525, 1, 0
      %v2608 = vsel %vm2526, 1, 0
      %v2609 = vsel %vm2527, 1, 0
      %v2610 = vsel %vm2528, 1, 0
      %v2611 = vsel %vm2529, 1, 0
      %v2612 = vsel %vm2530, 1, 0
      %vm2613 = vcmp.eq.s32.totalorder %v2605, 1
      %vm2614 = vcmp.eq.s32.totalorder %v2606, 1
      %vm2615 = vcmp.eq.s32.totalorder %v2607, 1
      %vm2616 = vcmp.eq.s32.totalorder %v2608, 1
      %vm2617 = vcmp.eq.s32.totalorder %v2609, 1
      %vm2618 = vcmp.eq.s32.totalorder %v2610, 1
      %vm2619 = vcmp.eq.s32.totalorder %v2611, 1
      %vm2620 = vcmp.eq.s32.totalorder %v2612, 1
      %v2621 = vsel %vm2613, %v2579, %v2604
      %v2622 = vsel %vm2614, %v2578, %v2603
      %v2623 = vsel %vm2615, %v2577, %v2602
      %v2624 = vsel %vm2616, %v2576, %v2601
      %v2625 = vsel %vm2617, %v2575, %v2600
      %v2626 = vsel %vm2618, %v2574, %v2599
      %v2627 = vsel %vm2619, %v2573, %v2598
      %v2628 = vsel %vm2620, %v2580, %v2597
      %v2629 = vsel %vm2531, 1, 0
      %v2630 = vsel %vm2532, 1, 0
      %v2631 = vsel %vm2533, 1, 0
      %v2632 = vsel %vm2534, 1, 0
      %v2633 = vsel %vm2535, 1, 0
      %v2634 = vsel %vm2536, 1, 0
      %v2635 = vsel %vm2537, 1, 0
      %v2636 = vsel %vm2538, 1, 0
      %vm2637 = vcmp.eq.s32.totalorder %v2629, 1
      %vm2638 = vcmp.eq.s32.totalorder %v2630, 1
      %vm2639 = vcmp.eq.s32.totalorder %v2631, 1
      %vm2640 = vcmp.eq.s32.totalorder %v2632, 1
      %vm2641 = vcmp.eq.s32.totalorder %v2633, 1
      %vm2642 = vcmp.eq.s32.totalorder %v2634, 1
      %vm2643 = vcmp.eq.s32.totalorder %v2635, 1
      %vm2644 = vcmp.eq.s32.totalorder %v2636, 1
      %v2645 = vsel %vm2637, %v2604, %v2579
      %v2646 = vsel %vm2638, %v2603, %v2578
      %v2647 = vsel %vm2639, %v2602, %v2577
      %v2648 = vsel %vm2640, %v2601, %v2576
      %v2649 = vsel %vm2641, %v2600, %v2575
      %v2650 = vsel %vm2642, %v2599, %v2574
      %v2651 = vsel %vm2643, %v2598, %v2573
      %v2652 = vsel %vm2644, %v2597, %v2580
      %2653 = vrot.lane.b32.xlu0 %v2621, 127
      %v2654 = vpop.permute.xlu0 %2653
      %2655 = vrot.lane.b32.xlu0 %v2622, 127
      %v2656 = vpop.permute.xlu0 %2655
      %2657 = vrot.lane.b32.xlu0 %v2623, 127
      %v2658 = vpop.permute.xlu0 %2657
      %2659 = vrot.lane.b32.xlu0 %v2624, 127
      %v2660 = vpop.permute.xlu0 %2659
      %2661 = vrot.lane.b32.xlu0 %v2625, 127
      %v2662 = vpop.permute.xlu0 %2661
      %2663 = vrot.lane.b32.xlu0 %v2626, 127
      %v2664 = vpop.permute.xlu0 %2663
      %2665 = vrot.lane.b32.xlu0 %v2627, 127
      %v2666 = vpop.permute.xlu0 %2665
      %2667 = vrot.lane.b32.xlu0 %v2628, 127
      %v2668 = vpop.permute.xlu0 %2667
      %v2669 = vsel %vm835, %v2666, %v2668
      %v2670 = vsel %vm835, %v2664, %v2666
      %v2671 = vsel %vm835, %v2662, %v2664
      %v2672 = vsel %vm835, %v2660, %v2662
      %v2673 = vsel %vm835, %v2658, %v2660
      %v2674 = vsel %vm835, %v2656, %v2658
      %v2675 = vsel %vm835, %v2654, %v2656
      %v2676 = vsel %vm835, %v2668, %v2654
      %2677 = vrot.lane.b32.xlu0 %v2621, 1
      %v2678 = vpop.permute.xlu0 %2677
      %2679 = vrot.lane.b32.xlu0 %v2622, 1
      %v2680 = vpop.permute.xlu0 %2679
      %2681 = vrot.lane.b32.xlu0 %v2623, 1
      %v2682 = vpop.permute.xlu0 %2681
      %2683 = vrot.lane.b32.xlu0 %v2624, 1
      %v2684 = vpop.permute.xlu0 %2683
      %2685 = vrot.lane.b32.xlu0 %v2625, 1
      %v2686 = vpop.permute.xlu0 %2685
      %2687 = vrot.lane.b32.xlu0 %v2626, 1
      %v2688 = vpop.permute.xlu0 %2687
      %2689 = vrot.lane.b32.xlu0 %v2627, 1
      %v2690 = vpop.permute.xlu0 %2689
      %2691 = vrot.lane.b32.xlu0 %v2628, 1
      %v2692 = vpop.permute.xlu0 %2691
      %v2693 = vsel %vm842, %v2690, %v2692
      %v2694 = vsel %vm842, %v2688, %v2690
      %v2695 = vsel %vm842, %v2686, %v2688
      %v2696 = vsel %vm842, %v2684, %v2686
      %v2697 = vsel %vm842, %v2682, %v2684
      %v2698 = vsel %vm842, %v2680, %v2682
      %v2699 = vsel %vm842, %v2678, %v2680
      %v2700 = vsel %vm842, %v2692, %v2678
      %v2701 = vsel %vm2539, 1, 0
      %v2702 = vsel %vm2540, 1, 0
      %v2703 = vsel %vm2541, 1, 0
      %v2704 = vsel %vm2542, 1, 0
      %v2705 = vsel %vm2543, 1, 0
      %v2706 = vsel %vm2544, 1, 0
      %v2707 = vsel %vm2545, 1, 0
      %v2708 = vsel %vm2546, 1, 0
      %vm2709 = vcmp.eq.s32.totalorder %v2701, 1
      %vm2710 = vcmp.eq.s32.totalorder %v2702, 1
      %vm2711 = vcmp.eq.s32.totalorder %v2703, 1
      %vm2712 = vcmp.eq.s32.totalorder %v2704, 1
      %vm2713 = vcmp.eq.s32.totalorder %v2705, 1
      %vm2714 = vcmp.eq.s32.totalorder %v2706, 1
      %vm2715 = vcmp.eq.s32.totalorder %v2707, 1
      %vm2716 = vcmp.eq.s32.totalorder %v2708, 1
      %v2717 = vsel %vm2709, %v2675, %v2700
      %v2718 = vsel %vm2710, %v2674, %v2699
      %v2719 = vsel %vm2711, %v2673, %v2698
      %v2720 = vsel %vm2712, %v2672, %v2697
      %v2721 = vsel %vm2713, %v2671, %v2696
      %v2722 = vsel %vm2714, %v2670, %v2695
      %v2723 = vsel %vm2715, %v2669, %v2694
      %v2724 = vsel %vm2716, %v2676, %v2693
      %v2725 = vsel %vm2547, 1, 0
      %v2726 = vsel %vm2548, 1, 0
      %v2727 = vsel %vm2549, 1, 0
      %v2728 = vsel %vm2550, 1, 0
      %v2729 = vsel %vm2551, 1, 0
      %v2730 = vsel %vm2552, 1, 0
      %v2731 = vsel %vm2553, 1, 0
      %v2732 = vsel %vm2554, 1, 0
      %vm2733 = vcmp.eq.s32.totalorder %v2725, 1
      %vm2734 = vcmp.eq.s32.totalorder %v2726, 1
      %vm2735 = vcmp.eq.s32.totalorder %v2727, 1
      %vm2736 = vcmp.eq.s32.totalorder %v2728, 1
      %vm2737 = vcmp.eq.s32.totalorder %v2729, 1
      %vm2738 = vcmp.eq.s32.totalorder %v2730, 1
      %vm2739 = vcmp.eq.s32.totalorder %v2731, 1
      %vm2740 = vcmp.eq.s32.totalorder %v2732, 1
      %v2741 = vsel %vm2733, %v2700, %v2675
      %v2742 = vsel %vm2734, %v2699, %v2674
      %v2743 = vsel %vm2735, %v2698, %v2673
      %v2744 = vsel %vm2736, %v2697, %v2672
      %v2745 = vsel %vm2737, %v2696, %v2671
      %v2746 = vsel %vm2738, %v2695, %v2670
      %v2747 = vsel %vm2739, %v2694, %v2669
      %v2748 = vsel %vm2740, %v2693, %v2676
      %2749 = vrot.lane.b32.xlu0 %v2411, 127
      %v2750 = vpop.permute.xlu0 %2749
      %2751 = vrot.lane.b32.xlu0 %v2412, 127
      %v2752 = vpop.permute.xlu0 %2751
      %2753 = vrot.lane.b32.xlu0 %v2413, 127
      %v2754 = vpop.permute.xlu0 %2753
      %2755 = vrot.lane.b32.xlu0 %v2414, 127
      %v2756 = vpop.permute.xlu0 %2755
      %2757 = vrot.lane.b32.xlu0 %v2415, 127
      %v2758 = vpop.permute.xlu0 %2757
      %2759 = vrot.lane.b32.xlu0 %v2416, 127
      %v2760 = vpop.permute.xlu0 %2759
      %2761 = vrot.lane.b32.xlu0 %v2417, 127
      %v2762 = vpop.permute.xlu0 %2761
      %2763 = vrot.lane.b32.xlu0 %v2418, 127
      %v2764 = vpop.permute.xlu0 %2763
      %v2765 = vsel %vm835, %v2762, %v2764
      %v2766 = vsel %vm835, %v2760, %v2762
      %v2767 = vsel %vm835, %v2758, %v2760
      %v2768 = vsel %vm835, %v2756, %v2758
      %v2769 = vsel %vm835, %v2754, %v2756
      %v2770 = vsel %vm835, %v2752, %v2754
      %v2771 = vsel %vm835, %v2750, %v2752
      %v2772 = vsel %vm835, %v2764, %v2750
      %2773 = vrot.lane.b32.xlu0 %v2411, 1
      %v2774 = vpop.permute.xlu0 %2773
      %2775 = vrot.lane.b32.xlu0 %v2412, 1
      %v2776 = vpop.permute.xlu0 %2775
      %2777 = vrot.lane.b32.xlu0 %v2413, 1
      %v2778 = vpop.permute.xlu0 %2777
      %2779 = vrot.lane.b32.xlu0 %v2414, 1
      %v2780 = vpop.permute.xlu0 %2779
      %2781 = vrot.lane.b32.xlu0 %v2415, 1
      %v2782 = vpop.permute.xlu0 %2781
      %2783 = vrot.lane.b32.xlu0 %v2416, 1
      %v2784 = vpop.permute.xlu0 %2783
      %2785 = vrot.lane.b32.xlu0 %v2417, 1
      %v2786 = vpop.permute.xlu0 %2785
      %2787 = vrot.lane.b32.xlu0 %v2418, 1
      %v2788 = vpop.permute.xlu0 %2787
      %v2789 = vsel %vm842, %v2786, %v2788
      %v2790 = vsel %vm842, %v2784, %v2786
      %v2791 = vsel %vm842, %v2782, %v2784
      %v2792 = vsel %vm842, %v2780, %v2782
      %v2793 = vsel %vm842, %v2778, %v2780
      %v2794 = vsel %vm842, %v2776, %v2778
      %v2795 = vsel %vm842, %v2774, %v2776
      %v2796 = vsel %vm842, %v2788, %v2774
      %v2797 = vsel %vm2709, %v2771, %v2796
      %v2798 = vsel %vm2710, %v2770, %v2795
      %v2799 = vsel %vm2711, %v2769, %v2794
      %v2800 = vsel %vm2712, %v2768, %v2793
      %v2801 = vsel %vm2713, %v2767, %v2792
      %v2802 = vsel %vm2714, %v2766, %v2791
      %v2803 = vsel %vm2715, %v2765, %v2790
      %v2804 = vsel %vm2716, %v2772, %v2789
      %v2805 = vsel %vm2733, %v2796, %v2771
      %v2806 = vsel %vm2734, %v2795, %v2770
      %v2807 = vsel %vm2735, %v2794, %v2769
      %v2808 = vsel %vm2736, %v2793, %v2768
      %v2809 = vsel %vm2737, %v2792, %v2767
      %v2810 = vsel %vm2738, %v2791, %v2766
      %v2811 = vsel %vm2739, %v2790, %v2765
      %v2812 = vsel %vm2740, %v2789, %v2772
      %2813 = vrot.lane.b32.xlu0 %v2645, 127
      %v2814 = vpop.permute.xlu0 %2813
      %2815 = vrot.lane.b32.xlu0 %v2646, 127
      %v2816 = vpop.permute.xlu0 %2815
      %2817 = vrot.lane.b32.xlu0 %v2647, 127
      %v2818 = vpop.permute.xlu0 %2817
      %2819 = vrot.lane.b32.xlu0 %v2648, 127
      %v2820 = vpop.permute.xlu0 %2819
      %2821 = vrot.lane.b32.xlu0 %v2649, 127
      %v2822 = vpop.permute.xlu0 %2821
      %2823 = vrot.lane.b32.xlu0 %v2650, 127
      %v2824 = vpop.permute.xlu0 %2823
      %2825 = vrot.lane.b32.xlu0 %v2651, 127
      %v2826 = vpop.permute.xlu0 %2825
      %2827 = vrot.lane.b32.xlu0 %v2652, 127
      %v2828 = vpop.permute.xlu0 %2827
      %v2829 = vsel %vm835, %v2826, %v2828
      %v2830 = vsel %vm835, %v2824, %v2826
      %v2831 = vsel %vm835, %v2822, %v2824
      %v2832 = vsel %vm835, %v2820, %v2822
      %v2833 = vsel %vm835, %v2818, %v2820
      %v2834 = vsel %vm835, %v2816, %v2818
      %v2835 = vsel %vm835, %v2814, %v2816
      %v2836 = vsel %vm835, %v2828, %v2814
      %2837 = vrot.lane.b32.xlu0 %v2645, 1
      %v2838 = vpop.permute.xlu0 %2837
      %2839 = vrot.lane.b32.xlu0 %v2646, 1
      %v2840 = vpop.permute.xlu0 %2839
      %2841 = vrot.lane.b32.xlu0 %v2647, 1
      %v2842 = vpop.permute.xlu0 %2841
      %2843 = vrot.lane.b32.xlu0 %v2648, 1
      %v2844 = vpop.permute.xlu0 %2843
      %2845 = vrot.lane.b32.xlu0 %v2649, 1
      %v2846 = vpop.permute.xlu0 %2845
      %2847 = vrot.lane.b32.xlu0 %v2650, 1
      %v2848 = vpop.permute.xlu0 %2847
      %2849 = vrot.lane.b32.xlu0 %v2651, 1
      %v2850 = vpop.permute.xlu0 %2849
      %2851 = vrot.lane.b32.xlu0 %v2652, 1
      %v2852 = vpop.permute.xlu0 %2851
      %v2853 = vsel %vm842, %v2850, %v2852
      %v2854 = vsel %vm842, %v2848, %v2850
      %v2855 = vsel %vm842, %v2846, %v2848
      %v2856 = vsel %vm842, %v2844, %v2846
      %v2857 = vsel %vm842, %v2842, %v2844
      %v2858 = vsel %vm842, %v2840, %v2842
      %v2859 = vsel %vm842, %v2838, %v2840
      %v2860 = vsel %vm842, %v2852, %v2838
      %v2861 = vsel %vm2709, %v2835, %v2860
      %v2862 = vsel %vm2710, %v2834, %v2859
      %v2863 = vsel %vm2711, %v2833, %v2858
      %v2864 = vsel %vm2712, %v2832, %v2857
      %v2865 = vsel %vm2713, %v2831, %v2856
      %v2866 = vsel %vm2714, %v2830, %v2855
      %v2867 = vsel %vm2715, %v2829, %v2854
      %v2868 = vsel %vm2716, %v2836, %v2853
      %v2869 = vsel %vm2733, %v2860, %v2835
      %v2870 = vsel %vm2734, %v2859, %v2834
      %v2871 = vsel %vm2735, %v2858, %v2833
      %v2872 = vsel %vm2736, %v2857, %v2832
      %v2873 = vsel %vm2737, %v2856, %v2831
      %v2874 = vsel %vm2738, %v2855, %v2830
      %v2875 = vsel %vm2739, %v2854, %v2829
      %v2876 = vsel %vm2740, %v2853, %v2836
      %v2877 = vpack.c.bf16 %v2621, %v2717
      %v2878 = vpack.c.bf16 %v2622, %v2718
      %v2879 = vpack.c.bf16 %v2623, %v2719
      %v2880 = vpack.c.bf16 %v2624, %v2720
      %v2881 = vpack.c.bf16 %v2625, %v2721
      %v2882 = vpack.c.bf16 %v2626, %v2722
      %v2883 = vpack.c.bf16 %v2627, %v2723
      %v2884 = vpack.c.bf16 %v2628, %v2724
      %v2885 = vpack.c.bf16 %v2797, %v2741
      %v2886 = vpack.c.bf16 %v2798, %v2742
      %v2887 = vpack.c.bf16 %v2799, %v2743
      %v2888 = vpack.c.bf16 %v2800, %v2744
      %v2889 = vpack.c.bf16 %v2801, %v2745
      %v2890 = vpack.c.bf16 %v2802, %v2746
      %v2891 = vpack.c.bf16 %v2803, %v2747
      %v2892 = vpack.c.bf16 %v2804, %v2748
      %v2893 = vpack.c.bf16 %v2805, %v2411
      %v2894 = vpack.c.bf16 %v2806, %v2412
      %v2895 = vpack.c.bf16 %v2807, %v2413
      %v2896 = vpack.c.bf16 %v2808, %v2414
      %v2897 = vpack.c.bf16 %v2809, %v2415
      %v2898 = vpack.c.bf16 %v2810, %v2416
      %v2899 = vpack.c.bf16 %v2811, %v2417
      %v2900 = vpack.c.bf16 %v2812, %v2418
      %v2901 = vpack.c.bf16 %v2645, %v2861
      %v2902 = vpack.c.bf16 %v2646, %v2862
      %v2903 = vpack.c.bf16 %v2647, %v2863
      %v2904 = vpack.c.bf16 %v2648, %v2864
      %v2905 = vpack.c.bf16 %v2649, %v2865
      %v2906 = vpack.c.bf16 %v2650, %v2866
      %v2907 = vpack.c.bf16 %v2651, %v2867
      %v2908 = vpack.c.bf16 %v2652, %v2868
      %v2909 = vpack.c.bf16 %v2869, %v2869
      %v2910 = vpack.c.bf16 %v2870, %v2870
      %v2911 = vpack.c.bf16 %v2871, %v2871
      %v2912 = vpack.c.bf16 %v2872, %v2872
      %v2913 = vpack.c.bf16 %v2873, %v2873
      %v2914 = vpack.c.bf16 %v2874, %v2874
      %v2915 = vpack.c.bf16 %v2875, %v2875
      %v2916 = vpack.c.bf16 %v2876, %v2876
      %2918 = vset.pattern.permute.xlu0 4
      %2919 = vperm.xlu0 %2918, %v2419
      %v2920 = vpop.permute.xlu0 %2919
      %v2923 = vsel %vm904, %v2555, 0
      %v2926 = vsel %vm908, %v2909, 0
      %v2929 = vsel %vm908, %v2910, 0
      %v2932 = vsel %vm908, %v2911, 0
      %v2935 = vsel %vm908, %v2912, 0
      %v2938 = vsel %vm908, %v2913, 0
      %v2941 = vsel %vm908, %v2914, 0
      %v2944 = vsel %vm908, %v2915, 0
      %v2947 = vsel %vm908, %v2916, 0
      %2949 = vmatprep.subr.bf16.mxu0 %v2878
      %2950 = vmatpush1.bf16.msra.mxu0 %v2877
      %2951 = vmatprep.subr.bf16.mxu0 %v2886
      %2952 = vmatpush1.bf16.msra.mxu0 %v2885
      %2953 = vmatprep.subr.bf16.mxu0 %v2894
      %2954 = vmatpush1.bf16.msra.mxu0 %v2893
      %2955 = vmatprep.subr.bf16.mxu0 %v2902
      %2956 = vmatpush1.bf16.msra.mxu0 %v2901
      %2957 = vmatprep.subr.bf16.mxu0 %v2929
      %2958 = vmatpush1.bf16.msra.mxu0 %v2926
      %2959 = vmatprep.subr.bf16.mxu0 0
      %2960 = vmatpush1.bf16.msra.mxu0 0
      %2961 = vmatprep.subr.bf16.mxu0 0
      %2962 = vmatpush1.bf16.msra.mxu0 0
      %2963 = vmatprep.subr.bf16.mxu0 0
      %2964 = vmatpush1.bf16.msra.mxu0 0
      %2965 = vmatprep.subr.bf16.mxu0 0
      %2966 = vmatpush1.bf16.msra.mxu0 0
      %2967 = vmatprep.subr.bf16.mxu0 0
      %2968 = vmatpush1.bf16.msra.mxu0 0
      %2969 = vmatprep.subr.bf16.mxu0 0
      %2970 = vmatpush1.bf16.msra.mxu0 0
      %2971 = vmatprep.subr.bf16.mxu0 0
      %2972 = vmatpush1.bf16.msra.mxu0 0
      %2973 = vmatprep.subr.bf16.mxu0 0
      %2974 = vmatpush1.bf16.msra.mxu0 0
      %2975 = vmatprep.subr.bf16.mxu0 0
      %2976 = vmatpush1.bf16.msra.mxu0 0
      %2977 = vmatprep.subr.bf16.mxu0 0
      %2978 = vmatpush1.bf16.msra.mxu0 0
      %2979 = vmatprep.subr.bf16.mxu0 0
      %2980 = vmatpush1.bf16.msra.mxu0 0
      %2981 = vmatprep.mubr.bf16.mxu0 0
      %2982 = vmatmul.mubr.bf16.gmra.mrb[0].mxu0 %v2923
      %v2983 = vpop.f32.mrb[0].mxu0
      %v2984 = vadd.f32 %v2920, %v2983
      %v2985 = vpop.f32.mrb[0].mxu0
      %v2986 = vadd.f32 %v2920, %v2985
      %v2987 = vpop.f32.mrb[0].mxu0
      %v2988 = vpop.f32.mrb[0].mxu0
      %2989 = vdwg.mxu0
      %2990 = vmatprep.subr.bf16.mxu0 %v2880
      %2991 = vmatpush1.bf16.msra.mxu0 %v2879
      %2992 = vmatprep.subr.bf16.mxu0 %v2888
      %2993 = vmatpush1.bf16.msra.mxu0 %v2887
      %2994 = vmatprep.subr.bf16.mxu0 %v2896
      %2995 = vmatpush1.bf16.msra.mxu0 %v2895
      %2996 = vmatprep.subr.bf16.mxu0 %v2904
      %2997 = vmatpush1.bf16.msra.mxu0 %v2903
      %2998 = vmatprep.subr.bf16.mxu0 %v2935
      %2999 = vmatpush1.bf16.msra.mxu0 %v2932
      %3000 = vmatprep.subr.bf16.mxu0 0
      %3001 = vmatpush1.bf16.msra.mxu0 0
      %3002 = vmatprep.subr.bf16.mxu0 0
      %3003 = vmatpush1.bf16.msra.mxu0 0
      %3004 = vmatprep.subr.bf16.mxu0 0
      %3005 = vmatpush1.bf16.msra.mxu0 0
      %3006 = vmatprep.subr.bf16.mxu0 0
      %3007 = vmatpush1.bf16.msra.mxu0 0
      %3008 = vmatprep.subr.bf16.mxu0 0
      %3009 = vmatpush1.bf16.msra.mxu0 0
      %3010 = vmatprep.subr.bf16.mxu0 0
      %3011 = vmatpush1.bf16.msra.mxu0 0
      %3012 = vmatprep.subr.bf16.mxu0 0
      %3013 = vmatpush1.bf16.msra.mxu0 0
      %3014 = vmatprep.subr.bf16.mxu0 0
      %3015 = vmatpush1.bf16.msra.mxu0 0
      %3016 = vmatprep.subr.bf16.mxu0 0
      %3017 = vmatpush1.bf16.msra.mxu0 0
      %3018 = vmatprep.subr.bf16.mxu0 0
      %3019 = vmatpush1.bf16.msra.mxu0 0
      %3020 = vmatprep.subr.bf16.mxu0 0
      %3021 = vmatpush1.bf16.msra.mxu0 0
      %3022 = vmatprep.mubr.bf16.mxu0 0
      %3023 = vmatmul.mubr.bf16.gmra.mrb[0].mxu0 %v2923
      %v3024 = vpop.f32.mrb[0].mxu0
      %v3025 = vadd.f32 %v2920, %v3024
      %v3026 = vpop.f32.mrb[0].mxu0
      %v3027 = vadd.f32 %v2920, %v3026
      %v3028 = vpop.f32.mrb[0].mxu0
      %v3029 = vpop.f32.mrb[0].mxu0
      %3030 = vdwg.mxu0
      %3031 = vmatprep.subr.bf16.mxu0 %v2882
      %3032 = vmatpush1.bf16.msra.mxu0 %v2881
      %3033 = vmatprep.subr.bf16.mxu0 %v2890
      %3034 = vmatpush1.bf16.msra.mxu0 %v2889
      %3035 = vmatprep.subr.bf16.mxu0 %v2898
      %3036 = vmatpush1.bf16.msra.mxu0 %v2897
      %3037 = vmatprep.subr.bf16.mxu0 %v2906
      %3038 = vmatpush1.bf16.msra.mxu0 %v2905
      %3039 = vmatprep.subr.bf16.mxu0 %v2941
      %3040 = vmatpush1.bf16.msra.mxu0 %v2938
      %3041 = vmatprep.subr.bf16.mxu0 0
      %3042 = vmatpush1.bf16.msra.mxu0 0
      %3043 = vmatprep.subr.bf16.mxu0 0
      %3044 = vmatpush1.bf16.msra.mxu0 0
      %3045 = vmatprep.subr.bf16.mxu0 0
      %3046 = vmatpush1.bf16.msra.mxu0 0
      %3047 = vmatprep.subr.bf16.mxu0 0
      %3048 = vmatpush1.bf16.msra.mxu0 0
      %3049 = vmatprep.subr.bf16.mxu0 0
      %3050 = vmatpush1.bf16.msra.mxu0 0
      %3051 = vmatprep.subr.bf16.mxu0 0
      %3052 = vmatpush1.bf16.msra.mxu0 0
      %3053 = vmatprep.subr.bf16.mxu0 0
      %3054 = vmatpush1.bf16.msra.mxu0 0
      %3055 = vmatprep.subr.bf16.mxu0 0
      %3056 = vmatpush1.bf16.msra.mxu0 0
      %3057 = vmatprep.subr.bf16.mxu0 0
      %3058 = vmatpush1.bf16.msra.mxu0 0
      %3059 = vmatprep.subr.bf16.mxu0 0
      %3060 = vmatpush1.bf16.msra.mxu0 0
      %3061 = vmatprep.subr.bf16.mxu0 0
      %3062 = vmatpush1.bf16.msra.mxu0 0
      %3063 = vmatprep.mubr.bf16.mxu0 0
      %3064 = vmatmul.mubr.bf16.gmra.mrb[0].mxu0 %v2923
      %v3065 = vpop.f32.mrb[0].mxu0
      %v3066 = vadd.f32 %v2920, %v3065
      %v3067 = vpop.f32.mrb[0].mxu0
      %v3068 = vadd.f32 %v2920, %v3067
      %v3069 = vpop.f32.mrb[0].mxu0
      %v3070 = vpop.f32.mrb[0].mxu0
      %3071 = vdwg.mxu0
      %3072 = vmatprep.subr.bf16.mxu0 %v2884
      %3073 = vmatpush1.bf16.msra.mxu0 %v2883
      %3074 = vmatprep.subr.bf16.mxu0 %v2892
      %3075 = vmatpush1.bf16.msra.mxu0 %v2891
      %3076 = vmatprep.subr.bf16.mxu0 %v2900
      %3077 = vmatpush1.bf16.msra.mxu0 %v2899
      %3078 = vmatprep.subr.bf16.mxu0 %v2908
      %3079 = vmatpush1.bf16.msra.mxu0 %v2907
      %3080 = vmatprep.subr.bf16.mxu0 %v2947
      %3081 = vmatpush1.bf16.msra.mxu0 %v2944
      %3082 = vmatprep.subr.bf16.mxu0 0
      %3083 = vmatpush1.bf16.msra.mxu0 0
      %3084 = vmatprep.subr.bf16.mxu0 0
      %3085 = vmatpush1.bf16.msra.mxu0 0
      %3086 = vmatprep.subr.bf16.mxu0 0
      %3087 = vmatpush1.bf16.msra.mxu0 0
      %3088 = vmatprep.subr.bf16.mxu0 0
      %3089 = vmatpush1.bf16.msra.mxu0 0
      %3090 = vmatprep.subr.bf16.mxu0 0
      %3091 = vmatpush1.bf16.msra.mxu0 0
      %3092 = vmatprep.subr.bf16.mxu0 0
      %3093 = vmatpush1.bf16.msra.mxu0 0
      %3094 = vmatprep.subr.bf16.mxu0 0
      %3095 = vmatpush1.bf16.msra.mxu0 0
      %3096 = vmatprep.subr.bf16.mxu0 0
      %3097 = vmatpush1.bf16.msra.mxu0 0
      %3098 = vmatprep.subr.bf16.mxu0 0
      %3099 = vmatpush1.bf16.msra.mxu0 0
      %3100 = vmatprep.subr.bf16.mxu0 0
      %3101 = vmatpush1.bf16.msra.mxu0 0
      %3102 = vmatprep.subr.bf16.mxu0 0
      %3103 = vmatpush1.bf16.msra.mxu0 0
      %3104 = vmatprep.mubr.bf16.mxu0 0
      %3105 = vmatmul.mubr.bf16.gmra.mrb[0].mxu0 %v2923
      %v3106 = vpop.f32.mrb[0].mxu0
      %v3107 = vadd.f32 %v2920, %v3106
      %v3108 = vpop.f32.mrb[0].mxu0
      %v3109 = vadd.f32 %v2920, %v3108
      %v3110 = vpop.f32.mrb[0].mxu0
      %v3111 = vpop.f32.mrb[0].mxu0
      %3112 = vdwg.mxu0
      %v3113 = vld [vmem:[%s11] sm:$0xf]
      %3114 = vrot.lane.b32.xlu0 %v2984, 96
      %v3115 = vpop.permute.xlu0 %3114
      %3116 = vrot.lane.b32.xlu0 %v2986, 96
      %v3117 = vpop.permute.xlu0 %3116
      %3118 = vrot.lane.b32.xlu0 %v3025, 96
      %v3119 = vpop.permute.xlu0 %3118
      %3120 = vrot.lane.b32.xlu0 %v3027, 96
      %v3121 = vpop.permute.xlu0 %3120
      %3122 = vrot.lane.b32.xlu0 %v3066, 96
      %v3123 = vpop.permute.xlu0 %3122
      %3124 = vrot.lane.b32.xlu0 %v3068, 96
      %v3125 = vpop.permute.xlu0 %3124
      %3126 = vrot.lane.b32.xlu0 %v3107, 96
      %v3127 = vpop.permute.xlu0 %3126
      %3128 = vrot.lane.b32.xlu0 %v3109, 96
      %v3129 = vpop.permute.xlu0 %3128
      %v3130 = vsel %vm2572, %v3127, %v3129
      %v3131 = vsel %vm2572, %v3125, %v3127
      %v3132 = vsel %vm2572, %v3123, %v3125
      %v3133 = vsel %vm2572, %v3121, %v3123
      %v3134 = vsel %vm2572, %v3119, %v3121
      %v3135 = vsel %vm2572, %v3117, %v3119
      %v3136 = vsel %vm2572, %v3115, %v3117
      %v3137 = vsel %vm2572, %v3129, %v3115
      %3138 = vrot.lane.b32.xlu0 %v2984, 32
      %v3139 = vpop.permute.xlu0 %3138
      %3140 = vrot.lane.b32.xlu0 %v2986, 32
      %v3141 = vpop.permute.xlu0 %3140
      %3142 = vrot.lane.b32.xlu0 %v3025, 32
      %v3143 = vpop.permute.xlu0 %3142
      %3144 = vrot.lane.b32.xlu0 %v3027, 32
      %v3145 = vpop.permute.xlu0 %3144
      %3146 = vrot.lane.b32.xlu0 %v3066, 32
      %v3147 = vpop.permute.xlu0 %3146
      %3148 = vrot.lane.b32.xlu0 %v3068, 32
      %v3149 = vpop.permute.xlu0 %3148
      %3150 = vrot.lane.b32.xlu0 %v3107, 32
      %v3151 = vpop.permute.xlu0 %3150
      %3152 = vrot.lane.b32.xlu0 %v3109, 32
      %v3153 = vpop.permute.xlu0 %3152
      %v3154 = vsel %vm2523, %v3151, %v3153
      %v3155 = vsel %vm2523, %v3149, %v3151
      %v3156 = vsel %vm2523, %v3147, %v3149
      %v3157 = vsel %vm2523, %v3145, %v3147
      %v3158 = vsel %vm2523, %v3143, %v3145
      %v3159 = vsel %vm2523, %v3141, %v3143
      %v3160 = vsel %vm2523, %v3139, %v3141
      %v3161 = vsel %vm2523, %v3153, %v3139
      %v3162 = vsel %vm2613, %v3136, %v3161
      %v3163 = vsel %vm2614, %v3135, %v3160
      %v3164 = vsel %vm2615, %v3134, %v3159
      %v3165 = vsel %vm2616, %v3133, %v3158
      %v3166 = vsel %vm2617, %v3132, %v3157
      %v3167 = vsel %vm2618, %v3131, %v3156
      %v3168 = vsel %vm2619, %v3130, %v3155
      %v3169 = vsel %vm2620, %v3137, %v3154
      %v3170 = vsel %vm2637, %v3161, %v3136
      %v3171 = vsel %vm2638, %v3160, %v3135
      %v3172 = vsel %vm2639, %v3159, %v3134
      %v3173 = vsel %vm2640, %v3158, %v3133
      %v3174 = vsel %vm2641, %v3157, %v3132
      %v3175 = vsel %vm2642, %v3156, %v3131
      %v3176 = vsel %vm2643, %v3155, %v3130
      %v3177 = vsel %vm2644, %v3154, %v3137
      %3178 = vrot.lane.b32.xlu0 %v3162, 127
      %v3179 = vpop.permute.xlu0 %3178
      %3180 = vrot.lane.b32.xlu0 %v3163, 127
      %v3181 = vpop.permute.xlu0 %3180
      %3182 = vrot.lane.b32.xlu0 %v3164, 127
      %v3183 = vpop.permute.xlu0 %3182
      %3184 = vrot.lane.b32.xlu0 %v3165, 127
      %v3185 = vpop.permute.xlu0 %3184
      %3186 = vrot.lane.b32.xlu0 %v3166, 127
      %v3187 = vpop.permute.xlu0 %3186
      %3188 = vrot.lane.b32.xlu0 %v3167, 127
      %v3189 = vpop.permute.xlu0 %3188
      %3190 = vrot.lane.b32.xlu0 %v3168, 127
      %v3191 = vpop.permute.xlu0 %3190
      %3192 = vrot.lane.b32.xlu0 %v3169, 127
      %v3193 = vpop.permute.xlu0 %3192
      %v3194 = vsel %vm835, %v3191, %v3193
      %v3195 = vsel %vm835, %v3189, %v3191
      %v3196 = vsel %vm835, %v3187, %v3189
      %v3197 = vsel %vm835, %v3185, %v3187
      %v3198 = vsel %vm835, %v3183, %v3185
      %v3199 = vsel %vm835, %v3181, %v3183
      %v3200 = vsel %vm835, %v3179, %v3181
      %v3201 = vsel %vm835, %v3193, %v3179
      %3202 = vrot.lane.b32.xlu0 %v3162, 1
      %v3203 = vpop.permute.xlu0 %3202
      %3204 = vrot.lane.b32.xlu0 %v3163, 1
      %v3205 = vpop.permute.xlu0 %3204
      %3206 = vrot.lane.b32.xlu0 %v3164, 1
      %v3207 = vpop.permute.xlu0 %3206
      %3208 = vrot.lane.b32.xlu0 %v3165, 1
      %v3209 = vpop.permute.xlu0 %3208
      %3210 = vrot.lane.b32.xlu0 %v3166, 1
      %v3211 = vpop.permute.xlu0 %3210
      %3212 = vrot.lane.b32.xlu0 %v3167, 1
      %v3213 = vpop.permute.xlu0 %3212
      %3214 = vrot.lane.b32.xlu0 %v3168, 1
      %v3215 = vpop.permute.xlu0 %3214
      %3216 = vrot.lane.b32.xlu0 %v3169, 1
      %v3217 = vpop.permute.xlu0 %3216
      %v3218 = vsel %vm842, %v3215, %v3217
      %v3219 = vsel %vm842, %v3213, %v3215
      %v3220 = vsel %vm842, %v3211, %v3213
      %v3221 = vsel %vm842, %v3209, %v3211
      %v3222 = vsel %vm842, %v3207, %v3209
      %v3223 = vsel %vm842, %v3205, %v3207
      %v3224 = vsel %vm842, %v3203, %v3205
      %v3225 = vsel %vm842, %v3217, %v3203
      %v3226 = vsel %vm2709, %v3200, %v3225
      %v3227 = vsel %vm2710, %v3199, %v3224
      %v3228 = vsel %vm2711, %v3198, %v3223
      %v3229 = vsel %vm2712, %v3197, %v3222
      %v3230 = vsel %vm2713, %v3196, %v3221
      %v3231 = vsel %vm2714, %v3195, %v3220
      %v3232 = vsel %vm2715, %v3194, %v3219
      %v3233 = vsel %vm2716, %v3201, %v3218
      %v3234 = vsel %vm2733, %v3225, %v3200
      %v3235 = vsel %vm2734, %v3224, %v3199
      %v3236 = vsel %vm2735, %v3223, %v3198
      %v3237 = vsel %vm2736, %v3222, %v3197
      %v3238 = vsel %vm2737, %v3221, %v3196
      %v3239 = vsel %vm2738, %v3220, %v3195
      %v3240 = vsel %vm2739, %v3219, %v3194
      %v3241 = vsel %vm2740, %v3218, %v3201
      %3242 = vrot.lane.b32.xlu0 %v2984, 127
      %v3243 = vpop.permute.xlu0 %3242
      %3244 = vrot.lane.b32.xlu0 %v2986, 127
      %v3245 = vpop.permute.xlu0 %3244
      %3246 = vrot.lane.b32.xlu0 %v3025, 127
      %v3247 = vpop.permute.xlu0 %3246
      %3248 = vrot.lane.b32.xlu0 %v3027, 127
      %v3249 = vpop.permute.xlu0 %3248
      %3250 = vrot.lane.b32.xlu0 %v3066, 127
      %v3251 = vpop.permute.xlu0 %3250
      %3252 = vrot.lane.b32.xlu0 %v3068, 127
      %v3253 = vpop.permute.xlu0 %3252
      %3254 = vrot.lane.b32.xlu0 %v3107, 127
      %v3255 = vpop.permute.xlu0 %3254
      %3256 = vrot.lane.b32.xlu0 %v3109, 127
      %v3257 = vpop.permute.xlu0 %3256
      %v3258 = vsel %vm835, %v3255, %v3257
      %v3259 = vsel %vm835, %v3253, %v3255
      %v3260 = vsel %vm835, %v3251, %v3253
      %v3261 = vsel %vm835, %v3249, %v3251
      %v3262 = vsel %vm835, %v3247, %v3249
      %v3263 = vsel %vm835, %v3245, %v3247
      %v3264 = vsel %vm835, %v3243, %v3245
      %v3265 = vsel %vm835, %v3257, %v3243
      %3266 = vrot.lane.b32.xlu0 %v2984, 1
      %v3267 = vpop.permute.xlu0 %3266
      %3268 = vrot.lane.b32.xlu0 %v2986, 1
      %v3269 = vpop.permute.xlu0 %3268
      %3270 = vrot.lane.b32.xlu0 %v3025, 1
      %v3271 = vpop.permute.xlu0 %3270
      %3272 = vrot.lane.b32.xlu0 %v3027, 1
      %v3273 = vpop.permute.xlu0 %3272
      %3274 = vrot.lane.b32.xlu0 %v3066, 1
      %v3275 = vpop.permute.xlu0 %3274
      %3276 = vrot.lane.b32.xlu0 %v3068, 1
      %v3277 = vpop.permute.xlu0 %3276
      %3278 = vrot.lane.b32.xlu0 %v3107, 1
      %v3279 = vpop.permute.xlu0 %3278
      %3280 = vrot.lane.b32.xlu0 %v3109, 1
      %v3281 = vpop.permute.xlu0 %3280
      %v3282 = vsel %vm842, %v3279, %v3281
      %v3283 = vsel %vm842, %v3277, %v3279
      %v3284 = vsel %vm842, %v3275, %v3277
      %v3285 = vsel %vm842, %v3273, %v3275
      %v3286 = vsel %vm842, %v3271, %v3273
      %v3287 = vsel %vm842, %v3269, %v3271
      %v3288 = vsel %vm842, %v3267, %v3269
      %v3289 = vsel %vm842, %v3281, %v3267
      %v3290 = vsel %vm2709, %v3264, %v3289
      %v3291 = vsel %vm2710, %v3263, %v3288
      %v3292 = vsel %vm2711, %v3262, %v3287
      %v3293 = vsel %vm2712, %v3261, %v3286
      %v3294 = vsel %vm2713, %v3260, %v3285
      %v3295 = vsel %vm2714, %v3259, %v3284
      %v3296 = vsel %vm2715, %v3258, %v3283
      %v3297 = vsel %vm2716, %v3265, %v3282
      %v3298 = vsel %vm2733, %v3289, %v3264
      %v3299 = vsel %vm2734, %v3288, %v3263
      %v3300 = vsel %vm2735, %v3287, %v3262
      %v3301 = vsel %vm2736, %v3286, %v3261
      %v3302 = vsel %vm2737, %v3285, %v3260
      %v3303 = vsel %vm2738, %v3284, %v3259
      %v3304 = vsel %vm2739, %v3283, %v3258
      %v3305 = vsel %vm2740, %v3282, %v3265
      %3306 = vrot.lane.b32.xlu0 %v3170, 127
      %v3307 = vpop.permute.xlu0 %3306
      %3308 = vrot.lane.b32.xlu0 %v3171, 127
      %v3309 = vpop.permute.xlu0 %3308
      %3310 = vrot.lane.b32.xlu0 %v3172, 127
      %v3311 = vpop.permute.xlu0 %3310
      %3312 = vrot.lane.b32.xlu0 %v3173, 127
      %v3313 = vpop.permute.xlu0 %3312
      %3314 = vrot.lane.b32.xlu0 %v3174, 127
      %v3315 = vpop.permute.xlu0 %3314
      %3316 = vrot.lane.b32.xlu0 %v3175, 127
      %v3317 = vpop.permute.xlu0 %3316
      %3318 = vrot.lane.b32.xlu0 %v3176, 127
      %v3319 = vpop.permute.xlu0 %3318
      %3320 = vrot.lane.b32.xlu0 %v3177, 127
      %v3321 = vpop.permute.xlu0 %3320
      %v3322 = vsel %vm835, %v3319, %v3321
      %v3323 = vsel %vm835, %v3317, %v3319
      %v3324 = vsel %vm835, %v3315, %v3317
      %v3325 = vsel %vm835, %v3313, %v3315
      %v3326 = vsel %vm835, %v3311, %v3313
      %v3327 = vsel %vm835, %v3309, %v3311
      %v3328 = vsel %vm835, %v3307, %v3309
      %v3329 = vsel %vm835, %v3321, %v3307
      %3330 = vrot.lane.b32.xlu0 %v3170, 1
      %v3331 = vpop.permute.xlu0 %3330
      %3332 = vrot.lane.b32.xlu0 %v3171, 1
      %v3333 = vpop.permute.xlu0 %3332
      %3334 = vrot.lane.b32.xlu0 %v3172, 1
      %v3335 = vpop.permute.xlu0 %3334
      %3336 = vrot.lane.b32.xlu0 %v3173, 1
      %v3337 = vpop.permute.xlu0 %3336
      %3338 = vrot.lane.b32.xlu0 %v3174, 1
      %v3339 = vpop.permute.xlu0 %3338
      %3340 = vrot.lane.b32.xlu0 %v3175, 1
      %v3341 = vpop.permute.xlu0 %3340
      %3342 = vrot.lane.b32.xlu0 %v3176, 1
      %v3343 = vpop.permute.xlu0 %3342
      %3344 = vrot.lane.b32.xlu0 %v3177, 1
      %v3345 = vpop.permute.xlu0 %3344
      %v3346 = vsel %vm842, %v3343, %v3345
      %v3347 = vsel %vm842, %v3341, %v3343
      %v3348 = vsel %vm842, %v3339, %v3341
      %v3349 = vsel %vm842, %v3337, %v3339
      %v3350 = vsel %vm842, %v3335, %v3337
      %v3351 = vsel %vm842, %v3333, %v3335
      %v3352 = vsel %vm842, %v3331, %v3333
      %v3353 = vsel %vm842, %v3345, %v3331
      %v3354 = vsel %vm2709, %v3328, %v3353
      %v3355 = vsel %vm2710, %v3327, %v3352
      %v3356 = vsel %vm2711, %v3326, %v3351
      %v3357 = vsel %vm2712, %v3325, %v3350
      %v3358 = vsel %vm2713, %v3324, %v3349
      %v3359 = vsel %vm2714, %v3323, %v3348
      %v3360 = vsel %vm2715, %v3322, %v3347
      %v3361 = vsel %vm2716, %v3329, %v3346
      %v3362 = vsel %vm2733, %v3353, %v3328
      %v3363 = vsel %vm2734, %v3352, %v3327
      %v3364 = vsel %vm2735, %v3351, %v3326
      %v3365 = vsel %vm2736, %v3350, %v3325
      %v3366 = vsel %vm2737, %v3349, %v3324
      %v3367 = vsel %vm2738, %v3348, %v3323
      %v3368 = vsel %vm2739, %v3347, %v3322
      %v3369 = vsel %vm2740, %v3346, %v3329
      %v3370 = vpack.c.bf16 %v3162, %v3226
      %v3371 = vpack.c.bf16 %v3163, %v3227
      %v3372 = vpack.c.bf16 %v3164, %v3228
      %v3373 = vpack.c.bf16 %v3165, %v3229
      %v3374 = vpack.c.bf16 %v3166, %v3230
      %v3375 = vpack.c.bf16 %v3167, %v3231
      %v3376 = vpack.c.bf16 %v3168, %v3232
      %v3377 = vpack.c.bf16 %v3169, %v3233
      %v3378 = vpack.c.bf16 %v3290, %v3234
      %v3379 = vpack.c.bf16 %v3291, %v3235
      %v3380 = vpack.c.bf16 %v3292, %v3236
      %v3381 = vpack.c.bf16 %v3293, %v3237
      %v3382 = vpack.c.bf16 %v3294, %v3238
      %v3383 = vpack.c.bf16 %v3295, %v3239
      %v3384 = vpack.c.bf16 %v3296, %v3240
      %v3385 = vpack.c.bf16 %v3297, %v3241
      %v3386 = vpack.c.bf16 %v3298, %v2984
      %v3387 = vpack.c.bf16 %v3299, %v2986
      %v3388 = vpack.c.bf16 %v3300, %v3025
      %v3389 = vpack.c.bf16 %v3301, %v3027
      %v3390 = vpack.c.bf16 %v3302, %v3066
      %v3391 = vpack.c.bf16 %v3303, %v3068
      %v3392 = vpack.c.bf16 %v3304, %v3107
      %v3393 = vpack.c.bf16 %v3305, %v3109
      %v3394 = vpack.c.bf16 %v3170, %v3354
      %v3395 = vpack.c.bf16 %v3171, %v3355
      %v3396 = vpack.c.bf16 %v3172, %v3356
      %v3397 = vpack.c.bf16 %v3173, %v3357
      %v3398 = vpack.c.bf16 %v3174, %v3358
      %v3399 = vpack.c.bf16 %v3175, %v3359
      %v3400 = vpack.c.bf16 %v3176, %v3360
      %v3401 = vpack.c.bf16 %v3177, %v3361
      %v3402 = vpack.c.bf16 %v3362, %v3362
      %v3403 = vpack.c.bf16 %v3363, %v3363
      %v3404 = vpack.c.bf16 %v3364, %v3364
      %v3405 = vpack.c.bf16 %v3365, %v3365
      %v3406 = vpack.c.bf16 %v3366, %v3366
      %v3407 = vpack.c.bf16 %v3367, %v3367
      %v3408 = vpack.c.bf16 %v3368, %v3368
      %v3409 = vpack.c.bf16 %v3369, %v3369
      %3410 = vset.pattern.permute.xlu0 5
      %3411 = vperm.xlu0 %3410, %v2419
      %v3412 = vpop.permute.xlu0 %3411
      %v3415 = vsel %vm904, %v3113, 0
      %v3418 = vsel %vm908, %v3402, 0
      %v3421 = vsel %vm908, %v3403, 0
      %v3424 = vsel %vm908, %v3404, 0
      %v3427 = vsel %vm908, %v3405, 0
      %v3430 = vsel %vm908, %v3406, 0
      %v3433 = vsel %vm908, %v3407, 0
      %v3436 = vsel %vm908, %v3408, 0
      %v3439 = vsel %vm908, %v3409, 0
      %3441 = vmatprep.subr.bf16.mxu0 %v3371
      %3442 = vmatpush1.bf16.msra.mxu0 %v3370
      %3443 = vmatprep.subr.bf16.mxu0 %v3379
      %3444 = vmatpush1.bf16.msra.mxu0 %v3378
      %3445 = vmatprep.subr.bf16.mxu0 %v3387
      %3446 = vmatpush1.bf16.msra.mxu0 %v3386
      %3447 = vmatprep.subr.bf16.mxu0 %v3395
      %3448 = vmatpush1.bf16.msra.mxu0 %v3394
      %3449 = vmatprep.subr.bf16.mxu0 %v3421
      %3450 = vmatpush1.bf16.msra.mxu0 %v3418
      %3451 = vmatprep.subr.bf16.mxu0 0
      %3452 = vmatpush1.bf16.msra.mxu0 0
      %3453 = vmatprep.subr.bf16.mxu0 0
      %3454 = vmatpush1.bf16.msra.mxu0 0
      %3455 = vmatprep.subr.bf16.mxu0 0
      %3456 = vmatpush1.bf16.msra.mxu0 0
      %3457 = vmatprep.subr.bf16.mxu0 0
      %3458 = vmatpush1.bf16.msra.mxu0 0
      %3459 = vmatprep.subr.bf16.mxu0 0
      %3460 = vmatpush1.bf16.msra.mxu0 0
      %3461 = vmatprep.subr.bf16.mxu0 0
      %3462 = vmatpush1.bf16.msra.mxu0 0
      %3463 = vmatprep.subr.bf16.mxu0 0
      %3464 = vmatpush1.bf16.msra.mxu0 0
      %3465 = vmatprep.subr.bf16.mxu0 0
      %3466 = vmatpush1.bf16.msra.mxu0 0
      %3467 = vmatprep.subr.bf16.mxu0 0
      %3468 = vmatpush1.bf16.msra.mxu0 0
      %3469 = vmatprep.subr.bf16.mxu0 0
      %3470 = vmatpush1.bf16.msra.mxu0 0
      %3471 = vmatprep.subr.bf16.mxu0 0
      %3472 = vmatpush1.bf16.msra.mxu0 0
      %3473 = vmatprep.mubr.bf16.mxu0 0
      %3474 = vmatmul.mubr.bf16.gmra.mrb[0].mxu0 %v3415
      %v3475 = vpop.f32.mrb[0].mxu0
      %v3476 = vadd.f32 %v3412, %v3475
      %v3477 = vpop.f32.mrb[0].mxu0
      %v3478 = vadd.f32 %v3412, %v3477
      %v3479 = vpop.f32.mrb[0].mxu0
      %v3480 = vpop.f32.mrb[0].mxu0
      %3481 = vdwg.mxu0
      %3482 = vmatprep.subr.bf16.mxu0 %v3373
      %3483 = vmatpush1.bf16.msra.mxu0 %v3372
      %3484 = vmatprep.subr.bf16.mxu0 %v3381
      %3485 = vmatpush1.bf16.msra.mxu0 %v3380
      %3486 = vmatprep.subr.bf16.mxu0 %v3389
      %3487 = vmatpush1.bf16.msra.mxu0 %v3388
      %3488 = vmatprep.subr.bf16.mxu0 %v3397
      %3489 = vmatpush1.bf16.msra.mxu0 %v3396
      %3490 = vmatprep.subr.bf16.mxu0 %v3427
      %3491 = vmatpush1.bf16.msra.mxu0 %v3424
      %3492 = vmatprep.subr.bf16.mxu0 0
      %3493 = vmatpush1.bf16.msra.mxu0 0
      %3494 = vmatprep.subr.bf16.mxu0 0
      %3495 = vmatpush1.bf16.msra.mxu0 0
      %3496 = vmatprep.subr.bf16.mxu0 0
      %3497 = vmatpush1.bf16.msra.mxu0 0
      %3498 = vmatprep.subr.bf16.mxu0 0
      %3499 = vmatpush1.bf16.msra.mxu0 0
      %3500 = vmatprep.subr.bf16.mxu0 0
      %3501 = vmatpush1.bf16.msra.mxu0 0
      %3502 = vmatprep.subr.bf16.mxu0 0
      %3503 = vmatpush1.bf16.msra.mxu0 0
      %3504 = vmatprep.subr.bf16.mxu0 0
      %3505 = vmatpush1.bf16.msra.mxu0 0
      %3506 = vmatprep.subr.bf16.mxu0 0
      %3507 = vmatpush1.bf16.msra.mxu0 0
      %3508 = vmatprep.subr.bf16.mxu0 0
      %3509 = vmatpush1.bf16.msra.mxu0 0
      %3510 = vmatprep.subr.bf16.mxu0 0
      %3511 = vmatpush1.bf16.msra.mxu0 0
      %3512 = vmatprep.subr.bf16.mxu0 0
      %3513 = vmatpush1.bf16.msra.mxu0 0
      %3514 = vmatprep.mubr.bf16.mxu0 0
      %3515 = vmatmul.mubr.bf16.gmra.mrb[0].mxu0 %v3415
      %v3516 = vpop.f32.mrb[0].mxu0
      %v3517 = vadd.f32 %v3412, %v3516
      %v3518 = vpop.f32.mrb[0].mxu0
      %v3519 = vadd.f32 %v3412, %v3518
      %v3520 = vpop.f32.mrb[0].mxu0
      %v3521 = vpop.f32.mrb[0].mxu0
      %3522 = vdwg.mxu0
      %3523 = vmatprep.subr.bf16.mxu0 %v3375
      %3524 = vmatpush1.bf16.msra.mxu0 %v3374
      %3525 = vmatprep.subr.bf16.mxu0 %v3383
      %3526 = vmatpush1.bf16.msra.mxu0 %v3382
      %3527 = vmatprep.subr.bf16.mxu0 %v3391
      %3528 = vmatpush1.bf16.msra.mxu0 %v3390
      %3529 = vmatprep.subr.bf16.mxu0 %v3399
      %3530 = vmatpush1.bf16.msra.mxu0 %v3398
      %3531 = vmatprep.subr.bf16.mxu0 %v3433
      %3532 = vmatpush1.bf16.msra.mxu0 %v3430
      %3533 = vmatprep.subr.bf16.mxu0 0
      %3534 = vmatpush1.bf16.msra.mxu0 0
      %3535 = vmatprep.subr.bf16.mxu0 0
      %3536 = vmatpush1.bf16.msra.mxu0 0
      %3537 = vmatprep.subr.bf16.mxu0 0
      %3538 = vmatpush1.bf16.msra.mxu0 0
      %3539 = vmatprep.subr.bf16.mxu0 0
      %3540 = vmatpush1.bf16.msra.mxu0 0
      %3541 = vmatprep.subr.bf16.mxu0 0
      %3542 = vmatpush1.bf16.msra.mxu0 0
      %3543 = vmatprep.subr.bf16.mxu0 0
      %3544 = vmatpush1.bf16.msra.mxu0 0
      %3545 = vmatprep.subr.bf16.mxu0 0
      %3546 = vmatpush1.bf16.msra.mxu0 0
      %3547 = vmatprep.subr.bf16.mxu0 0
      %3548 = vmatpush1.bf16.msra.mxu0 0
      %3549 = vmatprep.subr.bf16.mxu0 0
      %3550 = vmatpush1.bf16.msra.mxu0 0
      %3551 = vmatprep.subr.bf16.mxu0 0
      %3552 = vmatpush1.bf16.msra.mxu0 0
      %3553 = vmatprep.subr.bf16.mxu0 0
      %3554 = vmatpush1.bf16.msra.mxu0 0
      %3555 = vmatprep.mubr.bf16.mxu0 0
      %3556 = vmatmul.mubr.bf16.gmra.mrb[0].mxu0 %v3415
      %v3557 = vpop.f32.mrb[0].mxu0
      %v3558 = vadd.f32 %v3412, %v3557
      %v3559 = vpop.f32.mrb[0].mxu0
      %v3560 = vadd.f32 %v3412, %v3559
      %v3561 = vpop.f32.mrb[0].mxu0
      %v3562 = vpop.f32.mrb[0].mxu0
      %3563 = vdwg.mxu0
      %3564 = vmatprep.subr.bf16.mxu0 %v3377
      %3565 = vmatpush1.bf16.msra.mxu0 %v3376
      %3566 = vmatprep.subr.bf16.mxu0 %v3385
      %3567 = vmatpush1.bf16.msra.mxu0 %v3384
      %3568 = vmatprep.subr.bf16.mxu0 %v3393
      %3569 = vmatpush1.bf16.msra.mxu0 %v3392
      %3570 = vmatprep.subr.bf16.mxu0 %v3401
      %3571 = vmatpush1.bf16.msra.mxu0 %v3400
      %3572 = vmatprep.subr.bf16.mxu0 %v3439
      %3573 = vmatpush1.bf16.msra.mxu0 %v3436
      %3574 = vmatprep.subr.bf16.mxu0 0
      %3575 = vmatpush1.bf16.msra.mxu0 0
      %3576 = vmatprep.subr.bf16.mxu0 0
      %3577 = vmatpush1.bf16.msra.mxu0 0
      %3578 = vmatprep.subr.bf16.mxu0 0
      %3579 = vmatpush1.bf16.msra.mxu0 0
      %3580 = vmatprep.subr.bf16.mxu0 0
      %3581 = vmatpush1.bf16.msra.mxu0 0
      %3582 = vmatprep.subr.bf16.mxu0 0
      %3583 = vmatpush1.bf16.msra.mxu0 0
      %3584 = vmatprep.subr.bf16.mxu0 0
      %3585 = vmatpush1.bf16.msra.mxu0 0
      %3586 = vmatprep.subr.bf16.mxu0 0
      %3587 = vmatpush1.bf16.msra.mxu0 0
      %3588 = vmatprep.subr.bf16.mxu0 0
      %3589 = vmatpush1.bf16.msra.mxu0 0
      %3590 = vmatprep.subr.bf16.mxu0 0
      %3591 = vmatpush1.bf16.msra.mxu0 0
      %3592 = vmatprep.subr.bf16.mxu0 0
      %3593 = vmatpush1.bf16.msra.mxu0 0
      %3594 = vmatprep.subr.bf16.mxu0 0
      %3595 = vmatpush1.bf16.msra.mxu0 0
      %3596 = vmatprep.mubr.bf16.mxu0 0
      %3597 = vmatmul.mubr.bf16.gmra.mrb[0].mxu0 %v3415
      %v3598 = vpop.f32.mrb[0].mxu0
      %v3599 = vadd.f32 %v3412, %v3598
      %v3600 = vpop.f32.mrb[0].mxu0
      %v3601 = vadd.f32 %v3412, %v3600
      %v3602 = vpop.f32.mrb[0].mxu0
      %v3603 = vpop.f32.mrb[0].mxu0
      %3604 = vdwg.mxu0
      %v3605 = vadd.f32 %v3476, %v3478
      %v3606 = vadd.f32 %v3605, %v3517
      %v3607 = vadd.f32 %v3606, %v3519
      %v3608 = vadd.f32 %v3607, %v3558
      %v3609 = vadd.f32 %v3608, %v3560
      %v3610 = vadd.f32 %v3609, %v3599
      %v3611 = vadd.f32 %v3610, %v3601
      %3612 = vadd.xlane.f32.xlu0 %v3611
      %v3613 = vpop.xlane.xlu0 %3612
      %v3614 = vrcp.pop 1024.0
      %v3615 = vmul.f32 %v3613, %v3614
      %v3616 = vmul.f32 %v3615, %v2419
      %vm3617 = vcmask 56368
      %v3618 = vsel %vm3617, %v3616, 0.0
      %v3619 = vrot.slane %v3618, 4
      %v3620 = vadd.f32 %v3618, %v3619
      %v3621 = vrot.slane %v3620, 2
      %v3622 = vadd.f32 %v3620, %v3621
      %v3623 = vrot.slane %v3622, 1
      %v3624 = vadd.f32 %v3622, %v3623
      %3626 = vrot.lane.b32.xlu0 %v2420, 127
      %v3627 = vpop.permute.xlu0 %3626
      %v3629 = vadd.f32 %v3624, %v3627
      %3631 = vrot.lane.b32.xlu0 %v3629, 122
      %v3632 = vpop.permute.xlu0 %3631
      %vm3634 = vcmask 0
      %3635 = vst.msk [vmem:[%s453] sm:$0x1] %vm3634, %v3632
      %v3636 = vld [vmem:[%s450] sm:$0x1]
      %v3637 = vld [vmem:[%s3] sm:$0x1]
      %v3638 = vmul.f32 %v3636, %v3637
      %vm3639 = vcmask 253952
      %v3640 = vsel %vm3639, %v3638, 0.0
      %3641 = vadd.xlane.f32.xlu0 %v3640
      %v3642 = vpop.xlane.xlu0 %3641
      %v3643 = vadd.f32 %v3642, %v2420
      %3645 = vrot.lane.b32.xlu0 %v3643, 120
      %v3646 = vpop.permute.xlu0 %3645
      %3648 = vst.msk [vmem:[%s456] sm:$0x1] %vm3634, %v3646
      %p3649 = scmp.lt.s32.totalorder %s25, 1
      %s3650 = scalar_select %p3649, %s25, 1
      %s3651 = scalar_lea.vmem %s12, %s3650
      %p3652 = scmp.lt.s32.totalorder %s25, 1
      %s3653 = scalar_select %p3652, %s25, 1
      %s3654 = scalar_lea.vmem %s13, %s3653
      // Predicated region
      $region69: #{bn_lin_deep_cca_forward.1} parent=67 // pred_check
        %p3655 = pneg %p305
      $region70: #{bn_lin_deep_cca_forward.1} parent=67 // pred_check_branch
        %3657 = sbr.rel (%p3655) target = $region72
      $region71: #{bn_lin_deep_cca_forward.1} parent=67 // pred_region
        _
      $region72: #{bn_lin_deep_cca_forward.1} parent=67 // pred_fallthru
        _
      // Predicated region
      $region73: #{bn_lin_deep_cca_forward.1} parent=67 // pred_check
        %p3658 = pneg %p331
      $region74: #{bn_lin_deep_cca_forward.1} parent=67 // pred_check_branch
        %3660 = sbr.rel (%p3658) target = $region76
      $region75: #{bn_lin_deep_cca_forward.1} parent=67 // pred_region
        _
      $region76: #{bn_lin_deep_cca_forward.1} parent=67 // pred_fallthru
        _
    $region68: #{bn_lin_deep_cca_forward.1} parent=5 // pred_fallthru
      _
    %p3661 = scmp.le.s32.totalorder 2, %s20
    // Predicated region
    $region77: #{bn_lin_deep_cca_forward.1} parent=5 // pred_check
      %p3662 = pneg %p3661
    $region78: #{bn_lin_deep_cca_forward.1} parent=5 // pred_check_branch
      %3664 = sbr.rel (%p3662) target = $region80
    $region79: #{bn_lin_deep_cca_forward.1} parent=5 // pred_region
      %s3665 = ssub.s32 %s20, 2
      // Predicated region
      $region81: #{bn_lin_deep_cca_forward.1} parent=79 // pred_check
        %p3666 = pneg %p311
      $region82: #{bn_lin_deep_cca_forward.1} parent=79 // pred_check_branch
        %3668 = sbr.rel (%p3666) target = $region84
      $region83: #{bn_lin_deep_cca_forward.1} parent=79 // pred_region
        %p3669 = scmp.lt.s32.totalorder %s26, 1
        %s3670 = scalar_select %p3669, %s26, 1
        %s3671 = scalar_lea.vmem %s12, %s3670
      $region84: #{bn_lin_deep_cca_forward.1} parent=79 // pred_fallthru
        _
      // Predicated region
      $region85: #{bn_lin_deep_cca_forward.1} parent=79 // pred_check
        %p3672 = pneg %p337
      $region86: #{bn_lin_deep_cca_forward.1} parent=79 // pred_check_branch
        %3674 = sbr.rel (%p3672) target = $region88
      $region87: #{bn_lin_deep_cca_forward.1} parent=79 // pred_region
        %p3675 = scmp.lt.s32.totalorder %s26, 1
        %s3676 = scalar_select %p3675, %s26, 1
        %s3677 = scalar_lea.vmem %s13, %s3676
      $region88: #{bn_lin_deep_cca_forward.1} parent=79 // pred_fallthru
        _
    $region80: #{bn_lin_deep_cca_forward.1} parent=5 // pred_fallthru
      _
  $region6: #{bn_lin_deep_cca_forward.1} parent=0 // loop_footer
    %s24 = sadd.s32 1, %s20
  $region7: #{bn_lin_deep_cca_forward.1} parent=0 // loop_footer_branch
    %19 = sbr.rel target = $region3
  $region8: #{bn_lin_deep_cca_forward.1} parent=0 // loop_exit
    _

</llo_original>
